<compile_context>
chip_gen: v5e
topology: v5e:2x2
jax: 0.10.0
libtpu: 0.0.40
codegen_flags: <defaults>
</compile_context>

<pallas_src>
import functools

import jax
import jax.numpy as jnp
from jax.experimental import pallas as pl
from jax.experimental.pallas import tpu as pltpu

NP = 128  # padded node-lane group: one full vreg lane group per timestep


# ----------------------------------------------------------------------------
# Single fused Pallas kernel (whole forward pass, one batch element per program)
# ----------------------------------------------------------------------------
# Internal activation layout: 2-D slab (channels, T*NP), column index = t*NP + n,
# with the node axis zero-padded to NP=128 lanes. Every slice/concat is 128-lane aligned.

def _fused_kernel(x_ref, y_ref,
                  e1a, e2a, w11a, b11a, w12a, b12a, tha, sba, w21a, b21a, w22a, b22a,
                  e1b, e2b, w11b, b11b, w12b, b12b, thb, sbb, w21b, b21b, w22b, b22b,
                  ow_ref, ob_ref, o_ref,
                  *, KT_1, KT_2, f0_1, f0_2, T_fin):
    f32 = jnp.float32

    def temporal_glu(x, w_ref, b_ref, KT):
        # x: (Cin, Tin*NP); w_ref: (KT, 2*Cout, Cin); b_ref: (2*Cout, 1)
        Tin = x.shape[1] // NP
        Tout = Tin - KT + 1
        Cout = w_ref.shape[1] // 2
        # Accumulation of KT shifted matmuls (no im2col concat temporaries).
        acc = jnp.dot(w_ref[0], x[:, :Tout * NP], preferred_element_type=f32)
        for kt in range(1, KT):
            acc = acc + jnp.dot(w_ref[kt], x[:, kt * NP:(kt + Tout) * NP],
                                preferred_element_type=f32)
        acc = acc + b_ref[...]
        # NOTE: cheap sublane split assumes Cout is a multiple of 8 (f32 sublane).
        return acc[:Cout] * jax.nn.sigmoid(acc[Cout:])          # GLU

    def spatial(x, th_ref, sb_ref):
        # relu(Theta @ X @ Y + b + X); Y applied per 128-lane timestep group.
        z = jnp.dot(th_ref[...], x, preferred_element_type=f32)
        G = x.shape[1] // NP
        y = y_ref[...]                                          # (NP, NP), zero-padded
        zg = jnp.concatenate(
            [jnp.dot(z[:, g * NP:(g + 1) * NP], y, preferred_element_type=f32)
             for g in range(G)], axis=1)
        return jnp.maximum(zg + sb_ref[...] + x, 0.0)

    def st_block(x, e1, e2, w11, b11, w12, b12, th, sb, w21, b21, w22, b22, KT, f0):
        x0 = e1[...] * x[:, :NP]
        x1 = temporal_glu(x[:, NP:f0 * NP], w11, b11, KT)
        x2 = temporal_glu(x[:, f0 * NP:], w12, b12, KT)
        xu = spatial(jnp.concatenate([x0, x1, x2], axis=1), th, sb)
        f1 = f0 - (KT - 1)
        g0 = e2[...] * xu[:, :NP]
        g1 = temporal_glu(xu[:, NP:f1 * NP], w21, b21, KT)
        g2 = temporal_glu(xu[:, f1 * NP:], w22, b22, KT)
        return jnp.concatenate([g0, g1, g2], axis=1)

    x = x_ref[0].astype(f32)
    h1 = st_block(x, e1a, e2a, w11a, b11a, w12a, b12a, tha, sba,
                  w21a, b21a, w22a, b22a, KT_1, f0_1)
    h2 = st_block(h1, e1b, e2b, w11b, b11b, w12b, b12b, thb, sbb,
                  w21b, b21b, w22b, b22b, KT_2, f0_2)

    # Output layer: accumulate one (G_pad, C) @ (C, NP) matmul per remaining timestep.
    acc = jnp.dot(ow_ref[0], h2[:, :NP], preferred_element_type=f32)
    for t in range(1, T_fin):
        acc = acc + jnp.dot(ow_ref[t], h2[:, t * NP:(t + 1) * NP],
                            preferred_element_type=f32)
    o_ref[0] = (acc + ob_ref[...]).astype(o_ref.dtype)


# ----------------------------------------------------------------------------
# Advisory cost estimate (assumes uniform channel count, which the concat semantics imply)
# ----------------------------------------------------------------------------

def _estimate_cost(B, C, frames, frames_0, KT_1, KT_2):
    flops = 0
    trans = 0

    def block(f, f0, KT):
        nonlocal flops, trans
        for Tin in (f0 - 1, f - f0):                           # tempo_1_1 / tempo_1_2
            To = Tin - KT + 1
            flops += 2 * (2 * C) * (KT * C) * To * NP
            trans += C * To * NP
        Tsp = f - 2 * (KT - 1)
        flops += 2 * C * C * Tsp * NP + 2 * Tsp * C * NP * NP  # Theta + per-group Y
        f1 = f0 - (KT - 1)
        for Tin in (f1 - 1, Tsp - f1):                         # tempo_2_1 / tempo_2_2
            To = Tin - KT + 1
            flops += 2 * (2 * C) * (KT * C) * To * NP
            trans += C * To * NP
        return f - 4 * (KT - 1), f1

    f2, f02 = block(frames, frames_0, KT_1)
    block(f2, f02, KT_2)
    T_fin = frames - 4 * (KT_1 + KT_2 - 2)
    flops += 2 * 8 * C * T_fin * NP
    bytes_accessed = 4 * (B * C * frames * NP + B * 8 * NP + NP * NP + 8192)
    return pl.CostEstimate(flops=int(B * flops), transcendentals=int(B * trans),
                           bytes_accessed=int(bytes_accessed))


# ----------------------------------------------------------------------------
# Wrapper: only cheap zero-pads; everything else happens inside one pallas_call
# ----------------------------------------------------------------------------

def baseline_fwd(params, Y, infos, KT_1, KT_2, frames_0):
    B, Cin, frames, N = infos.shape
    assert N <= NP
    f0_2 = frames_0 - 2 * (KT_1 - 1)
    T_fin = frames - 4 * (KT_1 + KT_2 - 2)

    # dropout: eval-mode identity
    # lane-dense layout: (B, C, frames*NP); node axis zero-padded to 128 lanes.
    xpad = jnp.pad(infos, ((0, 0), (0, 0), (0, 0), (0, NP - N)))
    x3d = xpad.reshape(B, Cin, frames * NP)

    ypad = jnp.pad(Y, ((0, NP - N), (0, NP - N)))              # (NP, NP)

    def epad(e):                                               # (C, 1, N) -> (C, NP)
        C = e.shape[0]
        return jnp.pad(e.reshape(C, N), ((0, 0), (0, NP - N)))

    def prep_block(p):
        return [epad(p["embed_1"]), epad(p["embed_2"]),
                p["t11_w"], p["t11_b"], p["t12_w"], p["t12_b"],
                p["spat_theta"], p["spat_b"],
                p["t21_w"], p["t21_b"], p["t22_w"], p["t22_b"]]

    out_w = params["out_w"]                                    # (T_fin, G, C)
    G = out_w.shape[1]
    G_pad = max(8, ((G + 7) // 8) * 8)
    ow = jnp.pad(out_w, ((0, 0), (0, G_pad - G), (0, 0)))      # sublane-dense output rows
    ob = jnp.pad(params["out_b"], ((0, G_pad - G), (0, 0)))

    args = [x3d, ypad] + prep_block(params["st_1"]) + prep_block(params["st_2"]) + [ow, ob]

    vmem = pl.BlockSpec(memory_space=pltpu.MemorySpace.VMEM)   # whole-array VMEM residency
    in_specs = ([pl.BlockSpec((1, Cin, frames * NP), lambda b: (b, 0, 0))]
                + [vmem] * (len(args) - 1))

    kernel = functools.partial(_fused_kernel, KT_1=KT_1, KT_2=KT_2,
                               f0_1=frames_0, f0_2=f0_2, T_fin=T_fin)

    out = pl.pallas_call(
        kernel,
        out_shape=jax.ShapeDtypeStruct((B, G_pad, NP), infos.dtype),
        grid=(B,),                                             # batch is independent -> parallel
        in_specs=in_specs,
        out_specs=pl.BlockSpec((1, G_pad, NP), lambda b: (b, 0, 0)),
        compiler_params=pltpu.CompilerParams(dimension_semantics=("parallel",)),
        cost_estimate=_estimate_cost(B, Cin, frames, frames_0, KT_1, KT_2),
    )(*args)

    # (B, G_pad, NP) -> (B, G, 1, N): strip generator/node padding in the wrapper.
    return out[:, :G, None, :N]


# ----------------------------------------------------------------------------
# Pure-JAX reference (same inferred semantics) for correctness checking
# ----------------------------------------------------------------------------

def _ref_temporal_glu(x, w, b):
    B, Cin, T, N = x.shape
    KT, C2, _ = w.shape
    Cout = C2 // 2
    Tout = T - KT + 1
    acc = sum(jnp.einsum('oc,bctn->botn', w[kt], x[:, :, kt:kt + Tout, :]) for kt in range(KT))
    acc = acc + b.reshape(1, C2, 1, 1)
    return acc[:, :Cout] * jax.nn.sigmoid(acc[:, Cout:])


def _ref_spatial(Y, x, theta, b):
    xg = jnp.einsum('bctm,mn->bctn', x, Y)
    out = jnp.einsum('cd,bdtn->bctn', theta, xg) + b.reshape(1, -1, 1, 1) + x
    return jnp.maximum(out, 0.0)


def _ref_st_block(p, x, Y, KT, f0):
    x0 = p["embed_1"][None] * x[:, :, 0:1, :]
    x1 = _ref_temporal_glu(x[:, :, 1:f0, :], p["t11_w"], p["t11_b"])
    x2 = _ref_temporal_glu(x[:, :, f0:, :], p["t12_w"], p["t12_b"])
    xc = jnp.concatenate([x0, x1, x2], axis=2)
    xu = _ref_spatial(Y, xc, p["spat_theta"], p["spat_b"])
    g0 = p["embed_2"][None] * xu[:, :, 0:1, :]
    g1 = _ref_temporal_glu(xu[:, :, 1:f0 - (KT - 1), :], p["t21_w"], p["t21_b"])
    g2 = _ref_temporal_glu(xu[:, :, f0 - (KT - 1):, :], p["t22_w"], p["t22_b"])
    return jnp.concatenate([g0, g1, g2], axis=2)


def _ref_baseline(params, Y, infos, KT_1, KT_2, frames_0):
    h1 = _ref_st_block(params["st_1"], infos, Y, KT_1, frames_0)
    h2 = _ref_st_block(params["st_2"], h1, Y, KT_2, frames_0 - 2 * (KT_1 - 1))
    out = jnp.einsum('tgc,bctn->bgn', params["out_w"], h2) + params["out_b"].reshape(1, -1, 1)
    return out[:, :, None, :]


# ----------------------------------------------------------------------------
# Parameter init
# ----------------------------------------------------------------------------

def init_st_block(key, in_c, out_c1, out_c2, KT, num_nodes):
    ks = jax.random.split(key, 7)
    s = 0.1
    return dict(
        embed_1=jax.random.normal(ks[0], (in_c, 1, num_nodes), jnp.float32),
        embed_2=jax.random.normal(ks[1], (out_c1, 1, num_nodes), jnp.float32),
        t11_w=s * jax.random.normal(ks[2], (KT, 2 * out_c1, in_c), jnp.float32),
        t11_b=jnp.zeros((2 * out_c1, 1), jnp.float32),
        t12_w=s * jax.random.normal(ks[3], (KT, 2 * out_c1, in_c), jnp.float32),
        t12_b=jnp.zeros((2 * out_c1, 1), jnp.float32),
        spat_theta=s * jax.random.normal(ks[4], (out_c1, out_c1), jnp.float32),
        spat_b=jnp.zeros((out_c1, 1), jnp.float32),
        t21_w=s * jax.random.normal(ks[5], (KT, 2 * out_c2, out_c1), jnp.float32),
        t21_b=jnp.zeros((2 * out_c2, 1), jnp.float32),
        t22_w=s * jax.random.normal(ks[6], (KT, 2 * out_c2, out_c1), jnp.float32),
        t22_b=jnp.zeros((2 * out_c2, 1), jnp.float32),
    )


if __name__ == "__main__":
    # Small, self-consistent config (concat along frames requires in_channels == out_channels_1).
    in_channels = 8
    out_channels_1 = 8
    out_channels_2 = 8
    KT_1 = 2
    KT_2 = 2
    num_nodes = 16
    batch_size = 2
    frames = 14
    frames_0 = 7
    num_generator = 3

    key = jax.random.PRNGKey(0)
    k_inf, k_Y, k1, k2, k3 = jax.random.split(key, 5)

    infos = jax.random.normal(k_inf, (batch_size, in_channels, frames, num_nodes), jnp.float32)
    Y = 0.1 * jax.random.normal(k_Y, (num_nodes, num_nodes), jnp.float32)

    T_final = frames - 4 * (KT_1 + KT_2 - 2)
    params = dict(
        st_1=init_st_block(k1, in_channels, out_channels_1, out_channels_2, KT_1, num_nodes),
        st_2=init_st_block(k2, out_channels_2, out_channels_2, out_channels_2, KT_2, num_nodes),
        out_w=0.1 * jax.random.normal(k3, (T_final, num_generator, out_channels_2), jnp.float32),
        out_b=jnp.zeros((num_generator, 1), jnp.float32),
    )

    fwd = jax.jit(lambda p, y, x: baseline_fwd(p, y, x, KT_1, KT_2, frames_0))
    out = fwd(params, Y, infos)
    jax.block_until_ready(out)

    assert out.shape == (batch_size, num_generator, 1, num_nodes), out.shape
    assert jnp.all(jnp.isfinite(out))

    ref = _ref_baseline(params, Y, infos, KT_1, KT_2, frames_0)
    assert jnp.allclose(out, ref, atol=1e-3, rtol=1e-3), float(jnp.max(jnp.abs(out - ref)))

    print("KERNEL_OK")
</pallas_src>

<mosaic_0001>
module attributes {stable_mosaic.version = 11 : i64} {
  func.func @_fused_kernel(%arg0: i32, %arg1: memref<1x8x1792xf32, #tpu.memory_space<vmem>>, %arg2: memref<128x128xf32, #tpu.memory_space<vmem>>, %arg3: memref<8x128xf32, #tpu.memory_space<vmem>>, %arg4: memref<8x128xf32, #tpu.memory_space<vmem>>, %arg5: memref<2x16x8xf32, #tpu.memory_space<vmem>>, %arg6: memref<16x1xf32, #tpu.memory_space<vmem>>, %arg7: memref<2x16x8xf32, #tpu.memory_space<vmem>>, %arg8: memref<16x1xf32, #tpu.memory_space<vmem>>, %arg9: memref<8x8xf32, #tpu.memory_space<vmem>>, %arg10: memref<8x1xf32, #tpu.memory_space<vmem>>, %arg11: memref<2x16x8xf32, #tpu.memory_space<vmem>>, %arg12: memref<16x1xf32, #tpu.memory_space<vmem>>, %arg13: memref<2x16x8xf32, #tpu.memory_space<vmem>>, %arg14: memref<16x1xf32, #tpu.memory_space<vmem>>, %arg15: memref<8x128xf32, #tpu.memory_space<vmem>>, %arg16: memref<8x128xf32, #tpu.memory_space<vmem>>, %arg17: memref<2x16x8xf32, #tpu.memory_space<vmem>>, %arg18: memref<16x1xf32, #tpu.memory_space<vmem>>, %arg19: memref<2x16x8xf32, #tpu.memory_space<vmem>>, %arg20: memref<16x1xf32, #tpu.memory_space<vmem>>, %arg21: memref<8x8xf32, #tpu.memory_space<vmem>>, %arg22: memref<8x1xf32, #tpu.memory_space<vmem>>, %arg23: memref<2x16x8xf32, #tpu.memory_space<vmem>>, %arg24: memref<16x1xf32, #tpu.memory_space<vmem>>, %arg25: memref<2x16x8xf32, #tpu.memory_space<vmem>>, %arg26: memref<16x1xf32, #tpu.memory_space<vmem>>, %arg27: memref<6x8x8xf32, #tpu.memory_space<vmem>>, %arg28: memref<8x1xf32, #tpu.memory_space<vmem>>, %arg29: memref<1x8x128xf32, #tpu.memory_space<vmem>>) attributes {dimension_semantics = [#tpu.dimension_semantics<parallel>], iteration_bounds = array<i64: 2>, scalar_prefetch = 0 : i64, scratch_operands = 0 : i64, tpu.core_type = #tpu.core_type<tc>, window_params = [{transform_indices = @transform_0, window_bounds = array<i64: 1, 8, 1792>}, {pipeline_mode = #tpu.pipeline_mode<synchronous>, transform_indices = @transform_1, window_bounds = array<i64: 128, 128>}, {pipeline_mode = #tpu.pipeline_mode<synchronous>, transform_indices = @transform_2, window_bounds = array<i64: 8, 128>}, {pipeline_mode = #tpu.pipeline_mode<synchronous>, transform_indices = @transform_3, window_bounds = array<i64: 8, 128>}, {pipeline_mode = #tpu.pipeline_mode<synchronous>, transform_indices = @transform_4, window_bounds = array<i64: 2, 16, 8>}, {pipeline_mode = #tpu.pipeline_mode<synchronous>, transform_indices = @transform_5, window_bounds = array<i64: 16, 1>}, {pipeline_mode = #tpu.pipeline_mode<synchronous>, transform_indices = @transform_6, window_bounds = array<i64: 2, 16, 8>}, {pipeline_mode = #tpu.pipeline_mode<synchronous>, transform_indices = @transform_7, window_bounds = array<i64: 16, 1>}, {pipeline_mode = #tpu.pipeline_mode<synchronous>, transform_indices = @transform_8, window_bounds = array<i64: 8, 8>}, {pipeline_mode = #tpu.pipeline_mode<synchronous>, transform_indices = @transform_9, window_bounds = array<i64: 8, 1>}, {pipeline_mode = #tpu.pipeline_mode<synchronous>, transform_indices = @transform_10, window_bounds = array<i64: 2, 16, 8>}, {pipeline_mode = #tpu.pipeline_mode<synchronous>, transform_indices = @transform_11, window_bounds = array<i64: 16, 1>}, {pipeline_mode = #tpu.pipeline_mode<synchronous>, transform_indices = @transform_12, window_bounds = array<i64: 2, 16, 8>}, {pipeline_mode = #tpu.pipeline_mode<synchronous>, transform_indices = @transform_13, window_bounds = array<i64: 16, 1>}, {pipeline_mode = #tpu.pipeline_mode<synchronous>, transform_indices = @transform_14, window_bounds = array<i64: 8, 128>}, {pipeline_mode = #tpu.pipeline_mode<synchronous>, transform_indices = @transform_15, window_bounds = array<i64: 8, 128>}, {pipeline_mode = #tpu.pipeline_mode<synchronous>, transform_indices = @transform_16, window_bounds = array<i64: 2, 16, 8>}, {pipeline_mode = #tpu.pipeline_mode<synchronous>, transform_indices = @transform_17, window_bounds = array<i64: 16, 1>}, {pipeline_mode = #tpu.pipeline_mode<synchronous>, transform_indices = @transform_18, window_bounds = array<i64: 2, 16, 8>}, {pipeline_mode = #tpu.pipeline_mode<synchronous>, transform_indices = @transform_19, window_bounds = array<i64: 16, 1>}, {pipeline_mode = #tpu.pipeline_mode<synchronous>, transform_indices = @transform_20, window_bounds = array<i64: 8, 8>}, {pipeline_mode = #tpu.pipeline_mode<synchronous>, transform_indices = @transform_21, window_bounds = array<i64: 8, 1>}, {pipeline_mode = #tpu.pipeline_mode<synchronous>, transform_indices = @transform_22, window_bounds = array<i64: 2, 16, 8>}, {pipeline_mode = #tpu.pipeline_mode<synchronous>, transform_indices = @transform_23, window_bounds = array<i64: 16, 1>}, {pipeline_mode = #tpu.pipeline_mode<synchronous>, transform_indices = @transform_24, window_bounds = array<i64: 2, 16, 8>}, {pipeline_mode = #tpu.pipeline_mode<synchronous>, transform_indices = @transform_25, window_bounds = array<i64: 16, 1>}, {pipeline_mode = #tpu.pipeline_mode<synchronous>, transform_indices = @transform_26, window_bounds = array<i64: 6, 8, 8>}, {pipeline_mode = #tpu.pipeline_mode<synchronous>, transform_indices = @transform_27, window_bounds = array<i64: 8, 1>}, {transform_indices = @transform_28, window_bounds = array<i64: 1, 8, 128>}]} {
    %c0 = arith.constant 0 : index
    %c0_0 = arith.constant 0 : index
    %c0_1 = arith.constant 0 : index
    %0 = vector.load %arg1[%c0, %c0_0, %c0_1] : memref<1x8x1792xf32, #tpu.memory_space<vmem>>, vector<1x8x1792xf32>
    %1 = vector.shape_cast %0 : vector<1x8x1792xf32> to vector<8x1792xf32>
    %c0_2 = arith.constant 0 : index
    %c0_3 = arith.constant 0 : index
    %2 = vector.load %arg3[%c0_2, %c0_3] : memref<8x128xf32, #tpu.memory_space<vmem>>, vector<8x128xf32>
    %3 = vector.extract_strided_slice %1 {offsets = [0, 0], sizes = [8, 128], strides = [1, 1]} : vector<8x1792xf32> to vector<8x128xf32>
    %4 = arith.mulf %2, %3 : vector<8x128xf32>
    %5 = vector.extract_strided_slice %1 {offsets = [0, 128], sizes = [8, 768], strides = [1, 1]} : vector<8x1792xf32> to vector<8x768xf32>
    %c0_4 = arith.constant 0 : index
    %c0_5 = arith.constant 0 : index
    %c0_6 = arith.constant 0 : index
    %6 = vector.load %arg5[%c0_4, %c0_5, %c0_6] : memref<2x16x8xf32, #tpu.memory_space<vmem>>, vector<1x16x8xf32>
    %7 = vector.shape_cast %6 : vector<1x16x8xf32> to vector<16x8xf32>
    %8 = vector.extract_strided_slice %5 {offsets = [0, 0], sizes = [8, 640], strides = [1, 1]} : vector<8x768xf32> to vector<8x640xf32>
    %cst = arith.constant dense<0.000000e+00> : vector<16x640xf32>
    %9 = tpu.matmul %7, %8, %cst {dimension_numbers = #tpu.dot_dimension_numbers<[1], [0], [0], [1], [0, 0, 1, 1], [], []>} : vector<16x8xf32>, vector<8x640xf32>, vector<16x640xf32> -> vector<16x640xf32>
    %c1 = arith.constant 1 : index
    %c0_7 = arith.constant 0 : index
    %c0_8 = arith.constant 0 : index
    %10 = vector.load %arg5[%c1, %c0_7, %c0_8] : memref<2x16x8xf32, #tpu.memory_space<vmem>>, vector<1x16x8xf32>
    %11 = vector.shape_cast %10 : vector<1x16x8xf32> to vector<16x8xf32>
    %12 = vector.extract_strided_slice %5 {offsets = [0, 128], sizes = [8, 640], strides = [1, 1]} : vector<8x768xf32> to vector<8x640xf32>
    %cst_9 = arith.constant dense<0.000000e+00> : vector<16x640xf32>
    %13 = tpu.matmul %11, %12, %cst_9 {dimension_numbers = #tpu.dot_dimension_numbers<[1], [0], [0], [1], [0, 0, 1, 1], [], []>} : vector<16x8xf32>, vector<8x640xf32>, vector<16x640xf32> -> vector<16x640xf32>
    %14 = arith.addf %9, %13 : vector<16x640xf32>
    %c0_10 = arith.constant 0 : index
    %c0_11 = arith.constant 0 : index
    %15 = vector.load %arg6[%c0_10, %c0_11] : memref<16x1xf32, #tpu.memory_space<vmem>>, vector<16x1xf32>
    %16 = vector.broadcast %15 : vector<16x1xf32> to vector<16x640xf32>
    %17 = arith.addf %14, %16 : vector<16x640xf32>
    %18 = vector.extract_strided_slice %17 {offsets = [0, 0], sizes = [8, 640], strides = [1, 1]} : vector<16x640xf32> to vector<8x640xf32>
    %19 = vector.extract_strided_slice %17 {offsets = [8, 0], sizes = [8, 640], strides = [1, 1]} : vector<16x640xf32> to vector<8x640xf32>
    %20 = arith.negf %19 : vector<8x640xf32>
    %21 = math.exp %20 : vector<8x640xf32>
    %cst_12 = arith.constant 1.000000e+00 : f32
    %22 = vector.broadcast %cst_12 : f32 to vector<8x640xf32>
    %23 = arith.addf %22, %21 : vector<8x640xf32>
    %24 = arith.divf %22, %23 : vector<8x640xf32>
    %25 = arith.mulf %18, %24 : vector<8x640xf32>
    %26 = vector.extract_strided_slice %1 {offsets = [0, 896], sizes = [8, 896], strides = [1, 1]} : vector<8x1792xf32> to vector<8x896xf32>
    %c0_13 = arith.constant 0 : index
    %c0_14 = arith.constant 0 : index
    %c0_15 = arith.constant 0 : index
    %27 = vector.load %arg7[%c0_13, %c0_14, %c0_15] : memref<2x16x8xf32, #tpu.memory_space<vmem>>, vector<1x16x8xf32>
    %28 = vector.shape_cast %27 : vector<1x16x8xf32> to vector<16x8xf32>
    %29 = vector.extract_strided_slice %26 {offsets = [0, 0], sizes = [8, 768], strides = [1, 1]} : vector<8x896xf32> to vector<8x768xf32>
    %cst_16 = arith.constant dense<0.000000e+00> : vector<16x768xf32>
    %30 = tpu.matmul %28, %29, %cst_16 {dimension_numbers = #tpu.dot_dimension_numbers<[1], [0], [0], [1], [0, 0, 1, 1], [], []>} : vector<16x8xf32>, vector<8x768xf32>, vector<16x768xf32> -> vector<16x768xf32>
    %c1_17 = arith.constant 1 : index
    %c0_18 = arith.constant 0 : index
    %c0_19 = arith.constant 0 : index
    %31 = vector.load %arg7[%c1_17, %c0_18, %c0_19] : memref<2x16x8xf32, #tpu.memory_space<vmem>>, vector<1x16x8xf32>
    %32 = vector.shape_cast %31 : vector<1x16x8xf32> to vector<16x8xf32>
    %33 = vector.extract_strided_slice %26 {offsets = [0, 128], sizes = [8, 768], strides = [1, 1]} : vector<8x896xf32> to vector<8x768xf32>
    %cst_20 = arith.constant dense<0.000000e+00> : vector<16x768xf32>
    %34 = tpu.matmul %32, %33, %cst_20 {dimension_numbers = #tpu.dot_dimension_numbers<[1], [0], [0], [1], [0, 0, 1, 1], [], []>} : vector<16x8xf32>, vector<8x768xf32>, vector<16x768xf32> -> vector<16x768xf32>
    %35 = arith.addf %30, %34 : vector<16x768xf32>
    %c0_21 = arith.constant 0 : index
    %c0_22 = arith.constant 0 : index
    %36 = vector.load %arg8[%c0_21, %c0_22] : memref<16x1xf32, #tpu.memory_space<vmem>>, vector<16x1xf32>
    %37 = vector.broadcast %36 : vector<16x1xf32> to vector<16x768xf32>
    %38 = arith.addf %35, %37 : vector<16x768xf32>
    %39 = vector.extract_strided_slice %38 {offsets = [0, 0], sizes = [8, 768], strides = [1, 1]} : vector<16x768xf32> to vector<8x768xf32>
    %40 = vector.extract_strided_slice %38 {offsets = [8, 0], sizes = [8, 768], strides = [1, 1]} : vector<16x768xf32> to vector<8x768xf32>
    %41 = arith.negf %40 : vector<8x768xf32>
    %42 = math.exp %41 : vector<8x768xf32>
    %cst_23 = arith.constant 1.000000e+00 : f32
    %43 = vector.broadcast %cst_23 : f32 to vector<8x768xf32>
    %44 = arith.addf %43, %42 : vector<8x768xf32>
    %45 = arith.divf %43, %44 : vector<8x768xf32>
    %46 = arith.mulf %39, %45 : vector<8x768xf32>
    %47 = tpu.concatenate %4, %25, %46 in 1 : vector<8x128xf32>, vector<8x640xf32>, vector<8x768xf32> -> vector<8x1536xf32>
    %c0_24 = arith.constant 0 : index
    %c0_25 = arith.constant 0 : index
    %48 = vector.load %arg9[%c0_24, %c0_25] : memref<8x8xf32, #tpu.memory_space<vmem>>, vector<8x8xf32>
    %cst_26 = arith.constant dense<0.000000e+00> : vector<8x1536xf32>
    %49 = tpu.matmul %48, %47, %cst_26 {dimension_numbers = #tpu.dot_dimension_numbers<[1], [0], [0], [1], [0, 0, 1, 1], [], []>} : vector<8x8xf32>, vector<8x1536xf32>, vector<8x1536xf32> -> vector<8x1536xf32>
    %c0_27 = arith.constant 0 : index
    %c0_28 = arith.constant 0 : index
    %50 = vector.load %arg2[%c0_27, %c0_28] : memref<128x128xf32, #tpu.memory_space<vmem>>, vector<128x128xf32>
    %51 = vector.extract_strided_slice %49 {offsets = [0, 0], sizes = [8, 128], strides = [1, 1]} : vector<8x1536xf32> to vector<8x128xf32>
    %cst_29 = arith.constant dense<0.000000e+00> : vector<8x128xf32>
    %52 = tpu.matmul %51, %50, %cst_29 {dimension_numbers = #tpu.dot_dimension_numbers<[1], [0], [0], [1], [0, 0, 1, 1], [], []>} : vector<8x128xf32>, vector<128x128xf32>, vector<8x128xf32> -> vector<8x128xf32>
    %53 = vector.extract_strided_slice %49 {offsets = [0, 128], sizes = [8, 128], strides = [1, 1]} : vector<8x1536xf32> to vector<8x128xf32>
    %cst_30 = arith.constant dense<0.000000e+00> : vector<8x128xf32>
    %54 = tpu.matmul %53, %50, %cst_30 {dimension_numbers = #tpu.dot_dimension_numbers<[1], [0], [0], [1], [0, 0, 1, 1], [], []>} : vector<8x128xf32>, vector<128x128xf32>, vector<8x128xf32> -> vector<8x128xf32>
    %55 = vector.extract_strided_slice %49 {offsets = [0, 256], sizes = [8, 128], strides = [1, 1]} : vector<8x1536xf32> to vector<8x128xf32>
    %cst_31 = arith.constant dense<0.000000e+00> : vector<8x128xf32>
    %56 = tpu.matmul %55, %50, %cst_31 {dimension_numbers = #tpu.dot_dimension_numbers<[1], [0], [0], [1], [0, 0, 1, 1], [], []>} : vector<8x128xf32>, vector<128x128xf32>, vector<8x128xf32> -> vector<8x128xf32>
    %57 = vector.extract_strided_slice %49 {offsets = [0, 384], sizes = [8, 128], strides = [1, 1]} : vector<8x1536xf32> to vector<8x128xf32>
    %cst_32 = arith.constant dense<0.000000e+00> : vector<8x128xf32>
    %58 = tpu.matmul %57, %50, %cst_32 {dimension_numbers = #tpu.dot_dimension_numbers<[1], [0], [0], [1], [0, 0, 1, 1], [], []>} : vector<8x128xf32>, vector<128x128xf32>, vector<8x128xf32> -> vector<8x128xf32>
    %59 = vector.extract_strided_slice %49 {offsets = [0, 512], sizes = [8, 128], strides = [1, 1]} : vector<8x1536xf32> to vector<8x128xf32>
    %cst_33 = arith.constant dense<0.000000e+00> : vector<8x128xf32>
    %60 = tpu.matmul %59, %50, %cst_33 {dimension_numbers = #tpu.dot_dimension_numbers<[1], [0], [0], [1], [0, 0, 1, 1], [], []>} : vector<8x128xf32>, vector<128x128xf32>, vector<8x128xf32> -> vector<8x128xf32>
    %61 = vector.extract_strided_slice %49 {offsets = [0, 640], sizes = [8, 128], strides = [1, 1]} : vector<8x1536xf32> to vector<8x128xf32>
    %cst_34 = arith.constant dense<0.000000e+00> : vector<8x128xf32>
    %62 = tpu.matmul %61, %50, %cst_34 {dimension_numbers = #tpu.dot_dimension_numbers<[1], [0], [0], [1], [0, 0, 1, 1], [], []>} : vector<8x128xf32>, vector<128x128xf32>, vector<8x128xf32> -> vector<8x128xf32>
    %63 = vector.extract_strided_slice %49 {offsets = [0, 768], sizes = [8, 128], strides = [1, 1]} : vector<8x1536xf32> to vector<8x128xf32>
    %cst_35 = arith.constant dense<0.000000e+00> : vector<8x128xf32>
    %64 = tpu.matmul %63, %50, %cst_35 {dimension_numbers = #tpu.dot_dimension_numbers<[1], [0], [0], [1], [0, 0, 1, 1], [], []>} : vector<8x128xf32>, vector<128x128xf32>, vector<8x128xf32> -> vector<8x128xf32>
    %65 = vector.extract_strided_slice %49 {offsets = [0, 896], sizes = [8, 128], strides = [1, 1]} : vector<8x1536xf32> to vector<8x128xf32>
    %cst_36 = arith.constant dense<0.000000e+00> : vector<8x128xf32>
    %66 = tpu.matmul %65, %50, %cst_36 {dimension_numbers = #tpu.dot_dimension_numbers<[1], [0], [0], [1], [0, 0, 1, 1], [], []>} : vector<8x128xf32>, vector<128x128xf32>, vector<8x128xf32> -> vector<8x128xf32>
    %67 = vector.extract_strided_slice %49 {offsets = [0, 1024], sizes = [8, 128], strides = [1, 1]} : vector<8x1536xf32> to vector<8x128xf32>
    %cst_37 = arith.constant dense<0.000000e+00> : vector<8x128xf32>
    %68 = tpu.matmul %67, %50, %cst_37 {dimension_numbers = #tpu.dot_dimension_numbers<[1], [0], [0], [1], [0, 0, 1, 1], [], []>} : vector<8x128xf32>, vector<128x128xf32>, vector<8x128xf32> -> vector<8x128xf32>
    %69 = vector.extract_strided_slice %49 {offsets = [0, 1152], sizes = [8, 128], strides = [1, 1]} : vector<8x1536xf32> to vector<8x128xf32>
    %cst_38 = arith.constant dense<0.000000e+00> : vector<8x128xf32>
    %70 = tpu.matmul %69, %50, %cst_38 {dimension_numbers = #tpu.dot_dimension_numbers<[1], [0], [0], [1], [0, 0, 1, 1], [], []>} : vector<8x128xf32>, vector<128x128xf32>, vector<8x128xf32> -> vector<8x128xf32>
    %71 = vector.extract_strided_slice %49 {offsets = [0, 1280], sizes = [8, 128], strides = [1, 1]} : vector<8x1536xf32> to vector<8x128xf32>
    %cst_39 = arith.constant dense<0.000000e+00> : vector<8x128xf32>
    %72 = tpu.matmul %71, %50, %cst_39 {dimension_numbers = #tpu.dot_dimension_numbers<[1], [0], [0], [1], [0, 0, 1, 1], [], []>} : vector<8x128xf32>, vector<128x128xf32>, vector<8x128xf32> -> vector<8x128xf32>
    %73 = vector.extract_strided_slice %49 {offsets = [0, 1408], sizes = [8, 128], strides = [1, 1]} : vector<8x1536xf32> to vector<8x128xf32>
    %cst_40 = arith.constant dense<0.000000e+00> : vector<8x128xf32>
    %74 = tpu.matmul %73, %50, %cst_40 {dimension_numbers = #tpu.dot_dimension_numbers<[1], [0], [0], [1], [0, 0, 1, 1], [], []>} : vector<8x128xf32>, vector<128x128xf32>, vector<8x128xf32> -> vector<8x128xf32>
    %75 = tpu.concatenate %52, %54, %56, %58, %60, %62, %64, %66, %68, %70, %72, %74 in 1 : vector<8x128xf32>, vector<8x128xf32>, vector<8x128xf32>, vector<8x128xf32>, vector<8x128xf32>, vector<8x128xf32>, vector<8x128xf32>, vector<8x128xf32>, vector<8x128xf32>, vector<8x128xf32>, vector<8x128xf32>, vector<8x128xf32> -> vector<8x1536xf32>
    %c0_41 = arith.constant 0 : index
    %c0_42 = arith.constant 0 : index
    %76 = vector.load %arg10[%c0_41, %c0_42] : memref<8x1xf32, #tpu.memory_space<vmem>>, vector<8x1xf32>
    %77 = vector.broadcast %76 : vector<8x1xf32> to vector<8x1536xf32>
    %78 = arith.addf %75, %77 : vector<8x1536xf32>
    %79 = arith.addf %78, %47 : vector<8x1536xf32>
    %cst_43 = arith.constant 0.000000e+00 : f32
    %80 = vector.broadcast %cst_43 : f32 to vector<8x1536xf32>
    %81 = arith.maximumf %79, %80 : vector<8x1536xf32>
    %c0_44 = arith.constant 0 : index
    %c0_45 = arith.constant 0 : index
    %82 = vector.load %arg4[%c0_44, %c0_45] : memref<8x128xf32, #tpu.memory_space<vmem>>, vector<8x128xf32>
    %83 = vector.extract_strided_slice %81 {offsets = [0, 0], sizes = [8, 128], strides = [1, 1]} : vector<8x1536xf32> to vector<8x128xf32>
    %84 = arith.mulf %82, %83 : vector<8x128xf32>
    %85 = vector.extract_strided_slice %81 {offsets = [0, 128], sizes = [8, 640], strides = [1, 1]} : vector<8x1536xf32> to vector<8x640xf32>
    %c0_46 = arith.constant 0 : index
    %c0_47 = arith.constant 0 : index
    %c0_48 = arith.constant 0 : index
    %86 = vector.load %arg11[%c0_46, %c0_47, %c0_48] : memref<2x16x8xf32, #tpu.memory_space<vmem>>, vector<1x16x8xf32>
    %87 = vector.shape_cast %86 : vector<1x16x8xf32> to vector<16x8xf32>
    %88 = vector.extract_strided_slice %85 {offsets = [0, 0], sizes = [8, 512], strides = [1, 1]} : vector<8x640xf32> to vector<8x512xf32>
    %cst_49 = arith.constant dense<0.000000e+00> : vector<16x512xf32>
    %89 = tpu.matmul %87, %88, %cst_49 {dimension_numbers = #tpu.dot_dimension_numbers<[1], [0], [0], [1], [0, 0, 1, 1], [], []>} : vector<16x8xf32>, vector<8x512xf32>, vector<16x512xf32> -> vector<16x512xf32>
    %c1_50 = arith.constant 1 : index
    %c0_51 = arith.constant 0 : index
    %c0_52 = arith.constant 0 : index
    %90 = vector.load %arg11[%c1_50, %c0_51, %c0_52] : memref<2x16x8xf32, #tpu.memory_space<vmem>>, vector<1x16x8xf32>
    %91 = vector.shape_cast %90 : vector<1x16x8xf32> to vector<16x8xf32>
    %92 = vector.extract_strided_slice %85 {offsets = [0, 128], sizes = [8, 512], strides = [1, 1]} : vector<8x640xf32> to vector<8x512xf32>
    %cst_53 = arith.constant dense<0.000000e+00> : vector<16x512xf32>
    %93 = tpu.matmul %91, %92, %cst_53 {dimension_numbers = #tpu.dot_dimension_numbers<[1], [0], [0], [1], [0, 0, 1, 1], [], []>} : vector<16x8xf32>, vector<8x512xf32>, vector<16x512xf32> -> vector<16x512xf32>
    %94 = arith.addf %89, %93 : vector<16x512xf32>
    %c0_54 = arith.constant 0 : index
    %c0_55 = arith.constant 0 : index
    %95 = vector.load %arg12[%c0_54, %c0_55] : memref<16x1xf32, #tpu.memory_space<vmem>>, vector<16x1xf32>
    %96 = vector.broadcast %95 : vector<16x1xf32> to vector<16x512xf32>
    %97 = arith.addf %94, %96 : vector<16x512xf32>
    %98 = vector.extract_strided_slice %97 {offsets = [0, 0], sizes = [8, 512], strides = [1, 1]} : vector<16x512xf32> to vector<8x512xf32>
    %99 = vector.extract_strided_slice %97 {offsets = [8, 0], sizes = [8, 512], strides = [1, 1]} : vector<16x512xf32> to vector<8x512xf32>
    %100 = arith.negf %99 : vector<8x512xf32>
    %101 = math.exp %100 : vector<8x512xf32>
    %cst_56 = arith.constant 1.000000e+00 : f32
    %102 = vector.broadcast %cst_56 : f32 to vector<8x512xf32>
    %103 = arith.addf %102, %101 : vector<8x512xf32>
    %104 = arith.divf %102, %103 : vector<8x512xf32>
    %105 = arith.mulf %98, %104 : vector<8x512xf32>
    %106 = vector.extract_strided_slice %81 {offsets = [0, 768], sizes = [8, 768], strides = [1, 1]} : vector<8x1536xf32> to vector<8x768xf32>
    %c0_57 = arith.constant 0 : index
    %c0_58 = arith.constant 0 : index
    %c0_59 = arith.constant 0 : index
    %107 = vector.load %arg13[%c0_57, %c0_58, %c0_59] : memref<2x16x8xf32, #tpu.memory_space<vmem>>, vector<1x16x8xf32>
    %108 = vector.shape_cast %107 : vector<1x16x8xf32> to vector<16x8xf32>
    %109 = vector.extract_strided_slice %106 {offsets = [0, 0], sizes = [8, 640], strides = [1, 1]} : vector<8x768xf32> to vector<8x640xf32>
    %cst_60 = arith.constant dense<0.000000e+00> : vector<16x640xf32>
    %110 = tpu.matmul %108, %109, %cst_60 {dimension_numbers = #tpu.dot_dimension_numbers<[1], [0], [0], [1], [0, 0, 1, 1], [], []>} : vector<16x8xf32>, vector<8x640xf32>, vector<16x640xf32> -> vector<16x640xf32>
    %c1_61 = arith.constant 1 : index
    %c0_62 = arith.constant 0 : index
    %c0_63 = arith.constant 0 : index
    %111 = vector.load %arg13[%c1_61, %c0_62, %c0_63] : memref<2x16x8xf32, #tpu.memory_space<vmem>>, vector<1x16x8xf32>
    %112 = vector.shape_cast %111 : vector<1x16x8xf32> to vector<16x8xf32>
    %113 = vector.extract_strided_slice %106 {offsets = [0, 128], sizes = [8, 640], strides = [1, 1]} : vector<8x768xf32> to vector<8x640xf32>
    %cst_64 = arith.constant dense<0.000000e+00> : vector<16x640xf32>
    %114 = tpu.matmul %112, %113, %cst_64 {dimension_numbers = #tpu.dot_dimension_numbers<[1], [0], [0], [1], [0, 0, 1, 1], [], []>} : vector<16x8xf32>, vector<8x640xf32>, vector<16x640xf32> -> vector<16x640xf32>
    %115 = arith.addf %110, %114 : vector<16x640xf32>
    %c0_65 = arith.constant 0 : index
    %c0_66 = arith.constant 0 : index
    %116 = vector.load %arg14[%c0_65, %c0_66] : memref<16x1xf32, #tpu.memory_space<vmem>>, vector<16x1xf32>
    %117 = vector.broadcast %116 : vector<16x1xf32> to vector<16x640xf32>
    %118 = arith.addf %115, %117 : vector<16x640xf32>
    %119 = vector.extract_strided_slice %118 {offsets = [0, 0], sizes = [8, 640], strides = [1, 1]} : vector<16x640xf32> to vector<8x640xf32>
    %120 = vector.extract_strided_slice %118 {offsets = [8, 0], sizes = [8, 640], strides = [1, 1]} : vector<16x640xf32> to vector<8x640xf32>
    %121 = arith.negf %120 : vector<8x640xf32>
    %122 = math.exp %121 : vector<8x640xf32>
    %cst_67 = arith.constant 1.000000e+00 : f32
    %123 = vector.broadcast %cst_67 : f32 to vector<8x640xf32>
    %124 = arith.addf %123, %122 : vector<8x640xf32>
    %125 = arith.divf %123, %124 : vector<8x640xf32>
    %126 = arith.mulf %119, %125 : vector<8x640xf32>
    %127 = tpu.concatenate %84, %105, %126 in 1 : vector<8x128xf32>, vector<8x512xf32>, vector<8x640xf32> -> vector<8x1280xf32>
    %c0_68 = arith.constant 0 : index
    %c0_69 = arith.constant 0 : index
    %128 = vector.load %arg15[%c0_68, %c0_69] : memref<8x128xf32, #tpu.memory_space<vmem>>, vector<8x128xf32>
    %129 = vector.extract_strided_slice %127 {offsets = [0, 0], sizes = [8, 128], strides = [1, 1]} : vector<8x1280xf32> to vector<8x128xf32>
    %130 = arith.mulf %128, %129 : vector<8x128xf32>
    %131 = vector.extract_strided_slice %127 {offsets = [0, 128], sizes = [8, 512], strides = [1, 1]} : vector<8x1280xf32> to vector<8x512xf32>
    %c0_70 = arith.constant 0 : index
    %c0_71 = arith.constant 0 : index
    %c0_72 = arith.constant 0 : index
    %132 = vector.load %arg17[%c0_70, %c0_71, %c0_72] : memref<2x16x8xf32, #tpu.memory_space<vmem>>, vector<1x16x8xf32>
    %133 = vector.shape_cast %132 : vector<1x16x8xf32> to vector<16x8xf32>
    %134 = vector.extract_strided_slice %131 {offsets = [0, 0], sizes = [8, 384], strides = [1, 1]} : vector<8x512xf32> to vector<8x384xf32>
    %cst_73 = arith.constant dense<0.000000e+00> : vector<16x384xf32>
    %135 = tpu.matmul %133, %134, %cst_73 {dimension_numbers = #tpu.dot_dimension_numbers<[1], [0], [0], [1], [0, 0, 1, 1], [], []>} : vector<16x8xf32>, vector<8x384xf32>, vector<16x384xf32> -> vector<16x384xf32>
    %c1_74 = arith.constant 1 : index
    %c0_75 = arith.constant 0 : index
    %c0_76 = arith.constant 0 : index
    %136 = vector.load %arg17[%c1_74, %c0_75, %c0_76] : memref<2x16x8xf32, #tpu.memory_space<vmem>>, vector<1x16x8xf32>
    %137 = vector.shape_cast %136 : vector<1x16x8xf32> to vector<16x8xf32>
    %138 = vector.extract_strided_slice %131 {offsets = [0, 128], sizes = [8, 384], strides = [1, 1]} : vector<8x512xf32> to vector<8x384xf32>
    %cst_77 = arith.constant dense<0.000000e+00> : vector<16x384xf32>
    %139 = tpu.matmul %137, %138, %cst_77 {dimension_numbers = #tpu.dot_dimension_numbers<[1], [0], [0], [1], [0, 0, 1, 1], [], []>} : vector<16x8xf32>, vector<8x384xf32>, vector<16x384xf32> -> vector<16x384xf32>
    %140 = arith.addf %135, %139 : vector<16x384xf32>
    %c0_78 = arith.constant 0 : index
    %c0_79 = arith.constant 0 : index
    %141 = vector.load %arg18[%c0_78, %c0_79] : memref<16x1xf32, #tpu.memory_space<vmem>>, vector<16x1xf32>
    %142 = vector.broadcast %141 : vector<16x1xf32> to vector<16x384xf32>
    %143 = arith.addf %140, %142 : vector<16x384xf32>
    %144 = vector.extract_strided_slice %143 {offsets = [0, 0], sizes = [8, 384], strides = [1, 1]} : vector<16x384xf32> to vector<8x384xf32>
    %145 = vector.extract_strided_slice %143 {offsets = [8, 0], sizes = [8, 384], strides = [1, 1]} : vector<16x384xf32> to vector<8x384xf32>
    %146 = arith.negf %145 : vector<8x384xf32>
    %147 = math.exp %146 : vector<8x384xf32>
    %cst_80 = arith.constant 1.000000e+00 : f32
    %148 = vector.broadcast %cst_80 : f32 to vector<8x384xf32>
    %149 = arith.addf %148, %147 : vector<8x384xf32>
    %150 = arith.divf %148, %149 : vector<8x384xf32>
    %151 = arith.mulf %144, %150 : vector<8x384xf32>
    %152 = vector.extract_strided_slice %127 {offsets = [0, 640], sizes = [8, 640], strides = [1, 1]} : vector<8x1280xf32> to vector<8x640xf32>
    %c0_81 = arith.constant 0 : index
    %c0_82 = arith.constant 0 : index
    %c0_83 = arith.constant 0 : index
    %153 = vector.load %arg19[%c0_81, %c0_82, %c0_83] : memref<2x16x8xf32, #tpu.memory_space<vmem>>, vector<1x16x8xf32>
    %154 = vector.shape_cast %153 : vector<1x16x8xf32> to vector<16x8xf32>
    %155 = vector.extract_strided_slice %152 {offsets = [0, 0], sizes = [8, 512], strides = [1, 1]} : vector<8x640xf32> to vector<8x512xf32>
    %cst_84 = arith.constant dense<0.000000e+00> : vector<16x512xf32>
    %156 = tpu.matmul %154, %155, %cst_84 {dimension_numbers = #tpu.dot_dimension_numbers<[1], [0], [0], [1], [0, 0, 1, 1], [], []>} : vector<16x8xf32>, vector<8x512xf32>, vector<16x512xf32> -> vector<16x512xf32>
    %c1_85 = arith.constant 1 : index
    %c0_86 = arith.constant 0 : index
    %c0_87 = arith.constant 0 : index
    %157 = vector.load %arg19[%c1_85, %c0_86, %c0_87] : memref<2x16x8xf32, #tpu.memory_space<vmem>>, vector<1x16x8xf32>
    %158 = vector.shape_cast %157 : vector<1x16x8xf32> to vector<16x8xf32>
    %159 = vector.extract_strided_slice %152 {offsets = [0, 128], sizes = [8, 512], strides = [1, 1]} : vector<8x640xf32> to vector<8x512xf32>
    %cst_88 = arith.constant dense<0.000000e+00> : vector<16x512xf32>
    %160 = tpu.matmul %158, %159, %cst_88 {dimension_numbers = #tpu.dot_dimension_numbers<[1], [0], [0], [1], [0, 0, 1, 1], [], []>} : vector<16x8xf32>, vector<8x512xf32>, vector<16x512xf32> -> vector<16x512xf32>
    %161 = arith.addf %156, %160 : vector<16x512xf32>
    %c0_89 = arith.constant 0 : index
    %c0_90 = arith.constant 0 : index
    %162 = vector.load %arg20[%c0_89, %c0_90] : memref<16x1xf32, #tpu.memory_space<vmem>>, vector<16x1xf32>
    %163 = vector.broadcast %162 : vector<16x1xf32> to vector<16x512xf32>
    %164 = arith.addf %161, %163 : vector<16x512xf32>
    %165 = vector.extract_strided_slice %164 {offsets = [0, 0], sizes = [8, 512], strides = [1, 1]} : vector<16x512xf32> to vector<8x512xf32>
    %166 = vector.extract_strided_slice %164 {offsets = [8, 0], sizes = [8, 512], strides = [1, 1]} : vector<16x512xf32> to vector<8x512xf32>
    %167 = arith.negf %166 : vector<8x512xf32>
    %168 = math.exp %167 : vector<8x512xf32>
    %cst_91 = arith.constant 1.000000e+00 : f32
    %169 = vector.broadcast %cst_91 : f32 to vector<8x512xf32>
    %170 = arith.addf %169, %168 : vector<8x512xf32>
    %171 = arith.divf %169, %170 : vector<8x512xf32>
    %172 = arith.mulf %165, %171 : vector<8x512xf32>
    %173 = tpu.concatenate %130, %151, %172 in 1 : vector<8x128xf32>, vector<8x384xf32>, vector<8x512xf32> -> vector<8x1024xf32>
    %c0_92 = arith.constant 0 : index
    %c0_93 = arith.constant 0 : index
    %174 = vector.load %arg21[%c0_92, %c0_93] : memref<8x8xf32, #tpu.memory_space<vmem>>, vector<8x8xf32>
    %cst_94 = arith.constant dense<0.000000e+00> : vector<8x1024xf32>
    %175 = tpu.matmul %174, %173, %cst_94 {dimension_numbers = #tpu.dot_dimension_numbers<[1], [0], [0], [1], [0, 0, 1, 1], [], []>} : vector<8x8xf32>, vector<8x1024xf32>, vector<8x1024xf32> -> vector<8x1024xf32>
    %c0_95 = arith.constant 0 : index
    %c0_96 = arith.constant 0 : index
    %176 = vector.load %arg2[%c0_95, %c0_96] : memref<128x128xf32, #tpu.memory_space<vmem>>, vector<128x128xf32>
    %177 = vector.extract_strided_slice %175 {offsets = [0, 0], sizes = [8, 128], strides = [1, 1]} : vector<8x1024xf32> to vector<8x128xf32>
    %cst_97 = arith.constant dense<0.000000e+00> : vector<8x128xf32>
    %178 = tpu.matmul %177, %176, %cst_97 {dimension_numbers = #tpu.dot_dimension_numbers<[1], [0], [0], [1], [0, 0, 1, 1], [], []>} : vector<8x128xf32>, vector<128x128xf32>, vector<8x128xf32> -> vector<8x128xf32>
    %179 = vector.extract_strided_slice %175 {offsets = [0, 128], sizes = [8, 128], strides = [1, 1]} : vector<8x1024xf32> to vector<8x128xf32>
    %cst_98 = arith.constant dense<0.000000e+00> : vector<8x128xf32>
    %180 = tpu.matmul %179, %176, %cst_98 {dimension_numbers = #tpu.dot_dimension_numbers<[1], [0], [0], [1], [0, 0, 1, 1], [], []>} : vector<8x128xf32>, vector<128x128xf32>, vector<8x128xf32> -> vector<8x128xf32>
    %181 = vector.extract_strided_slice %175 {offsets = [0, 256], sizes = [8, 128], strides = [1, 1]} : vector<8x1024xf32> to vector<8x128xf32>
    %cst_99 = arith.constant dense<0.000000e+00> : vector<8x128xf32>
    %182 = tpu.matmul %181, %176, %cst_99 {dimension_numbers = #tpu.dot_dimension_numbers<[1], [0], [0], [1], [0, 0, 1, 1], [], []>} : vector<8x128xf32>, vector<128x128xf32>, vector<8x128xf32> -> vector<8x128xf32>
    %183 = vector.extract_strided_slice %175 {offsets = [0, 384], sizes = [8, 128], strides = [1, 1]} : vector<8x1024xf32> to vector<8x128xf32>
    %cst_100 = arith.constant dense<0.000000e+00> : vector<8x128xf32>
    %184 = tpu.matmul %183, %176, %cst_100 {dimension_numbers = #tpu.dot_dimension_numbers<[1], [0], [0], [1], [0, 0, 1, 1], [], []>} : vector<8x128xf32>, vector<128x128xf32>, vector<8x128xf32> -> vector<8x128xf32>
    %185 = vector.extract_strided_slice %175 {offsets = [0, 512], sizes = [8, 128], strides = [1, 1]} : vector<8x1024xf32> to vector<8x128xf32>
    %cst_101 = arith.constant dense<0.000000e+00> : vector<8x128xf32>
    %186 = tpu.matmul %185, %176, %cst_101 {dimension_numbers = #tpu.dot_dimension_numbers<[1], [0], [0], [1], [0, 0, 1, 1], [], []>} : vector<8x128xf32>, vector<128x128xf32>, vector<8x128xf32> -> vector<8x128xf32>
    %187 = vector.extract_strided_slice %175 {offsets = [0, 640], sizes = [8, 128], strides = [1, 1]} : vector<8x1024xf32> to vector<8x128xf32>
    %cst_102 = arith.constant dense<0.000000e+00> : vector<8x128xf32>
    %188 = tpu.matmul %187, %176, %cst_102 {dimension_numbers = #tpu.dot_dimension_numbers<[1], [0], [0], [1], [0, 0, 1, 1], [], []>} : vector<8x128xf32>, vector<128x128xf32>, vector<8x128xf32> -> vector<8x128xf32>
    %189 = vector.extract_strided_slice %175 {offsets = [0, 768], sizes = [8, 128], strides = [1, 1]} : vector<8x1024xf32> to vector<8x128xf32>
    %cst_103 = arith.constant dense<0.000000e+00> : vector<8x128xf32>
    %190 = tpu.matmul %189, %176, %cst_103 {dimension_numbers = #tpu.dot_dimension_numbers<[1], [0], [0], [1], [0, 0, 1, 1], [], []>} : vector<8x128xf32>, vector<128x128xf32>, vector<8x128xf32> -> vector<8x128xf32>
    %191 = vector.extract_strided_slice %175 {offsets = [0, 896], sizes = [8, 128], strides = [1, 1]} : vector<8x1024xf32> to vector<8x128xf32>
    %cst_104 = arith.constant dense<0.000000e+00> : vector<8x128xf32>
    %192 = tpu.matmul %191, %176, %cst_104 {dimension_numbers = #tpu.dot_dimension_numbers<[1], [0], [0], [1], [0, 0, 1, 1], [], []>} : vector<8x128xf32>, vector<128x128xf32>, vector<8x128xf32> -> vector<8x128xf32>
    %193 = tpu.concatenate %178, %180, %182, %184, %186, %188, %190, %192 in 1 : vector<8x128xf32>, vector<8x128xf32>, vector<8x128xf32>, vector<8x128xf32>, vector<8x128xf32>, vector<8x128xf32>, vector<8x128xf32>, vector<8x128xf32> -> vector<8x1024xf32>
    %c0_105 = arith.constant 0 : index
    %c0_106 = arith.constant 0 : index
    %194 = vector.load %arg22[%c0_105, %c0_106] : memref<8x1xf32, #tpu.memory_space<vmem>>, vector<8x1xf32>
    %195 = vector.broadcast %194 : vector<8x1xf32> to vector<8x1024xf32>
    %196 = arith.addf %193, %195 : vector<8x1024xf32>
    %197 = arith.addf %196, %173 : vector<8x1024xf32>
    %cst_107 = arith.constant 0.000000e+00 : f32
    %198 = vector.broadcast %cst_107 : f32 to vector<8x1024xf32>
    %199 = arith.maximumf %197, %198 : vector<8x1024xf32>
    %c0_108 = arith.constant 0 : index
    %c0_109 = arith.constant 0 : index
    %200 = vector.load %arg16[%c0_108, %c0_109] : memref<8x128xf32, #tpu.memory_space<vmem>>, vector<8x128xf32>
    %201 = vector.extract_strided_slice %199 {offsets = [0, 0], sizes = [8, 128], strides = [1, 1]} : vector<8x1024xf32> to vector<8x128xf32>
    %202 = arith.mulf %200, %201 : vector<8x128xf32>
    %203 = vector.extract_strided_slice %199 {offsets = [0, 128], sizes = [8, 384], strides = [1, 1]} : vector<8x1024xf32> to vector<8x384xf32>
    %c0_110 = arith.constant 0 : index
    %c0_111 = arith.constant 0 : index
    %c0_112 = arith.constant 0 : index
    %204 = vector.load %arg23[%c0_110, %c0_111, %c0_112] : memref<2x16x8xf32, #tpu.memory_space<vmem>>, vector<1x16x8xf32>
    %205 = vector.shape_cast %204 : vector<1x16x8xf32> to vector<16x8xf32>
    %206 = vector.extract_strided_slice %203 {offsets = [0, 0], sizes = [8, 256], strides = [1, 1]} : vector<8x384xf32> to vector<8x256xf32>
    %cst_113 = arith.constant dense<0.000000e+00> : vector<16x256xf32>
    %207 = tpu.matmul %205, %206, %cst_113 {dimension_numbers = #tpu.dot_dimension_numbers<[1], [0], [0], [1], [0, 0, 1, 1], [], []>} : vector<16x8xf32>, vector<8x256xf32>, vector<16x256xf32> -> vector<16x256xf32>
    %c1_114 = arith.constant 1 : index
    %c0_115 = arith.constant 0 : index
    %c0_116 = arith.constant 0 : index
    %208 = vector.load %arg23[%c1_114, %c0_115, %c0_116] : memref<2x16x8xf32, #tpu.memory_space<vmem>>, vector<1x16x8xf32>
    %209 = vector.shape_cast %208 : vector<1x16x8xf32> to vector<16x8xf32>
    %210 = vector.extract_strided_slice %203 {offsets = [0, 128], sizes = [8, 256], strides = [1, 1]} : vector<8x384xf32> to vector<8x256xf32>
    %cst_117 = arith.constant dense<0.000000e+00> : vector<16x256xf32>
    %211 = tpu.matmul %209, %210, %cst_117 {dimension_numbers = #tpu.dot_dimension_numbers<[1], [0], [0], [1], [0, 0, 1, 1], [], []>} : vector<16x8xf32>, vector<8x256xf32>, vector<16x256xf32> -> vector<16x256xf32>
    %212 = arith.addf %207, %211 : vector<16x256xf32>
    %c0_118 = arith.constant 0 : index
    %c0_119 = arith.constant 0 : index
    %213 = vector.load %arg24[%c0_118, %c0_119] : memref<16x1xf32, #tpu.memory_space<vmem>>, vector<16x1xf32>
    %214 = vector.broadcast %213 : vector<16x1xf32> to vector<16x256xf32>
    %215 = arith.addf %212, %214 : vector<16x256xf32>
    %216 = vector.extract_strided_slice %215 {offsets = [0, 0], sizes = [8, 256], strides = [1, 1]} : vector<16x256xf32> to vector<8x256xf32>
    %217 = vector.extract_strided_slice %215 {offsets = [8, 0], sizes = [8, 256], strides = [1, 1]} : vector<16x256xf32> to vector<8x256xf32>
    %218 = arith.negf %217 : vector<8x256xf32>
    %219 = math.exp %218 : vector<8x256xf32>
    %cst_120 = arith.constant 1.000000e+00 : f32
    %220 = vector.broadcast %cst_120 : f32 to vector<8x256xf32>
    %221 = arith.addf %220, %219 : vector<8x256xf32>
    %222 = arith.divf %220, %221 : vector<8x256xf32>
    %223 = arith.mulf %216, %222 : vector<8x256xf32>
    %224 = vector.extract_strided_slice %199 {offsets = [0, 512], sizes = [8, 512], strides = [1, 1]} : vector<8x1024xf32> to vector<8x512xf32>
    %c0_121 = arith.constant 0 : index
    %c0_122 = arith.constant 0 : index
    %c0_123 = arith.constant 0 : index
    %225 = vector.load %arg25[%c0_121, %c0_122, %c0_123] : memref<2x16x8xf32, #tpu.memory_space<vmem>>, vector<1x16x8xf32>
    %226 = vector.shape_cast %225 : vector<1x16x8xf32> to vector<16x8xf32>
    %227 = vector.extract_strided_slice %224 {offsets = [0, 0], sizes = [8, 384], strides = [1, 1]} : vector<8x512xf32> to vector<8x384xf32>
    %cst_124 = arith.constant dense<0.000000e+00> : vector<16x384xf32>
    %228 = tpu.matmul %226, %227, %cst_124 {dimension_numbers = #tpu.dot_dimension_numbers<[1], [0], [0], [1], [0, 0, 1, 1], [], []>} : vector<16x8xf32>, vector<8x384xf32>, vector<16x384xf32> -> vector<16x384xf32>
    %c1_125 = arith.constant 1 : index
    %c0_126 = arith.constant 0 : index
    %c0_127 = arith.constant 0 : index
    %229 = vector.load %arg25[%c1_125, %c0_126, %c0_127] : memref<2x16x8xf32, #tpu.memory_space<vmem>>, vector<1x16x8xf32>
    %230 = vector.shape_cast %229 : vector<1x16x8xf32> to vector<16x8xf32>
    %231 = vector.extract_strided_slice %224 {offsets = [0, 128], sizes = [8, 384], strides = [1, 1]} : vector<8x512xf32> to vector<8x384xf32>
    %cst_128 = arith.constant dense<0.000000e+00> : vector<16x384xf32>
    %232 = tpu.matmul %230, %231, %cst_128 {dimension_numbers = #tpu.dot_dimension_numbers<[1], [0], [0], [1], [0, 0, 1, 1], [], []>} : vector<16x8xf32>, vector<8x384xf32>, vector<16x384xf32> -> vector<16x384xf32>
    %233 = arith.addf %228, %232 : vector<16x384xf32>
    %c0_129 = arith.constant 0 : index
    %c0_130 = arith.constant 0 : index
    %234 = vector.load %arg26[%c0_129, %c0_130] : memref<16x1xf32, #tpu.memory_space<vmem>>, vector<16x1xf32>
    %235 = vector.broadcast %234 : vector<16x1xf32> to vector<16x384xf32>
    %236 = arith.addf %233, %235 : vector<16x384xf32>
    %237 = vector.extract_strided_slice %236 {offsets = [0, 0], sizes = [8, 384], strides = [1, 1]} : vector<16x384xf32> to vector<8x384xf32>
    %238 = vector.extract_strided_slice %236 {offsets = [8, 0], sizes = [8, 384], strides = [1, 1]} : vector<16x384xf32> to vector<8x384xf32>
    %239 = arith.negf %238 : vector<8x384xf32>
    %240 = math.exp %239 : vector<8x384xf32>
    %cst_131 = arith.constant 1.000000e+00 : f32
    %241 = vector.broadcast %cst_131 : f32 to vector<8x384xf32>
    %242 = arith.addf %241, %240 : vector<8x384xf32>
    %243 = arith.divf %241, %242 : vector<8x384xf32>
    %244 = arith.mulf %237, %243 : vector<8x384xf32>
    %245 = tpu.concatenate %202, %223, %244 in 1 : vector<8x128xf32>, vector<8x256xf32>, vector<8x384xf32> -> vector<8x768xf32>
    %c0_132 = arith.constant 0 : index
    %c0_133 = arith.constant 0 : index
    %c0_134 = arith.constant 0 : index
    %246 = vector.load %arg27[%c0_132, %c0_133, %c0_134] : memref<6x8x8xf32, #tpu.memory_space<vmem>>, vector<1x8x8xf32>
    %247 = vector.shape_cast %246 : vector<1x8x8xf32> to vector<8x8xf32>
    %248 = vector.extract_strided_slice %245 {offsets = [0, 0], sizes = [8, 128], strides = [1, 1]} : vector<8x768xf32> to vector<8x128xf32>
    %cst_135 = arith.constant dense<0.000000e+00> : vector<8x128xf32>
    %249 = tpu.matmul %247, %248, %cst_135 {dimension_numbers = #tpu.dot_dimension_numbers<[1], [0], [0], [1], [0, 0, 1, 1], [], []>} : vector<8x8xf32>, vector<8x128xf32>, vector<8x128xf32> -> vector<8x128xf32>
    %c1_136 = arith.constant 1 : index
    %c0_137 = arith.constant 0 : index
    %c0_138 = arith.constant 0 : index
    %250 = vector.load %arg27[%c1_136, %c0_137, %c0_138] : memref<6x8x8xf32, #tpu.memory_space<vmem>>, vector<1x8x8xf32>
    %251 = vector.shape_cast %250 : vector<1x8x8xf32> to vector<8x8xf32>
    %252 = vector.extract_strided_slice %245 {offsets = [0, 128], sizes = [8, 128], strides = [1, 1]} : vector<8x768xf32> to vector<8x128xf32>
    %cst_139 = arith.constant dense<0.000000e+00> : vector<8x128xf32>
    %253 = tpu.matmul %251, %252, %cst_139 {dimension_numbers = #tpu.dot_dimension_numbers<[1], [0], [0], [1], [0, 0, 1, 1], [], []>} : vector<8x8xf32>, vector<8x128xf32>, vector<8x128xf32> -> vector<8x128xf32>
    %254 = arith.addf %249, %253 : vector<8x128xf32>
    %c2 = arith.constant 2 : index
    %c0_140 = arith.constant 0 : index
    %c0_141 = arith.constant 0 : index
    %255 = vector.load %arg27[%c2, %c0_140, %c0_141] : memref<6x8x8xf32, #tpu.memory_space<vmem>>, vector<1x8x8xf32>
    %256 = vector.shape_cast %255 : vector<1x8x8xf32> to vector<8x8xf32>
    %257 = vector.extract_strided_slice %245 {offsets = [0, 256], sizes = [8, 128], strides = [1, 1]} : vector<8x768xf32> to vector<8x128xf32>
    %cst_142 = arith.constant dense<0.000000e+00> : vector<8x128xf32>
    %258 = tpu.matmul %256, %257, %cst_142 {dimension_numbers = #tpu.dot_dimension_numbers<[1], [0], [0], [1], [0, 0, 1, 1], [], []>} : vector<8x8xf32>, vector<8x128xf32>, vector<8x128xf32> -> vector<8x128xf32>
    %259 = arith.addf %254, %258 : vector<8x128xf32>
    %c3 = arith.constant 3 : index
    %c0_143 = arith.constant 0 : index
    %c0_144 = arith.constant 0 : index
    %260 = vector.load %arg27[%c3, %c0_143, %c0_144] : memref<6x8x8xf32, #tpu.memory_space<vmem>>, vector<1x8x8xf32>
    %261 = vector.shape_cast %260 : vector<1x8x8xf32> to vector<8x8xf32>
    %262 = vector.extract_strided_slice %245 {offsets = [0, 384], sizes = [8, 128], strides = [1, 1]} : vector<8x768xf32> to vector<8x128xf32>
    %cst_145 = arith.constant dense<0.000000e+00> : vector<8x128xf32>
    %263 = tpu.matmul %261, %262, %cst_145 {dimension_numbers = #tpu.dot_dimension_numbers<[1], [0], [0], [1], [0, 0, 1, 1], [], []>} : vector<8x8xf32>, vector<8x128xf32>, vector<8x128xf32> -> vector<8x128xf32>
    %264 = arith.addf %259, %263 : vector<8x128xf32>
    %c4 = arith.constant 4 : index
    %c0_146 = arith.constant 0 : index
    %c0_147 = arith.constant 0 : index
    %265 = vector.load %arg27[%c4, %c0_146, %c0_147] : memref<6x8x8xf32, #tpu.memory_space<vmem>>, vector<1x8x8xf32>
    %266 = vector.shape_cast %265 : vector<1x8x8xf32> to vector<8x8xf32>
    %267 = vector.extract_strided_slice %245 {offsets = [0, 512], sizes = [8, 128], strides = [1, 1]} : vector<8x768xf32> to vector<8x128xf32>
    %cst_148 = arith.constant dense<0.000000e+00> : vector<8x128xf32>
    %268 = tpu.matmul %266, %267, %cst_148 {dimension_numbers = #tpu.dot_dimension_numbers<[1], [0], [0], [1], [0, 0, 1, 1], [], []>} : vector<8x8xf32>, vector<8x128xf32>, vector<8x128xf32> -> vector<8x128xf32>
    %269 = arith.addf %264, %268 : vector<8x128xf32>
    %c5 = arith.constant 5 : index
    %c0_149 = arith.constant 0 : index
    %c0_150 = arith.constant 0 : index
    %270 = vector.load %arg27[%c5, %c0_149, %c0_150] : memref<6x8x8xf32, #tpu.memory_space<vmem>>, vector<1x8x8xf32>
    %271 = vector.shape_cast %270 : vector<1x8x8xf32> to vector<8x8xf32>
    %272 = vector.extract_strided_slice %245 {offsets = [0, 640], sizes = [8, 128], strides = [1, 1]} : vector<8x768xf32> to vector<8x128xf32>
    %cst_151 = arith.constant dense<0.000000e+00> : vector<8x128xf32>
    %273 = tpu.matmul %271, %272, %cst_151 {dimension_numbers = #tpu.dot_dimension_numbers<[1], [0], [0], [1], [0, 0, 1, 1], [], []>} : vector<8x8xf32>, vector<8x128xf32>, vector<8x128xf32> -> vector<8x128xf32>
    %274 = arith.addf %269, %273 : vector<8x128xf32>
    %c0_152 = arith.constant 0 : index
    %c0_153 = arith.constant 0 : index
    %275 = vector.load %arg28[%c0_152, %c0_153] : memref<8x1xf32, #tpu.memory_space<vmem>>, vector<8x1xf32>
    %276 = vector.broadcast %275 : vector<8x1xf32> to vector<8x128xf32>
    %277 = arith.addf %274, %276 : vector<8x128xf32>
    %c0_154 = arith.constant 0 : index
    %c0_155 = arith.constant 0 : index
    %c0_156 = arith.constant 0 : index
    %278 = vector.load %arg29[%c0_154, %c0_155, %c0_156] : memref<1x8x128xf32, #tpu.memory_space<vmem>>, vector<1x8x128xf32>
    %279 = vector.shape_cast %278 : vector<1x8x128xf32> to vector<8x128xf32>
    %280 = vector.shape_cast %277 : vector<8x128xf32> to vector<1x8x128xf32>
    tpu.vector_store %arg29[%c0_154, %c0_155, %c0_156], %280 {strides = array<i32>} : memref<1x8x128xf32, #tpu.memory_space<vmem>>, vector<1x8x128xf32>,
    return
  }
  func.func @transform_0(%arg0: i32) -> (i32, i32, i32) {
    %c0_i32 = arith.constant 0 : i32
    %c0_i32_0 = arith.constant 0 : i32
    %c0_i32_1 = arith.constant 0 : i32
    return %arg0, %c0_i32, %c0_i32_0 : i32, i32, i32
  }
  func.func @transform_1(%arg0: i32) -> (i32, i32) {
    %c0_i32 = arith.constant 0 : i32
    %c0_i32_0 = arith.constant 0 : i32
    %c0_i32_1 = arith.constant 0 : i32
    return %c0_i32, %c0_i32_0 : i32, i32
  }
  func.func @transform_2(%arg0: i32) -> (i32, i32) {
    %c0_i32 = arith.constant 0 : i32
    %c0_i32_0 = arith.constant 0 : i32
    %c0_i32_1 = arith.constant 0 : i32
    return %c0_i32, %c0_i32_0 : i32, i32
  }
  func.func @transform_3(%arg0: i32) -> (i32, i32) {
    %c0_i32 = arith.constant 0 : i32
    %c0_i32_0 = arith.constant 0 : i32
    %c0_i32_1 = arith.constant 0 : i32
    return %c0_i32, %c0_i32_0 : i32, i32
  }
  func.func @transform_4(%arg0: i32) -> (i32, i32, i32) {
    %c0_i32 = arith.constant 0 : i32
    %c0_i32_0 = arith.constant 0 : i32
    %c0_i32_1 = arith.constant 0 : i32
    %c0_i32_2 = arith.constant 0 : i32
    return %c0_i32, %c0_i32_0, %c0_i32_1 : i32, i32, i32
  }
  func.func @transform_5(%arg0: i32) -> (i32, i32) {
    %c0_i32 = arith.constant 0 : i32
    %c0_i32_0 = arith.constant 0 : i32
    %c0_i32_1 = arith.constant 0 : i32
    return %c0_i32, %c0_i32_0 : i32, i32
  }
  func.func @transform_6(%arg0: i32) -> (i32, i32, i32) {
    %c0_i32 = arith.constant 0 : i32
    %c0_i32_0 = arith.constant 0 : i32
    %c0_i32_1 = arith.constant 0 : i32
    %c0_i32_2 = arith.constant 0 : i32
    return %c0_i32, %c0_i32_0, %c0_i32_1 : i32, i32, i32
  }
  func.func @transform_7(%arg0: i32) -> (i32, i32) {
    %c0_i32 = arith.constant 0 : i32
    %c0_i32_0 = arith.constant 0 : i32
    %c0_i32_1 = arith.constant 0 : i32
    return %c0_i32, %c0_i32_0 : i32, i32
  }
  func.func @transform_8(%arg0: i32) -> (i32, i32) {
    %c0_i32 = arith.constant 0 : i32
    %c0_i32_0 = arith.constant 0 : i32
    %c0_i32_1 = arith.constant 0 : i32
    return %c0_i32, %c0_i32_0 : i32, i32
  }
  func.func @transform_9(%arg0: i32) -> (i32, i32) {
    %c0_i32 = arith.constant 0 : i32
    %c0_i32_0 = arith.constant 0 : i32
    %c0_i32_1 = arith.constant 0 : i32
    return %c0_i32, %c0_i32_0 : i32, i32
  }
  func.func @transform_10(%arg0: i32) -> (i32, i32, i32) {
    %c0_i32 = arith.constant 0 : i32
    %c0_i32_0 = arith.constant 0 : i32
    %c0_i32_1 = arith.constant 0 : i32
    %c0_i32_2 = arith.constant 0 : i32
    return %c0_i32, %c0_i32_0, %c0_i32_1 : i32, i32, i32
  }
  func.func @transform_11(%arg0: i32) -> (i32, i32) {
    %c0_i32 = arith.constant 0 : i32
    %c0_i32_0 = arith.constant 0 : i32
    %c0_i32_1 = arith.constant 0 : i32
    return %c0_i32, %c0_i32_0 : i32, i32
  }
  func.func @transform_12(%arg0: i32) -> (i32, i32, i32) {
    %c0_i32 = arith.constant 0 : i32
    %c0_i32_0 = arith.constant 0 : i32
    %c0_i32_1 = arith.constant 0 : i32
    %c0_i32_2 = arith.constant 0 : i32
    return %c0_i32, %c0_i32_0, %c0_i32_1 : i32, i32, i32
  }
  func.func @transform_13(%arg0: i32) -> (i32, i32) {
    %c0_i32 = arith.constant 0 : i32
    %c0_i32_0 = arith.constant 0 : i32
    %c0_i32_1 = arith.constant 0 : i32
    return %c0_i32, %c0_i32_0 : i32, i32
  }
  func.func @transform_14(%arg0: i32) -> (i32, i32) {
    %c0_i32 = arith.constant 0 : i32
    %c0_i32_0 = arith.constant 0 : i32
    %c0_i32_1 = arith.constant 0 : i32
    return %c0_i32, %c0_i32_0 : i32, i32
  }
  func.func @transform_15(%arg0: i32) -> (i32, i32) {
    %c0_i32 = arith.constant 0 : i32
    %c0_i32_0 = arith.constant 0 : i32
    %c0_i32_1 = arith.constant 0 : i32
    return %c0_i32, %c0_i32_0 : i32, i32
  }
  func.func @transform_16(%arg0: i32) -> (i32, i32, i32) {
    %c0_i32 = arith.constant 0 : i32
    %c0_i32_0 = arith.constant 0 : i32
    %c0_i32_1 = arith.constant 0 : i32
    %c0_i32_2 = arith.constant 0 : i32
    return %c0_i32, %c0_i32_0, %c0_i32_1 : i32, i32, i32
  }
  func.func @transform_17(%arg0: i32) -> (i32, i32) {
    %c0_i32 = arith.constant 0 : i32
    %c0_i32_0 = arith.constant 0 : i32
    %c0_i32_1 = arith.constant 0 : i32
    return %c0_i32, %c0_i32_0 : i32, i32
  }
  func.func @transform_18(%arg0: i32) -> (i32, i32, i32) {
    %c0_i32 = arith.constant 0 : i32
    %c0_i32_0 = arith.constant 0 : i32
    %c0_i32_1 = arith.constant 0 : i32
    %c0_i32_2 = arith.constant 0 : i32
    return %c0_i32, %c0_i32_0, %c0_i32_1 : i32, i32, i32
  }
  func.func @transform_19(%arg0: i32) -> (i32, i32) {
    %c0_i32 = arith.constant 0 : i32
    %c0_i32_0 = arith.constant 0 : i32
    %c0_i32_1 = arith.constant 0 : i32
    return %c0_i32, %c0_i32_0 : i32, i32
  }
  func.func @transform_20(%arg0: i32) -> (i32, i32) {
    %c0_i32 = arith.constant 0 : i32
    %c0_i32_0 = arith.constant 0 : i32
    %c0_i32_1 = arith.constant 0 : i32
    return %c0_i32, %c0_i32_0 : i32, i32
  }
  func.func @transform_21(%arg0: i32) -> (i32, i32) {
    %c0_i32 = arith.constant 0 : i32
    %c0_i32_0 = arith.constant 0 : i32
    %c0_i32_1 = arith.constant 0 : i32
    return %c0_i32, %c0_i32_0 : i32, i32
  }
  func.func @transform_22(%arg0: i32) -> (i32, i32, i32) {
    %c0_i32 = arith.constant 0 : i32
    %c0_i32_0 = arith.constant 0 : i32
    %c0_i32_1 = arith.constant 0 : i32
    %c0_i32_2 = arith.constant 0 : i32
    return %c0_i32, %c0_i32_0, %c0_i32_1 : i32, i32, i32
  }
  func.func @transform_23(%arg0: i32) -> (i32, i32) {
    %c0_i32 = arith.constant 0 : i32
    %c0_i32_0 = arith.constant 0 : i32
    %c0_i32_1 = arith.constant 0 : i32
    return %c0_i32, %c0_i32_0 : i32, i32
  }
  func.func @transform_24(%arg0: i32) -> (i32, i32, i32) {
    %c0_i32 = arith.constant 0 : i32
    %c0_i32_0 = arith.constant 0 : i32
    %c0_i32_1 = arith.constant 0 : i32
    %c0_i32_2 = arith.constant 0 : i32
    return %c0_i32, %c0_i32_0, %c0_i32_1 : i32, i32, i32
  }
  func.func @transform_25(%arg0: i32) -> (i32, i32) {
    %c0_i32 = arith.constant 0 : i32
    %c0_i32_0 = arith.constant 0 : i32
    %c0_i32_1 = arith.constant 0 : i32
    return %c0_i32, %c0_i32_0 : i32, i32
  }
  func.func @transform_26(%arg0: i32) -> (i32, i32, i32) {
    %c0_i32 = arith.constant 0 : i32
    %c0_i32_0 = arith.constant 0 : i32
    %c0_i32_1 = arith.constant 0 : i32
    %c0_i32_2 = arith.constant 0 : i32
    return %c0_i32, %c0_i32_0, %c0_i32_1 : i32, i32, i32
  }
  func.func @transform_27(%arg0: i32) -> (i32, i32) {
    %c0_i32 = arith.constant 0 : i32
    %c0_i32_0 = arith.constant 0 : i32
    %c0_i32_1 = arith.constant 0 : i32
    return %c0_i32, %c0_i32_0 : i32, i32
  }
  func.func @transform_28(%arg0: i32) -> (i32, i32, i32) {
    %c0_i32 = arith.constant 0 : i32
    %c0_i32_0 = arith.constant 0 : i32
    %c0_i32_1 = arith.constant 0 : i32
    return %arg0, %c0_i32, %c0_i32_0 : i32, i32, i32
  }
}

</mosaic_0001>

<llo_original>
// kernel: _lambda_.1
$region0: #{_lambda_.1}
  #allocation0 [shape = 'u32[]', space=smem, size = 0x4, offset = 0x4, fixed_abs, tag = 'smem constant byte address 0x4 - core index']
  #allocation1 [shape = 'u32[72,128]{1,0:T(1,128)}', space=vmem, size = 0x9000, scoped, tag = 'internal scratch']
  %s0 = inlined_call_operand.vmem [shape: f32[2,8,1792], index: 0, kind: input, shape index: {}]
  %s1 = inlined_call_operand.vmem [shape: f32[128,128], index: 1, kind: input, shape index: {}]
  %s2 = inlined_call_operand.vmem [shape: f32[8,128], index: 2, kind: input, shape index: {}]
  %s3 = inlined_call_operand.vmem [shape: f32[8,128], index: 3, kind: input, shape index: {}]
  %s4 = inlined_call_operand.vmem [shape: f32[2,16,8], index: 4, kind: input, shape index: {}]
  %s5 = inlined_call_operand.vmem [shape: f32[16,1], index: 5, kind: input, shape index: {}]
  %s6 = inlined_call_operand.vmem [shape: f32[2,16,8], index: 6, kind: input, shape index: {}]
  %s7 = inlined_call_operand.vmem [shape: f32[16,1], index: 7, kind: input, shape index: {}]
  %s8 = inlined_call_operand.vmem [shape: f32[8,8], index: 8, kind: input, shape index: {}]
  %s9 = inlined_call_operand.vmem [shape: f32[8,1], index: 9, kind: input, shape index: {}]
  %s10 = inlined_call_operand.vmem [shape: f32[2,16,8], index: 10, kind: input, shape index: {}]
  %s11 = inlined_call_operand.vmem [shape: f32[16,1], index: 11, kind: input, shape index: {}]
  %s12 = inlined_call_operand.vmem [shape: f32[2,16,8], index: 12, kind: input, shape index: {}]
  %s13 = inlined_call_operand.vmem [shape: f32[16,1], index: 13, kind: input, shape index: {}]
  %s14 = inlined_call_operand.vmem [shape: f32[8,128], index: 14, kind: input, shape index: {}]
  %s15 = inlined_call_operand.vmem [shape: f32[8,128], index: 15, kind: input, shape index: {}]
  %s16 = inlined_call_operand.vmem [shape: f32[2,16,8], index: 16, kind: input, shape index: {}]
  %s17 = inlined_call_operand.vmem [shape: f32[16,1], index: 17, kind: input, shape index: {}]
  %s18 = inlined_call_operand.vmem [shape: f32[2,16,8], index: 18, kind: input, shape index: {}]
  %s19 = inlined_call_operand.vmem [shape: f32[16,1], index: 19, kind: input, shape index: {}]
  %s20 = inlined_call_operand.vmem [shape: f32[8,8], index: 20, kind: input, shape index: {}]
  %s21 = inlined_call_operand.vmem [shape: f32[8,1], index: 21, kind: input, shape index: {}]
  %s22 = inlined_call_operand.vmem [shape: f32[2,16,8], index: 22, kind: input, shape index: {}]
  %s23 = inlined_call_operand.vmem [shape: f32[16,1], index: 23, kind: input, shape index: {}]
  %s24 = inlined_call_operand.vmem [shape: f32[2,16,8], index: 24, kind: input, shape index: {}]
  %s25 = inlined_call_operand.vmem [shape: f32[16,1], index: 25, kind: input, shape index: {}]
  %s26 = inlined_call_operand.vmem [shape: f32[6,8,8], index: 26, kind: input, shape index: {}]
  %s27 = inlined_call_operand.vmem [shape: f32[8,1], index: 27, kind: input, shape index: {}]
  %s28 = inlined_call_operand.vmem [shape: f32[2,8,128], index: 28, kind: output, shape index: {}]
  %s29 = sld [smem:[#allocation0]]
  $region145: #{_lambda_.1} parent=0
    _
  %s31 = ssub.s32 1, %s29
  %s32 = scalar_select 0, %s31, %s29
  loop: start=0, step=1, limit=4
  $region2: #{_lambda_.1} parent=0 // loop_pre_header
    _
  $region3: #{_lambda_.1} parent=0 // loop_header
    %s34 = sphi 0, %s38
    %p35 = scmp.ge.s32.totalorder %s34, 4
    %s44 = sphi 0, %s46
    %s47 = sphi 0, %s44
    %s48 = sphi 0, %s47
    %s64 = sphi 0, %s48
    %s68 = sphi 0, %s68
    %s70 = sphi 0, %s68
    %s71 = sphi 0, %s70
    %s85 = sphi 0, %s71
    %s89 = sphi 0, %s89
    %s91 = sphi 0, %s89
    %s92 = sphi 0, %s91
    %s106 = sphi 0, %s92
    %s110 = sphi 0, %s110
    %s112 = sphi 0, %s110
    %s113 = sphi 0, %s112
    %s127 = sphi 0, %s113
    %s131 = sphi 0, %s131
    %s133 = sphi 0, %s131
    %s134 = sphi 0, %s133
    %s148 = sphi 0, %s134
    %s152 = sphi 0, %s152
    %s154 = sphi 0, %s152
    %s155 = sphi 0, %s154
    %s169 = sphi 0, %s155
    %s173 = sphi 0, %s173
    %s175 = sphi 0, %s173
    %s176 = sphi 0, %s175
    %s190 = sphi 0, %s176
    %s194 = sphi 0, %s194
    %s196 = sphi 0, %s194
    %s197 = sphi 0, %s196
    %s211 = sphi 0, %s197
    %s215 = sphi 0, %s215
    %s217 = sphi 0, %s215
    %s218 = sphi 0, %s217
    %s232 = sphi 0, %s218
    %s236 = sphi 0, %s236
    %s238 = sphi 0, %s236
    %s239 = sphi 0, %s238
    %s253 = sphi 0, %s239
    %s257 = sphi 0, %s257
    %s259 = sphi 0, %s257
    %s260 = sphi 0, %s259
    %s274 = sphi 0, %s260
    %s278 = sphi 0, %s278
    %s280 = sphi 0, %s278
    %s281 = sphi 0, %s280
    %s295 = sphi 0, %s281
    %s299 = sphi 0, %s299
    %s301 = sphi 0, %s299
    %s302 = sphi 0, %s301
    %s316 = sphi 0, %s302
    %s320 = sphi 0, %s320
    %s322 = sphi 0, %s320
    %s323 = sphi 0, %s322
    %s337 = sphi 0, %s323
    %s341 = sphi 0, %s341
    %s343 = sphi 0, %s341
    %s344 = sphi 0, %s343
    %s358 = sphi 0, %s344
    %s362 = sphi 0, %s362
    %s364 = sphi 0, %s362
    %s365 = sphi 0, %s364
    %s379 = sphi 0, %s365
    %s383 = sphi 0, %s383
    %s385 = sphi 0, %s383
    %s386 = sphi 0, %s385
    %s400 = sphi 0, %s386
    %s404 = sphi 0, %s404
    %s406 = sphi 0, %s404
    %s407 = sphi 0, %s406
    %s421 = sphi 0, %s407
    %s425 = sphi 0, %s425
    %s427 = sphi 0, %s425
    %s428 = sphi 0, %s427
    %s442 = sphi 0, %s428
    %s446 = sphi 0, %s446
    %s448 = sphi 0, %s446
    %s449 = sphi 0, %s448
    %s463 = sphi 0, %s449
    %s467 = sphi 0, %s467
    %s469 = sphi 0, %s467
    %s470 = sphi 0, %s469
    %s484 = sphi 0, %s470
    %s488 = sphi 0, %s488
    %s490 = sphi 0, %s488
    %s491 = sphi 0, %s490
    %s505 = sphi 0, %s491
    %s509 = sphi 0, %s509
    %s511 = sphi 0, %s509
    %s512 = sphi 0, %s511
    %s526 = sphi 0, %s512
    %s530 = sphi 0, %s530
    %s532 = sphi 0, %s530
    %s533 = sphi 0, %s532
    %s547 = sphi 0, %s533
    %s551 = sphi 0, %s551
    %s553 = sphi 0, %s551
    %s554 = sphi 0, %s553
    %s568 = sphi 0, %s554
    %s572 = sphi 0, %s572
    %s574 = sphi 0, %s572
    %s575 = sphi 0, %s574
    %s589 = sphi 0, %s575
    %s593 = sphi 0, %s593
    %s595 = sphi 0, %s593
    %s596 = sphi 0, %s595
    %s610 = sphi 0, %s596
    %s614 = sphi 0, %s614
    %s616 = sphi 0, %s614
    %s617 = sphi 0, %s616
    %s631 = sphi 0, %s617
    %s637 = sphi 0, %s639
    %s640 = sphi 0, %s637
    %s641 = sphi 0, %s640
    %s657 = sphi 0, %s641
  $region4: #{_lambda_.1} parent=0 // loop_header_branch
    %37 = sbr.rel (%p35) target = $region8
  $region5: #{_lambda_.1} parent=0 // loop_body
    %s39 = ssub.s32 %s34, 1
    %s40 = ssub.s32 %s34, 2
    %s41 = sadd.s32 %s34, 1
    %s42 = ssub.s32 %s34, %s41
    %p43 = scmp.eq.s32.totalorder %s42, 0
    %s45 = sadd.s32 %s44, 1
    %s46 = scalar_select %p43, %s44, %s45
    %p49 = pneg %p43
    %p50 = scmp.eq.s32.totalorder %s34, 1
    %p51 = por %p49, %p50
    %p52 = scmp.ne.s32.totalorder %s44, %s47
    %p53 = scmp.eq.s32.totalorder %s34, 0
    %p54 = por %p52, %p53
    %p55 = scmp.ne.s32.totalorder %s44, %s47
    %p56 = scmp.eq.s32.totalorder %s39, 1
    %p57 = por %p55, %p56
    %p58 = scmp.ne.s32.totalorder %s47, %s48
    %p59 = scmp.eq.s32.totalorder %s39, 0
    %p60 = por %p58, %p59
    %p61 = scmp.ne.s32.totalorder %s47, %s48
    %p62 = scmp.eq.s32.totalorder %s40, 1
    %p63 = por %p61, %p62
    %p65 = scmp.ne.s32.totalorder %s48, %s64
    %p66 = scmp.eq.s32.totalorder %s40, 0
    %p67 = por %p65, %p66
    %s69 = sadd.s32 %s68, 1
    %p72 = scmp.eq.s32.totalorder %s34, 1
    %p73 = scmp.ne.s32.totalorder %s68, %s70
    %p74 = scmp.eq.s32.totalorder %s34, 0
    %p75 = por %p73, %p74
    %p76 = scmp.ne.s32.totalorder %s68, %s70
    %p77 = scmp.eq.s32.totalorder %s39, 1
    %p78 = por %p76, %p77
    %p79 = scmp.ne.s32.totalorder %s70, %s71
    %p80 = scmp.eq.s32.totalorder %s39, 0
    %p81 = por %p79, %p80
    %p82 = scmp.ne.s32.totalorder %s70, %s71
    %p83 = scmp.eq.s32.totalorder %s40, 1
    %p84 = por %p82, %p83
    %p86 = scmp.ne.s32.totalorder %s71, %s85
    %p87 = scmp.eq.s32.totalorder %s40, 0
    %p88 = por %p86, %p87
    %s90 = sadd.s32 %s89, 1
    %p93 = scmp.eq.s32.totalorder %s34, 1
    %p94 = scmp.ne.s32.totalorder %s89, %s91
    %p95 = scmp.eq.s32.totalorder %s34, 0
    %p96 = por %p94, %p95
    %p97 = scmp.ne.s32.totalorder %s89, %s91
    %p98 = scmp.eq.s32.totalorder %s39, 1
    %p99 = por %p97, %p98
    %p100 = scmp.ne.s32.totalorder %s91, %s92
    %p101 = scmp.eq.s32.totalorder %s39, 0
    %p102 = por %p100, %p101
    %p103 = scmp.ne.s32.totalorder %s91, %s92
    %p104 = scmp.eq.s32.totalorder %s40, 1
    %p105 = por %p103, %p104
    %p107 = scmp.ne.s32.totalorder %s92, %s106
    %p108 = scmp.eq.s32.totalorder %s40, 0
    %p109 = por %p107, %p108
    %s111 = sadd.s32 %s110, 1
    %p114 = scmp.eq.s32.totalorder %s34, 1
    %p115 = scmp.ne.s32.totalorder %s110, %s112
    %p116 = scmp.eq.s32.totalorder %s34, 0
    %p117 = por %p115, %p116
    %p118 = scmp.ne.s32.totalorder %s110, %s112
    %p119 = scmp.eq.s32.totalorder %s39, 1
    %p120 = por %p118, %p119
    %p121 = scmp.ne.s32.totalorder %s112, %s113
    %p122 = scmp.eq.s32.totalorder %s39, 0
    %p123 = por %p121, %p122
    %p124 = scmp.ne.s32.totalorder %s112, %s113
    %p125 = scmp.eq.s32.totalorder %s40, 1
    %p126 = por %p124, %p125
    %p128 = scmp.ne.s32.totalorder %s113, %s127
    %p129 = scmp.eq.s32.totalorder %s40, 0
    %p130 = por %p128, %p129
    %s132 = sadd.s32 %s131, 1
    %p135 = scmp.eq.s32.totalorder %s34, 1
    %p136 = scmp.ne.s32.totalorder %s131, %s133
    %p137 = scmp.eq.s32.totalorder %s34, 0
    %p138 = por %p136, %p137
    %p139 = scmp.ne.s32.totalorder %s131, %s133
    %p140 = scmp.eq.s32.totalorder %s39, 1
    %p141 = por %p139, %p140
    %p142 = scmp.ne.s32.totalorder %s133, %s134
    %p143 = scmp.eq.s32.totalorder %s39, 0
    %p144 = por %p142, %p143
    %p145 = scmp.ne.s32.totalorder %s133, %s134
    %p146 = scmp.eq.s32.totalorder %s40, 1
    %p147 = por %p145, %p146
    %p149 = scmp.ne.s32.totalorder %s134, %s148
    %p150 = scmp.eq.s32.totalorder %s40, 0
    %p151 = por %p149, %p150
    %s153 = sadd.s32 %s152, 1
    %p156 = scmp.eq.s32.totalorder %s34, 1
    %p157 = scmp.ne.s32.totalorder %s152, %s154
    %p158 = scmp.eq.s32.totalorder %s34, 0
    %p159 = por %p157, %p158
    %p160 = scmp.ne.s32.totalorder %s152, %s154
    %p161 = scmp.eq.s32.totalorder %s39, 1
    %p162 = por %p160, %p161
    %p163 = scmp.ne.s32.totalorder %s154, %s155
    %p164 = scmp.eq.s32.totalorder %s39, 0
    %p165 = por %p163, %p164
    %p166 = scmp.ne.s32.totalorder %s154, %s155
    %p167 = scmp.eq.s32.totalorder %s40, 1
    %p168 = por %p166, %p167
    %p170 = scmp.ne.s32.totalorder %s155, %s169
    %p171 = scmp.eq.s32.totalorder %s40, 0
    %p172 = por %p170, %p171
    %s174 = sadd.s32 %s173, 1
    %p177 = scmp.eq.s32.totalorder %s34, 1
    %p178 = scmp.ne.s32.totalorder %s173, %s175
    %p179 = scmp.eq.s32.totalorder %s34, 0
    %p180 = por %p178, %p179
    %p181 = scmp.ne.s32.totalorder %s173, %s175
    %p182 = scmp.eq.s32.totalorder %s39, 1
    %p183 = por %p181, %p182
    %p184 = scmp.ne.s32.totalorder %s175, %s176
    %p185 = scmp.eq.s32.totalorder %s39, 0
    %p186 = por %p184, %p185
    %p187 = scmp.ne.s32.totalorder %s175, %s176
    %p188 = scmp.eq.s32.totalorder %s40, 1
    %p189 = por %p187, %p188
    %p191 = scmp.ne.s32.totalorder %s176, %s190
    %p192 = scmp.eq.s32.totalorder %s40, 0
    %p193 = por %p191, %p192
    %s195 = sadd.s32 %s194, 1
    %p198 = scmp.eq.s32.totalorder %s34, 1
    %p199 = scmp.ne.s32.totalorder %s194, %s196
    %p200 = scmp.eq.s32.totalorder %s34, 0
    %p201 = por %p199, %p200
    %p202 = scmp.ne.s32.totalorder %s194, %s196
    %p203 = scmp.eq.s32.totalorder %s39, 1
    %p204 = por %p202, %p203
    %p205 = scmp.ne.s32.totalorder %s196, %s197
    %p206 = scmp.eq.s32.totalorder %s39, 0
    %p207 = por %p205, %p206
    %p208 = scmp.ne.s32.totalorder %s196, %s197
    %p209 = scmp.eq.s32.totalorder %s40, 1
    %p210 = por %p208, %p209
    %p212 = scmp.ne.s32.totalorder %s197, %s211
    %p213 = scmp.eq.s32.totalorder %s40, 0
    %p214 = por %p212, %p213
    %s216 = sadd.s32 %s215, 1
    %p219 = scmp.eq.s32.totalorder %s34, 1
    %p220 = scmp.ne.s32.totalorder %s215, %s217
    %p221 = scmp.eq.s32.totalorder %s34, 0
    %p222 = por %p220, %p221
    %p223 = scmp.ne.s32.totalorder %s215, %s217
    %p224 = scmp.eq.s32.totalorder %s39, 1
    %p225 = por %p223, %p224
    %p226 = scmp.ne.s32.totalorder %s217, %s218
    %p227 = scmp.eq.s32.totalorder %s39, 0
    %p228 = por %p226, %p227
    %p229 = scmp.ne.s32.totalorder %s217, %s218
    %p230 = scmp.eq.s32.totalorder %s40, 1
    %p231 = por %p229, %p230
    %p233 = scmp.ne.s32.totalorder %s218, %s232
    %p234 = scmp.eq.s32.totalorder %s40, 0
    %p235 = por %p233, %p234
    %s237 = sadd.s32 %s236, 1
    %p240 = scmp.eq.s32.totalorder %s34, 1
    %p241 = scmp.ne.s32.totalorder %s236, %s238
    %p242 = scmp.eq.s32.totalorder %s34, 0
    %p243 = por %p241, %p242
    %p244 = scmp.ne.s32.totalorder %s236, %s238
    %p245 = scmp.eq.s32.totalorder %s39, 1
    %p246 = por %p244, %p245
    %p247 = scmp.ne.s32.totalorder %s238, %s239
    %p248 = scmp.eq.s32.totalorder %s39, 0
    %p249 = por %p247, %p248
    %p250 = scmp.ne.s32.totalorder %s238, %s239
    %p251 = scmp.eq.s32.totalorder %s40, 1
    %p252 = por %p250, %p251
    %p254 = scmp.ne.s32.totalorder %s239, %s253
    %p255 = scmp.eq.s32.totalorder %s40, 0
    %p256 = por %p254, %p255
    %s258 = sadd.s32 %s257, 1
    %p261 = scmp.eq.s32.totalorder %s34, 1
    %p262 = scmp.ne.s32.totalorder %s257, %s259
    %p263 = scmp.eq.s32.totalorder %s34, 0
    %p264 = por %p262, %p263
    %p265 = scmp.ne.s32.totalorder %s257, %s259
    %p266 = scmp.eq.s32.totalorder %s39, 1
    %p267 = por %p265, %p266
    %p268 = scmp.ne.s32.totalorder %s259, %s260
    %p269 = scmp.eq.s32.totalorder %s39, 0
    %p270 = por %p268, %p269
    %p271 = scmp.ne.s32.totalorder %s259, %s260
    %p272 = scmp.eq.s32.totalorder %s40, 1
    %p273 = por %p271, %p272
    %p275 = scmp.ne.s32.totalorder %s260, %s274
    %p276 = scmp.eq.s32.totalorder %s40, 0
    %p277 = por %p275, %p276
    %s279 = sadd.s32 %s278, 1
    %p282 = scmp.eq.s32.totalorder %s34, 1
    %p283 = scmp.ne.s32.totalorder %s278, %s280
    %p284 = scmp.eq.s32.totalorder %s34, 0
    %p285 = por %p283, %p284
    %p286 = scmp.ne.s32.totalorder %s278, %s280
    %p287 = scmp.eq.s32.totalorder %s39, 1
    %p288 = por %p286, %p287
    %p289 = scmp.ne.s32.totalorder %s280, %s281
    %p290 = scmp.eq.s32.totalorder %s39, 0
    %p291 = por %p289, %p290
    %p292 = scmp.ne.s32.totalorder %s280, %s281
    %p293 = scmp.eq.s32.totalorder %s40, 1
    %p294 = por %p292, %p293
    %p296 = scmp.ne.s32.totalorder %s281, %s295
    %p297 = scmp.eq.s32.totalorder %s40, 0
    %p298 = por %p296, %p297
    %s300 = sadd.s32 %s299, 1
    %p303 = scmp.eq.s32.totalorder %s34, 1
    %p304 = scmp.ne.s32.totalorder %s299, %s301
    %p305 = scmp.eq.s32.totalorder %s34, 0
    %p306 = por %p304, %p305
    %p307 = scmp.ne.s32.totalorder %s299, %s301
    %p308 = scmp.eq.s32.totalorder %s39, 1
    %p309 = por %p307, %p308
    %p310 = scmp.ne.s32.totalorder %s301, %s302
    %p311 = scmp.eq.s32.totalorder %s39, 0
    %p312 = por %p310, %p311
    %p313 = scmp.ne.s32.totalorder %s301, %s302
    %p314 = scmp.eq.s32.totalorder %s40, 1
    %p315 = por %p313, %p314
    %p317 = scmp.ne.s32.totalorder %s302, %s316
    %p318 = scmp.eq.s32.totalorder %s40, 0
    %p319 = por %p317, %p318
    %s321 = sadd.s32 %s320, 1
    %p324 = scmp.eq.s32.totalorder %s34, 1
    %p325 = scmp.ne.s32.totalorder %s320, %s322
    %p326 = scmp.eq.s32.totalorder %s34, 0
    %p327 = por %p325, %p326
    %p328 = scmp.ne.s32.totalorder %s320, %s322
    %p329 = scmp.eq.s32.totalorder %s39, 1
    %p330 = por %p328, %p329
    %p331 = scmp.ne.s32.totalorder %s322, %s323
    %p332 = scmp.eq.s32.totalorder %s39, 0
    %p333 = por %p331, %p332
    %p334 = scmp.ne.s32.totalorder %s322, %s323
    %p335 = scmp.eq.s32.totalorder %s40, 1
    %p336 = por %p334, %p335
    %p338 = scmp.ne.s32.totalorder %s323, %s337
    %p339 = scmp.eq.s32.totalorder %s40, 0
    %p340 = por %p338, %p339
    %s342 = sadd.s32 %s341, 1
    %p345 = scmp.eq.s32.totalorder %s34, 1
    %p346 = scmp.ne.s32.totalorder %s341, %s343
    %p347 = scmp.eq.s32.totalorder %s34, 0
    %p348 = por %p346, %p347
    %p349 = scmp.ne.s32.totalorder %s341, %s343
    %p350 = scmp.eq.s32.totalorder %s39, 1
    %p351 = por %p349, %p350
    %p352 = scmp.ne.s32.totalorder %s343, %s344
    %p353 = scmp.eq.s32.totalorder %s39, 0
    %p354 = por %p352, %p353
    %p355 = scmp.ne.s32.totalorder %s343, %s344
    %p356 = scmp.eq.s32.totalorder %s40, 1
    %p357 = por %p355, %p356
    %p359 = scmp.ne.s32.totalorder %s344, %s358
    %p360 = scmp.eq.s32.totalorder %s40, 0
    %p361 = por %p359, %p360
    %s363 = sadd.s32 %s362, 1
    %p366 = scmp.eq.s32.totalorder %s34, 1
    %p367 = scmp.ne.s32.totalorder %s362, %s364
    %p368 = scmp.eq.s32.totalorder %s34, 0
    %p369 = por %p367, %p368
    %p370 = scmp.ne.s32.totalorder %s362, %s364
    %p371 = scmp.eq.s32.totalorder %s39, 1
    %p372 = por %p370, %p371
    %p373 = scmp.ne.s32.totalorder %s364, %s365
    %p374 = scmp.eq.s32.totalorder %s39, 0
    %p375 = por %p373, %p374
    %p376 = scmp.ne.s32.totalorder %s364, %s365
    %p377 = scmp.eq.s32.totalorder %s40, 1
    %p378 = por %p376, %p377
    %p380 = scmp.ne.s32.totalorder %s365, %s379
    %p381 = scmp.eq.s32.totalorder %s40, 0
    %p382 = por %p380, %p381
    %s384 = sadd.s32 %s383, 1
    %p387 = scmp.eq.s32.totalorder %s34, 1
    %p388 = scmp.ne.s32.totalorder %s383, %s385
    %p389 = scmp.eq.s32.totalorder %s34, 0
    %p390 = por %p388, %p389
    %p391 = scmp.ne.s32.totalorder %s383, %s385
    %p392 = scmp.eq.s32.totalorder %s39, 1
    %p393 = por %p391, %p392
    %p394 = scmp.ne.s32.totalorder %s385, %s386
    %p395 = scmp.eq.s32.totalorder %s39, 0
    %p396 = por %p394, %p395
    %p397 = scmp.ne.s32.totalorder %s385, %s386
    %p398 = scmp.eq.s32.totalorder %s40, 1
    %p399 = por %p397, %p398
    %p401 = scmp.ne.s32.totalorder %s386, %s400
    %p402 = scmp.eq.s32.totalorder %s40, 0
    %p403 = por %p401, %p402
    %s405 = sadd.s32 %s404, 1
    %p408 = scmp.eq.s32.totalorder %s34, 1
    %p409 = scmp.ne.s32.totalorder %s404, %s406
    %p410 = scmp.eq.s32.totalorder %s34, 0
    %p411 = por %p409, %p410
    %p412 = scmp.ne.s32.totalorder %s404, %s406
    %p413 = scmp.eq.s32.totalorder %s39, 1
    %p414 = por %p412, %p413
    %p415 = scmp.ne.s32.totalorder %s406, %s407
    %p416 = scmp.eq.s32.totalorder %s39, 0
    %p417 = por %p415, %p416
    %p418 = scmp.ne.s32.totalorder %s406, %s407
    %p419 = scmp.eq.s32.totalorder %s40, 1
    %p420 = por %p418, %p419
    %p422 = scmp.ne.s32.totalorder %s407, %s421
    %p423 = scmp.eq.s32.totalorder %s40, 0
    %p424 = por %p422, %p423
    %s426 = sadd.s32 %s425, 1
    %p429 = scmp.eq.s32.totalorder %s34, 1
    %p430 = scmp.ne.s32.totalorder %s425, %s427
    %p431 = scmp.eq.s32.totalorder %s34, 0
    %p432 = por %p430, %p431
    %p433 = scmp.ne.s32.totalorder %s425, %s427
    %p434 = scmp.eq.s32.totalorder %s39, 1
    %p435 = por %p433, %p434
    %p436 = scmp.ne.s32.totalorder %s427, %s428
    %p437 = scmp.eq.s32.totalorder %s39, 0
    %p438 = por %p436, %p437
    %p439 = scmp.ne.s32.totalorder %s427, %s428
    %p440 = scmp.eq.s32.totalorder %s40, 1
    %p441 = por %p439, %p440
    %p443 = scmp.ne.s32.totalorder %s428, %s442
    %p444 = scmp.eq.s32.totalorder %s40, 0
    %p445 = por %p443, %p444
    %s447 = sadd.s32 %s446, 1
    %p450 = scmp.eq.s32.totalorder %s34, 1
    %p451 = scmp.ne.s32.totalorder %s446, %s448
    %p452 = scmp.eq.s32.totalorder %s34, 0
    %p453 = por %p451, %p452
    %p454 = scmp.ne.s32.totalorder %s446, %s448
    %p455 = scmp.eq.s32.totalorder %s39, 1
    %p456 = por %p454, %p455
    %p457 = scmp.ne.s32.totalorder %s448, %s449
    %p458 = scmp.eq.s32.totalorder %s39, 0
    %p459 = por %p457, %p458
    %p460 = scmp.ne.s32.totalorder %s448, %s449
    %p461 = scmp.eq.s32.totalorder %s40, 1
    %p462 = por %p460, %p461
    %p464 = scmp.ne.s32.totalorder %s449, %s463
    %p465 = scmp.eq.s32.totalorder %s40, 0
    %p466 = por %p464, %p465
    %s468 = sadd.s32 %s467, 1
    %p471 = scmp.eq.s32.totalorder %s34, 1
    %p472 = scmp.ne.s32.totalorder %s467, %s469
    %p473 = scmp.eq.s32.totalorder %s34, 0
    %p474 = por %p472, %p473
    %p475 = scmp.ne.s32.totalorder %s467, %s469
    %p476 = scmp.eq.s32.totalorder %s39, 1
    %p477 = por %p475, %p476
    %p478 = scmp.ne.s32.totalorder %s469, %s470
    %p479 = scmp.eq.s32.totalorder %s39, 0
    %p480 = por %p478, %p479
    %p481 = scmp.ne.s32.totalorder %s469, %s470
    %p482 = scmp.eq.s32.totalorder %s40, 1
    %p483 = por %p481, %p482
    %p485 = scmp.ne.s32.totalorder %s470, %s484
    %p486 = scmp.eq.s32.totalorder %s40, 0
    %p487 = por %p485, %p486
    %s489 = sadd.s32 %s488, 1
    %p492 = scmp.eq.s32.totalorder %s34, 1
    %p493 = scmp.ne.s32.totalorder %s488, %s490
    %p494 = scmp.eq.s32.totalorder %s34, 0
    %p495 = por %p493, %p494
    %p496 = scmp.ne.s32.totalorder %s488, %s490
    %p497 = scmp.eq.s32.totalorder %s39, 1
    %p498 = por %p496, %p497
    %p499 = scmp.ne.s32.totalorder %s490, %s491
    %p500 = scmp.eq.s32.totalorder %s39, 0
    %p501 = por %p499, %p500
    %p502 = scmp.ne.s32.totalorder %s490, %s491
    %p503 = scmp.eq.s32.totalorder %s40, 1
    %p504 = por %p502, %p503
    %p506 = scmp.ne.s32.totalorder %s491, %s505
    %p507 = scmp.eq.s32.totalorder %s40, 0
    %p508 = por %p506, %p507
    %s510 = sadd.s32 %s509, 1
    %p513 = scmp.eq.s32.totalorder %s34, 1
    %p514 = scmp.ne.s32.totalorder %s509, %s511
    %p515 = scmp.eq.s32.totalorder %s34, 0
    %p516 = por %p514, %p515
    %p517 = scmp.ne.s32.totalorder %s509, %s511
    %p518 = scmp.eq.s32.totalorder %s39, 1
    %p519 = por %p517, %p518
    %p520 = scmp.ne.s32.totalorder %s511, %s512
    %p521 = scmp.eq.s32.totalorder %s39, 0
    %p522 = por %p520, %p521
    %p523 = scmp.ne.s32.totalorder %s511, %s512
    %p524 = scmp.eq.s32.totalorder %s40, 1
    %p525 = por %p523, %p524
    %p527 = scmp.ne.s32.totalorder %s512, %s526
    %p528 = scmp.eq.s32.totalorder %s40, 0
    %p529 = por %p527, %p528
    %s531 = sadd.s32 %s530, 1
    %p534 = scmp.eq.s32.totalorder %s34, 1
    %p535 = scmp.ne.s32.totalorder %s530, %s532
    %p536 = scmp.eq.s32.totalorder %s34, 0
    %p537 = por %p535, %p536
    %p538 = scmp.ne.s32.totalorder %s530, %s532
    %p539 = scmp.eq.s32.totalorder %s39, 1
    %p540 = por %p538, %p539
    %p541 = scmp.ne.s32.totalorder %s532, %s533
    %p542 = scmp.eq.s32.totalorder %s39, 0
    %p543 = por %p541, %p542
    %p544 = scmp.ne.s32.totalorder %s532, %s533
    %p545 = scmp.eq.s32.totalorder %s40, 1
    %p546 = por %p544, %p545
    %p548 = scmp.ne.s32.totalorder %s533, %s547
    %p549 = scmp.eq.s32.totalorder %s40, 0
    %p550 = por %p548, %p549
    %s552 = sadd.s32 %s551, 1
    %p555 = scmp.eq.s32.totalorder %s34, 1
    %p556 = scmp.ne.s32.totalorder %s551, %s553
    %p557 = scmp.eq.s32.totalorder %s34, 0
    %p558 = por %p556, %p557
    %p559 = scmp.ne.s32.totalorder %s551, %s553
    %p560 = scmp.eq.s32.totalorder %s39, 1
    %p561 = por %p559, %p560
    %p562 = scmp.ne.s32.totalorder %s553, %s554
    %p563 = scmp.eq.s32.totalorder %s39, 0
    %p564 = por %p562, %p563
    %p565 = scmp.ne.s32.totalorder %s553, %s554
    %p566 = scmp.eq.s32.totalorder %s40, 1
    %p567 = por %p565, %p566
    %p569 = scmp.ne.s32.totalorder %s554, %s568
    %p570 = scmp.eq.s32.totalorder %s40, 0
    %p571 = por %p569, %p570
    %s573 = sadd.s32 %s572, 1
    %p576 = scmp.eq.s32.totalorder %s34, 1
    %p577 = scmp.ne.s32.totalorder %s572, %s574
    %p578 = scmp.eq.s32.totalorder %s34, 0
    %p579 = por %p577, %p578
    %p580 = scmp.ne.s32.totalorder %s572, %s574
    %p581 = scmp.eq.s32.totalorder %s39, 1
    %p582 = por %p580, %p581
    %p583 = scmp.ne.s32.totalorder %s574, %s575
    %p584 = scmp.eq.s32.totalorder %s39, 0
    %p585 = por %p583, %p584
    %p586 = scmp.ne.s32.totalorder %s574, %s575
    %p587 = scmp.eq.s32.totalorder %s40, 1
    %p588 = por %p586, %p587
    %p590 = scmp.ne.s32.totalorder %s575, %s589
    %p591 = scmp.eq.s32.totalorder %s40, 0
    %p592 = por %p590, %p591
    %s594 = sadd.s32 %s593, 1
    %p597 = scmp.eq.s32.totalorder %s34, 1
    %p598 = scmp.ne.s32.totalorder %s593, %s595
    %p599 = scmp.eq.s32.totalorder %s34, 0
    %p600 = por %p598, %p599
    %p601 = scmp.ne.s32.totalorder %s593, %s595
    %p602 = scmp.eq.s32.totalorder %s39, 1
    %p603 = por %p601, %p602
    %p604 = scmp.ne.s32.totalorder %s595, %s596
    %p605 = scmp.eq.s32.totalorder %s39, 0
    %p606 = por %p604, %p605
    %p607 = scmp.ne.s32.totalorder %s595, %s596
    %p608 = scmp.eq.s32.totalorder %s40, 1
    %p609 = por %p607, %p608
    %p611 = scmp.ne.s32.totalorder %s596, %s610
    %p612 = scmp.eq.s32.totalorder %s40, 0
    %p613 = por %p611, %p612
    %s615 = sadd.s32 %s614, 1
    %p618 = scmp.eq.s32.totalorder %s34, 1
    %p619 = scmp.ne.s32.totalorder %s614, %s616
    %p620 = scmp.eq.s32.totalorder %s34, 0
    %p621 = por %p619, %p620
    %p622 = scmp.ne.s32.totalorder %s614, %s616
    %p623 = scmp.eq.s32.totalorder %s39, 1
    %p624 = por %p622, %p623
    %p625 = scmp.ne.s32.totalorder %s616, %s617
    %p626 = scmp.eq.s32.totalorder %s39, 0
    %p627 = por %p625, %p626
    %p628 = scmp.ne.s32.totalorder %s616, %s617
    %p629 = scmp.eq.s32.totalorder %s40, 1
    %p630 = por %p628, %p629
    %p632 = scmp.ne.s32.totalorder %s617, %s631
    %p633 = scmp.eq.s32.totalorder %s40, 0
    %p634 = por %p632, %p633
    %s635 = ssub.s32 %s34, %s41
    %p636 = scmp.eq.s32.totalorder %s635, 0
    %s638 = sadd.s32 %s637, 1
    %s639 = scalar_select %p636, %s637, %s638
    %p642 = pneg %p636
    %p643 = scmp.eq.s32.totalorder %s34, 1
    %p644 = por %p642, %p643
    %p645 = scmp.ne.s32.totalorder %s637, %s640
    %p646 = scmp.eq.s32.totalorder %s34, 0
    %p647 = por %p645, %p646
    %p648 = scmp.ne.s32.totalorder %s637, %s640
    %p649 = scmp.eq.s32.totalorder %s39, 1
    %p650 = por %p648, %p649
    %p651 = scmp.ne.s32.totalorder %s640, %s641
    %p652 = scmp.eq.s32.totalorder %s39, 0
    %p653 = por %p651, %p652
    %p654 = scmp.ne.s32.totalorder %s640, %s641
    %p655 = scmp.eq.s32.totalorder %s40, 1
    %p656 = por %p654, %p655
    %p658 = scmp.ne.s32.totalorder %s641, %s657
    %p659 = scmp.eq.s32.totalorder %s40, 0
    %p660 = por %p658, %p659
    %p661 = scmp.le.s32.totalorder 1, %s34
    %p662 = scmp.lt.s32.totalorder %s34, 3
    %p663 = pnand %p661, %p662
    %p664 = pneg %p663
    // Predicated region
    $region9: #{_lambda_.1} parent=5 // pred_check
      _
    $region10: #{_lambda_.1} parent=5 // pred_check_branch
      %666 = sbr.rel (%p663) target = $region12
    $region11: #{_lambda_.1} parent=5 // pred_region
      %s667 = ssub.s32 %s34, 1
      // Predicated region
      $region13: #{_lambda_.1} parent=11 // pred_check
        %p668 = pneg %p81
      $region14: #{_lambda_.1} parent=11 // pred_check_branch
        %670 = sbr.rel (%p668) target = $region16
      $region15: #{_lambda_.1} parent=11 // pred_region
        _
      $region16: #{_lambda_.1} parent=11 // pred_fallthru
        _
      // Predicated region
      $region17: #{_lambda_.1} parent=11 // pred_check
        %p671 = pneg %p102
      $region18: #{_lambda_.1} parent=11 // pred_check_branch
        %673 = sbr.rel (%p671) target = $region20
      $region19: #{_lambda_.1} parent=11 // pred_region
        _
      $region20: #{_lambda_.1} parent=11 // pred_fallthru
        _
      // Predicated region
      $region21: #{_lambda_.1} parent=11 // pred_check
        %p674 = pneg %p123
      $region22: #{_lambda_.1} parent=11 // pred_check_branch
        %676 = sbr.rel (%p674) target = $region24
      $region23: #{_lambda_.1} parent=11 // pred_region
        _
      $region24: #{_lambda_.1} parent=11 // pred_fallthru
        _
      // Predicated region
      $region25: #{_lambda_.1} parent=11 // pred_check
        %p677 = pneg %p144
      $region26: #{_lambda_.1} parent=11 // pred_check_branch
        %679 = sbr.rel (%p677) target = $region28
      $region27: #{_lambda_.1} parent=11 // pred_region
        _
      $region28: #{_lambda_.1} parent=11 // pred_fallthru
        _
      // Predicated region
      $region29: #{_lambda_.1} parent=11 // pred_check
        %p680 = pneg %p165
      $region30: #{_lambda_.1} parent=11 // pred_check_branch
        %682 = sbr.rel (%p680) target = $region32
      $region31: #{_lambda_.1} parent=11 // pred_region
        _
      $region32: #{_lambda_.1} parent=11 // pred_fallthru
        _
      // Predicated region
      $region33: #{_lambda_.1} parent=11 // pred_check
        %p683 = pneg %p186
      $region34: #{_lambda_.1} parent=11 // pred_check_branch
        %685 = sbr.rel (%p683) target = $region36
      $region35: #{_lambda_.1} parent=11 // pred_region
        _
      $region36: #{_lambda_.1} parent=11 // pred_fallthru
        _
      // Predicated region
      $region37: #{_lambda_.1} parent=11 // pred_check
        %p686 = pneg %p207
      $region38: #{_lambda_.1} parent=11 // pred_check_branch
        %688 = sbr.rel (%p686) target = $region40
      $region39: #{_lambda_.1} parent=11 // pred_region
        _
      $region40: #{_lambda_.1} parent=11 // pred_fallthru
        _
      // Predicated region
      $region41: #{_lambda_.1} parent=11 // pred_check
        %p689 = pneg %p228
      $region42: #{_lambda_.1} parent=11 // pred_check_branch
        %691 = sbr.rel (%p689) target = $region44
      $region43: #{_lambda_.1} parent=11 // pred_region
        _
      $region44: #{_lambda_.1} parent=11 // pred_fallthru
        _
      // Predicated region
      $region45: #{_lambda_.1} parent=11 // pred_check
        %p692 = pneg %p249
      $region46: #{_lambda_.1} parent=11 // pred_check_branch
        %694 = sbr.rel (%p692) target = $region48
      $region47: #{_lambda_.1} parent=11 // pred_region
        _
      $region48: #{_lambda_.1} parent=11 // pred_fallthru
        _
      // Predicated region
      $region49: #{_lambda_.1} parent=11 // pred_check
        %p695 = pneg %p270
      $region50: #{_lambda_.1} parent=11 // pred_check_branch
        %697 = sbr.rel (%p695) target = $region52
      $region51: #{_lambda_.1} parent=11 // pred_region
        _
      $region52: #{_lambda_.1} parent=11 // pred_fallthru
        _
      // Predicated region
      $region53: #{_lambda_.1} parent=11 // pred_check
        %p698 = pneg %p291
      $region54: #{_lambda_.1} parent=11 // pred_check_branch
        %700 = sbr.rel (%p698) target = $region56
      $region55: #{_lambda_.1} parent=11 // pred_region
        _
      $region56: #{_lambda_.1} parent=11 // pred_fallthru
        _
      // Predicated region
      $region57: #{_lambda_.1} parent=11 // pred_check
        %p701 = pneg %p312
      $region58: #{_lambda_.1} parent=11 // pred_check_branch
        %703 = sbr.rel (%p701) target = $region60
      $region59: #{_lambda_.1} parent=11 // pred_region
        _
      $region60: #{_lambda_.1} parent=11 // pred_fallthru
        _
      // Predicated region
      $region61: #{_lambda_.1} parent=11 // pred_check
        %p704 = pneg %p333
      $region62: #{_lambda_.1} parent=11 // pred_check_branch
        %706 = sbr.rel (%p704) target = $region64
      $region63: #{_lambda_.1} parent=11 // pred_region
        _
      $region64: #{_lambda_.1} parent=11 // pred_fallthru
        _
      // Predicated region
      $region65: #{_lambda_.1} parent=11 // pred_check
        %p707 = pneg %p354
      $region66: #{_lambda_.1} parent=11 // pred_check_branch
        %709 = sbr.rel (%p707) target = $region68
      $region67: #{_lambda_.1} parent=11 // pred_region
        _
      $region68: #{_lambda_.1} parent=11 // pred_fallthru
        _
      // Predicated region
      $region69: #{_lambda_.1} parent=11 // pred_check
        %p710 = pneg %p375
      $region70: #{_lambda_.1} parent=11 // pred_check_branch
        %712 = sbr.rel (%p710) target = $region72
      $region71: #{_lambda_.1} parent=11 // pred_region
        _
      $region72: #{_lambda_.1} parent=11 // pred_fallthru
        _
      // Predicated region
      $region73: #{_lambda_.1} parent=11 // pred_check
        %p713 = pneg %p396
      $region74: #{_lambda_.1} parent=11 // pred_check_branch
        %715 = sbr.rel (%p713) target = $region76
      $region75: #{_lambda_.1} parent=11 // pred_region
        _
      $region76: #{_lambda_.1} parent=11 // pred_fallthru
        _
      // Predicated region
      $region77: #{_lambda_.1} parent=11 // pred_check
        %p716 = pneg %p417
      $region78: #{_lambda_.1} parent=11 // pred_check_branch
        %718 = sbr.rel (%p716) target = $region80
      $region79: #{_lambda_.1} parent=11 // pred_region
        _
      $region80: #{_lambda_.1} parent=11 // pred_fallthru
        _
      // Predicated region
      $region81: #{_lambda_.1} parent=11 // pred_check
        %p719 = pneg %p438
      $region82: #{_lambda_.1} parent=11 // pred_check_branch
        %721 = sbr.rel (%p719) target = $region84
      $region83: #{_lambda_.1} parent=11 // pred_region
        _
      $region84: #{_lambda_.1} parent=11 // pred_fallthru
        _
      // Predicated region
      $region85: #{_lambda_.1} parent=11 // pred_check
        %p722 = pneg %p459
      $region86: #{_lambda_.1} parent=11 // pred_check_branch
        %724 = sbr.rel (%p722) target = $region88
      $region87: #{_lambda_.1} parent=11 // pred_region
        _
      $region88: #{_lambda_.1} parent=11 // pred_fallthru
        _
      // Predicated region
      $region89: #{_lambda_.1} parent=11 // pred_check
        %p725 = pneg %p480
      $region90: #{_lambda_.1} parent=11 // pred_check_branch
        %727 = sbr.rel (%p725) target = $region92
      $region91: #{_lambda_.1} parent=11 // pred_region
        _
      $region92: #{_lambda_.1} parent=11 // pred_fallthru
        _
      // Predicated region
      $region93: #{_lambda_.1} parent=11 // pred_check
        %p728 = pneg %p501
      $region94: #{_lambda_.1} parent=11 // pred_check_branch
        %730 = sbr.rel (%p728) target = $region96
      $region95: #{_lambda_.1} parent=11 // pred_region
        _
      $region96: #{_lambda_.1} parent=11 // pred_fallthru
        _
      // Predicated region
      $region97: #{_lambda_.1} parent=11 // pred_check
        %p731 = pneg %p522
      $region98: #{_lambda_.1} parent=11 // pred_check_branch
        %733 = sbr.rel (%p731) target = $region100
      $region99: #{_lambda_.1} parent=11 // pred_region
        _
      $region100: #{_lambda_.1} parent=11 // pred_fallthru
        _
      // Predicated region
      $region101: #{_lambda_.1} parent=11 // pred_check
        %p734 = pneg %p543
      $region102: #{_lambda_.1} parent=11 // pred_check_branch
        %736 = sbr.rel (%p734) target = $region104
      $region103: #{_lambda_.1} parent=11 // pred_region
        _
      $region104: #{_lambda_.1} parent=11 // pred_fallthru
        _
      // Predicated region
      $region105: #{_lambda_.1} parent=11 // pred_check
        %p737 = pneg %p564
      $region106: #{_lambda_.1} parent=11 // pred_check_branch
        %739 = sbr.rel (%p737) target = $region108
      $region107: #{_lambda_.1} parent=11 // pred_region
        _
      $region108: #{_lambda_.1} parent=11 // pred_fallthru
        _
      // Predicated region
      $region109: #{_lambda_.1} parent=11 // pred_check
        %p740 = pneg %p585
      $region110: #{_lambda_.1} parent=11 // pred_check_branch
        %742 = sbr.rel (%p740) target = $region112
      $region111: #{_lambda_.1} parent=11 // pred_region
        _
      $region112: #{_lambda_.1} parent=11 // pred_fallthru
        _
      // Predicated region
      $region113: #{_lambda_.1} parent=11 // pred_check
        %p743 = pneg %p606
      $region114: #{_lambda_.1} parent=11 // pred_check_branch
        %745 = sbr.rel (%p743) target = $region116
      $region115: #{_lambda_.1} parent=11 // pred_region
        _
      $region116: #{_lambda_.1} parent=11 // pred_fallthru
        _
      // Predicated region
      $region117: #{_lambda_.1} parent=11 // pred_check
        %p746 = pneg %p627
      $region118: #{_lambda_.1} parent=11 // pred_check_branch
        %748 = sbr.rel (%p746) target = $region120
      $region119: #{_lambda_.1} parent=11 // pred_region
        _
      $region120: #{_lambda_.1} parent=11 // pred_fallthru
        _
    $region12: #{_lambda_.1} parent=5 // pred_fallthru
      _
    %p749 = scmp.lt.s32.totalorder %s34, 2
    // Predicated region
    $region121: #{_lambda_.1} parent=5 // pred_check
      %p750 = pneg %p749
    $region122: #{_lambda_.1} parent=5 // pred_check_branch
      %752 = sbr.rel (%p750) target = $region124
    $region123: #{_lambda_.1} parent=5 // pred_region
      // Predicated region
      $region125: #{_lambda_.1} parent=123 // pred_check
        %p753 = pneg %p54
      $region126: #{_lambda_.1} parent=123 // pred_check_branch
        %755 = sbr.rel (%p753) target = $region128
      $region127: #{_lambda_.1} parent=123 // pred_region
        %p756 = scmp.lt.s32.totalorder %s34, 1
        %s757 = scalar_select %p756, %s34, 1
        %s758 = smul.addr %s757, 14
        %s759 = smul.addr %s758, 8
        %s760 = scalar_lea.vmem %s0, %s759
      $region128: #{_lambda_.1} parent=123 // pred_fallthru
        _
    $region124: #{_lambda_.1} parent=5 // pred_fallthru
      _
    %p761 = scmp.le.s32.totalorder 1, %s34
    %p762 = scmp.lt.s32.totalorder %s34, 3
    %p763 = pnand %p761, %p762
    %p764 = pneg %p763
    // Predicated region
    $region129: #{_lambda_.1} parent=5 // pred_check
      _
    $region130: #{_lambda_.1} parent=5 // pred_check_branch
      %766 = sbr.rel (%p763) target = $region132
    $region131: #{_lambda_.1} parent=5 // pred_region
      %s767 = ssub.s32 %s34, 1
      %p768 = scmp.lt.s32.totalorder %s39, 1
      %s769 = scalar_select %p768, %s39, 1
      %s770 = smul.addr %s769, 14
      %s771 = smul.addr %s770, 8
      %s772 = scalar_lea.vmem %s0, %s771
      %p773 = pneg %p60
      %p774 = pneg %p57
      %p775 = pneg %p81
      %p776 = pneg %p78
      %p777 = pneg %p102
      %p778 = pneg %p99
      %p779 = pneg %p123
      %p780 = pneg %p120
      %p781 = pneg %p144
      %p782 = pneg %p141
      %p783 = pneg %p165
      %p784 = pneg %p162
      %p785 = pneg %p186
      %p786 = pneg %p183
      %p787 = pneg %p207
      %p788 = pneg %p204
      %p789 = pneg %p228
      %p790 = pneg %p225
      %p791 = pneg %p249
      %p792 = pneg %p246
      %p793 = pneg %p270
      %p794 = pneg %p267
      %p795 = pneg %p291
      %p796 = pneg %p288
      %p797 = pneg %p312
      %p798 = pneg %p309
      %p799 = pneg %p333
      %p800 = pneg %p330
      %p801 = pneg %p354
      %p802 = pneg %p351
      %p803 = pneg %p375
      %p804 = pneg %p372
      %p805 = pneg %p396
      %p806 = pneg %p393
      %p807 = pneg %p417
      %p808 = pneg %p414
      %p809 = pneg %p438
      %p810 = pneg %p435
      %p811 = pneg %p459
      %p812 = pneg %p456
      %p813 = pneg %p480
      %p814 = pneg %p477
      %p815 = pneg %p501
      %p816 = pneg %p498
      %p817 = pneg %p522
      %p818 = pneg %p519
      %p819 = pneg %p543
      %p820 = pneg %p540
      %p821 = pneg %p564
      %p822 = pneg %p561
      %p823 = pneg %p585
      %p824 = pneg %p582
      %p825 = pneg %p606
      %p826 = pneg %p603
      %p827 = pneg %p627
      %p828 = pneg %p624
      %p829 = pneg %p653
      %p830 = pneg %p650
      %p831 = scmp.lt.s32.totalorder %s39, 1
      %s832 = scalar_select %p831, %s39, 1
      %s833 = smul.addr %s832, 8
      %s834 = scalar_lea.vmem %s28, %s833
      %p835 = scmp.lt.s32.totalorder %s39, 1
      %s836 = scalar_select %p835, %s39, 1
      %s837 = smul.addr %s836, 14
      %s838 = smul.addr %s837, 8
      %s839 = scalar_lea.vmem %s0, %s838
      %p840 = scmp.lt.s32.totalorder %s39, 1
      %s841 = scalar_select %p840, %s39, 1
      %s842 = smul.addr %s841, 8
      %s843 = scalar_lea.vmem %s28, %s842
      %v844 = vld [vmem:[%s839] sm:$0xff]
      %v845 = vld [vmem:[%s839 + $0x8] sm:$0xff]
      %v846 = vld [vmem:[%s839 + $0x10] sm:$0xff]
      %v847 = vld [vmem:[%s839 + $0x18] sm:$0xff]
      %v848 = vld [vmem:[%s839 + $0x20] sm:$0xff]
      %v849 = vld [vmem:[%s839 + $0x28] sm:$0xff]
      %v850 = vld [vmem:[%s839 + $0x30] sm:$0xff]
      %v851 = vld [vmem:[%s839 + $0x38] sm:$0xff]
      %v852 = vld [vmem:[%s839 + $0x40] sm:$0xff]
      %v853 = vld [vmem:[%s839 + $0x48] sm:$0xff]
      %v854 = vld [vmem:[%s839 + $0x50] sm:$0xff]
      %v855 = vld [vmem:[%s839 + $0x58] sm:$0xff]
      %v856 = vld [vmem:[%s839 + $0x60] sm:$0xff]
      %v857 = vld [vmem:[%s839 + $0x68] sm:$0xff]
      %v858 = vld [vmem:[%s2] sm:$0xff]
      %v859 = vmul.f32 %v858, %v844
      %v860 = vld [vmem:[%s4] sm:$0xff]
      %v861 = vld [vmem:[%s4 + $0x8] sm:$0xff]
      %s862 = scalar_lea.vmem %s4, 16
      %v863 = vld [vmem:[%s862] sm:$0xff]
      %v864 = vld [vmem:[%s862 + $0x8] sm:$0xff]
      %vm865 = vcmask 64512
      %v867 = vsel %vm865, %v863, 0
      %v870 = vsel %vm865, %v864, 0
      %872 = vmatpush.msra.mxu0 0.0
      %873 = vmatpush.msra.mxu0 0.0
      %874 = vmatpush.msra.mxu0 0.0
      %875 = vmatpush.msra.mxu0 0.0
      %876 = vmatpush.msra.mxu0 0.0
      %877 = vmatpush.msra.mxu0 0.0
      %878 = vmatpush.msra.mxu0 0.0
      %879 = vmatpush.msra.mxu0 0.0
      %880 = vmatpush.msra.mxu0 0.0
      %881 = vmatpush.msra.mxu0 0.0
      %882 = vmatpush.msra.mxu0 0.0
      %883 = vmatpush.msra.mxu0 0.0
      %884 = vmatpush.msra.mxu0 0.0
      %885 = vmatpush.msra.mxu0 0.0
      %886 = vmatpush.msra.mxu0 0.0
      %887 = vmatpush.msra.mxu0 %v846
      %888 = vmatmul.f32.gmra.mxu0 %v867
      %v889 = vpop.f32.mrf.mxu0
      %v890 = vadd.f32 0.0, %v889
      %891 = vmatmul.f32.gmra.mxu0 %v870
      %v892 = vpop.f32.mrf.mxu0
      %v893 = vadd.f32 0.0, %v892
      %894 = vdwg.mxu0
      %895 = vmatpush.msra.mxu0 0.0
      %896 = vmatpush.msra.mxu0 0.0
      %897 = vmatpush.msra.mxu0 0.0
      %898 = vmatpush.msra.mxu0 0.0
      %899 = vmatpush.msra.mxu0 0.0
      %900 = vmatpush.msra.mxu0 0.0
      %901 = vmatpush.msra.mxu0 0.0
      %902 = vmatpush.msra.mxu0 0.0
      %903 = vmatpush.msra.mxu0 0.0
      %904 = vmatpush.msra.mxu0 0.0
      %905 = vmatpush.msra.mxu0 0.0
      %906 = vmatpush.msra.mxu0 0.0
      %907 = vmatpush.msra.mxu0 0.0
      %908 = vmatpush.msra.mxu0 0.0
      %909 = vmatpush.msra.mxu0 0.0
      %910 = vmatpush.msra.mxu0 %v847
      %911 = vmatmul.f32.gmra.mxu0 %v867
      %v912 = vpop.f32.mrf.mxu0
      %v913 = vadd.f32 0.0, %v912
      %914 = vmatmul.f32.gmra.mxu0 %v870
      %v915 = vpop.f32.mrf.mxu0
      %v916 = vadd.f32 0.0, %v915
      %917 = vdwg.mxu0
      %918 = vmatpush.msra.mxu0 0.0
      %919 = vmatpush.msra.mxu0 0.0
      %920 = vmatpush.msra.mxu0 0.0
      %921 = vmatpush.msra.mxu0 0.0
      %922 = vmatpush.msra.mxu0 0.0
      %923 = vmatpush.msra.mxu0 0.0
      %924 = vmatpush.msra.mxu0 0.0
      %925 = vmatpush.msra.mxu0 0.0
      %926 = vmatpush.msra.mxu0 0.0
      %927 = vmatpush.msra.mxu0 0.0
      %928 = vmatpush.msra.mxu0 0.0
      %929 = vmatpush.msra.mxu0 0.0
      %930 = vmatpush.msra.mxu0 0.0
      %931 = vmatpush.msra.mxu0 0.0
      %932 = vmatpush.msra.mxu0 0.0
      %933 = vmatpush.msra.mxu0 %v848
      %934 = vmatmul.f32.gmra.mxu0 %v867
      %v935 = vpop.f32.mrf.mxu0
      %v936 = vadd.f32 0.0, %v935
      %937 = vmatmul.f32.gmra.mxu0 %v870
      %v938 = vpop.f32.mrf.mxu0
      %v939 = vadd.f32 0.0, %v938
      %940 = vdwg.mxu0
      %941 = vmatpush.msra.mxu0 0.0
      %942 = vmatpush.msra.mxu0 0.0
      %943 = vmatpush.msra.mxu0 0.0
      %944 = vmatpush.msra.mxu0 0.0
      %945 = vmatpush.msra.mxu0 0.0
      %946 = vmatpush.msra.mxu0 0.0
      %947 = vmatpush.msra.mxu0 0.0
      %948 = vmatpush.msra.mxu0 0.0
      %949 = vmatpush.msra.mxu0 0.0
      %950 = vmatpush.msra.mxu0 0.0
      %951 = vmatpush.msra.mxu0 0.0
      %952 = vmatpush.msra.mxu0 0.0
      %953 = vmatpush.msra.mxu0 0.0
      %954 = vmatpush.msra.mxu0 0.0
      %955 = vmatpush.msra.mxu0 0.0
      %956 = vmatpush.msra.mxu0 %v849
      %957 = vmatmul.f32.gmra.mxu0 %v867
      %v958 = vpop.f32.mrf.mxu0
      %v959 = vadd.f32 0.0, %v958
      %960 = vmatmul.f32.gmra.mxu0 %v870
      %v961 = vpop.f32.mrf.mxu0
      %v962 = vadd.f32 0.0, %v961
      %963 = vdwg.mxu0
      %964 = vmatpush.msra.mxu0 0.0
      %965 = vmatpush.msra.mxu0 0.0
      %966 = vmatpush.msra.mxu0 0.0
      %967 = vmatpush.msra.mxu0 0.0
      %968 = vmatpush.msra.mxu0 0.0
      %969 = vmatpush.msra.mxu0 0.0
      %970 = vmatpush.msra.mxu0 0.0
      %971 = vmatpush.msra.mxu0 0.0
      %972 = vmatpush.msra.mxu0 0.0
      %973 = vmatpush.msra.mxu0 0.0
      %974 = vmatpush.msra.mxu0 0.0
      %975 = vmatpush.msra.mxu0 0.0
      %976 = vmatpush.msra.mxu0 0.0
      %977 = vmatpush.msra.mxu0 0.0
      %978 = vmatpush.msra.mxu0 0.0
      %979 = vmatpush.msra.mxu0 %v850
      %980 = vmatmul.f32.gmra.mxu0 %v867
      %v981 = vpop.f32.mrf.mxu0
      %v982 = vadd.f32 0.0, %v981
      %983 = vmatmul.f32.gmra.mxu0 %v870
      %v984 = vpop.f32.mrf.mxu0
      %v985 = vadd.f32 0.0, %v984
      %986 = vdwg.mxu0
      %v988 = vsel %vm865, %v860, 0
      %v991 = vsel %vm865, %v861, 0
      %993 = vmatpush.msra.mxu0 0.0
      %994 = vmatpush.msra.mxu0 0.0
      %995 = vmatpush.msra.mxu0 0.0
      %996 = vmatpush.msra.mxu0 0.0
      %997 = vmatpush.msra.mxu0 0.0
      %998 = vmatpush.msra.mxu0 0.0
      %999 = vmatpush.msra.mxu0 0.0
      %1000 = vmatpush.msra.mxu0 0.0
      %1001 = vmatpush.msra.mxu0 0.0
      %1002 = vmatpush.msra.mxu0 0.0
      %1003 = vmatpush.msra.mxu0 0.0
      %1004 = vmatpush.msra.mxu0 0.0
      %1005 = vmatpush.msra.mxu0 0.0
      %1006 = vmatpush.msra.mxu0 0.0
      %1007 = vmatpush.msra.mxu0 0.0
      %1008 = vmatpush.msra.mxu0 %v845
      %1009 = vmatmul.f32.gmra.mxu0 %v988
      %v1010 = vpop.f32.mrf.mxu0
      %v1011 = vadd.f32 %v890, %v1010
      %1012 = vmatmul.f32.gmra.mxu0 %v991
      %v1013 = vpop.f32.mrf.mxu0
      %v1014 = vadd.f32 %v893, %v1013
      %1015 = vdwg.mxu0
      %1016 = vmatpush.msra.mxu0 0.0
      %1017 = vmatpush.msra.mxu0 0.0
      %1018 = vmatpush.msra.mxu0 0.0
      %1019 = vmatpush.msra.mxu0 0.0
      %1020 = vmatpush.msra.mxu0 0.0
      %1021 = vmatpush.msra.mxu0 0.0
      %1022 = vmatpush.msra.mxu0 0.0
      %1023 = vmatpush.msra.mxu0 0.0
      %1024 = vmatpush.msra.mxu0 0.0
      %1025 = vmatpush.msra.mxu0 0.0
      %1026 = vmatpush.msra.mxu0 0.0
      %1027 = vmatpush.msra.mxu0 0.0
      %1028 = vmatpush.msra.mxu0 0.0
      %1029 = vmatpush.msra.mxu0 0.0
      %1030 = vmatpush.msra.mxu0 0.0
      %1031 = vmatpush.msra.mxu0 %v846
      %1032 = vmatmul.f32.gmra.mxu0 %v988
      %v1033 = vpop.f32.mrf.mxu0
      %v1034 = vadd.f32 %v913, %v1033
      %1035 = vmatmul.f32.gmra.mxu0 %v991
      %v1036 = vpop.f32.mrf.mxu0
      %v1037 = vadd.f32 %v916, %v1036
      %1038 = vdwg.mxu0
      %1039 = vmatpush.msra.mxu0 0.0
      %1040 = vmatpush.msra.mxu0 0.0
      %1041 = vmatpush.msra.mxu0 0.0
      %1042 = vmatpush.msra.mxu0 0.0
      %1043 = vmatpush.msra.mxu0 0.0
      %1044 = vmatpush.msra.mxu0 0.0
      %1045 = vmatpush.msra.mxu0 0.0
      %1046 = vmatpush.msra.mxu0 0.0
      %1047 = vmatpush.msra.mxu0 0.0
      %1048 = vmatpush.msra.mxu0 0.0
      %1049 = vmatpush.msra.mxu0 0.0
      %1050 = vmatpush.msra.mxu0 0.0
      %1051 = vmatpush.msra.mxu0 0.0
      %1052 = vmatpush.msra.mxu0 0.0
      %1053 = vmatpush.msra.mxu0 0.0
      %1054 = vmatpush.msra.mxu0 %v847
      %1055 = vmatmul.f32.gmra.mxu0 %v988
      %v1056 = vpop.f32.mrf.mxu0
      %v1057 = vadd.f32 %v936, %v1056
      %1058 = vmatmul.f32.gmra.mxu0 %v991
      %v1059 = vpop.f32.mrf.mxu0
      %v1060 = vadd.f32 %v939, %v1059
      %1061 = vdwg.mxu0
      %1062 = vmatpush.msra.mxu0 0.0
      %1063 = vmatpush.msra.mxu0 0.0
      %1064 = vmatpush.msra.mxu0 0.0
      %1065 = vmatpush.msra.mxu0 0.0
      %1066 = vmatpush.msra.mxu0 0.0
      %1067 = vmatpush.msra.mxu0 0.0
      %1068 = vmatpush.msra.mxu0 0.0
      %1069 = vmatpush.msra.mxu0 0.0
      %1070 = vmatpush.msra.mxu0 0.0
      %1071 = vmatpush.msra.mxu0 0.0
      %1072 = vmatpush.msra.mxu0 0.0
      %1073 = vmatpush.msra.mxu0 0.0
      %1074 = vmatpush.msra.mxu0 0.0
      %1075 = vmatpush.msra.mxu0 0.0
      %1076 = vmatpush.msra.mxu0 0.0
      %1077 = vmatpush.msra.mxu0 %v848
      %1078 = vmatmul.f32.gmra.mxu0 %v988
      %v1079 = vpop.f32.mrf.mxu0
      %v1080 = vadd.f32 %v959, %v1079
      %1081 = vmatmul.f32.gmra.mxu0 %v991
      %v1082 = vpop.f32.mrf.mxu0
      %v1083 = vadd.f32 %v962, %v1082
      %1084 = vdwg.mxu0
      %1085 = vmatpush.msra.mxu0 0.0
      %1086 = vmatpush.msra.mxu0 0.0
      %1087 = vmatpush.msra.mxu0 0.0
      %1088 = vmatpush.msra.mxu0 0.0
      %1089 = vmatpush.msra.mxu0 0.0
      %1090 = vmatpush.msra.mxu0 0.0
      %1091 = vmatpush.msra.mxu0 0.0
      %1092 = vmatpush.msra.mxu0 0.0
      %1093 = vmatpush.msra.mxu0 0.0
      %1094 = vmatpush.msra.mxu0 0.0
      %1095 = vmatpush.msra.mxu0 0.0
      %1096 = vmatpush.msra.mxu0 0.0
      %1097 = vmatpush.msra.mxu0 0.0
      %1098 = vmatpush.msra.mxu0 0.0
      %1099 = vmatpush.msra.mxu0 0.0
      %1100 = vmatpush.msra.mxu0 %v849
      %1101 = vmatmul.f32.gmra.mxu0 %v988
      %v1102 = vpop.f32.mrf.mxu0
      %v1103 = vadd.f32 %v982, %v1102
      %1104 = vmatmul.f32.gmra.mxu0 %v991
      %v1105 = vpop.f32.mrf.mxu0
      %v1106 = vadd.f32 %v985, %v1105
      %1107 = vdwg.mxu0
      %v1108 = vld [vmem:[%s5] sm:$0xff]
      %v1109 = vld [vmem:[%s5 + $0x8] sm:$0xff]
      %1111 = vset.pattern.permute.xlu0 0
      %1112 = vperm.xlu0 %1111, %v1108
      %v1113 = vpop.permute.xlu0 %1112
      %1116 = vset.pattern.permute.xlu0 0
      %1117 = vperm.xlu0 %1116, %v1109
      %v1118 = vpop.permute.xlu0 %1117
      %v1120 = vadd.f32 %v1011, %v1113
      %v1121 = vadd.f32 %v1034, %v1113
      %v1122 = vadd.f32 %v1057, %v1113
      %v1123 = vadd.f32 %v1080, %v1113
      %v1124 = vadd.f32 %v1103, %v1113
      %v1125 = vadd.f32 %v1014, %v1118
      %v1126 = vadd.f32 %v1037, %v1118
      %v1127 = vadd.f32 %v1060, %v1118
      %v1128 = vadd.f32 %v1083, %v1118
      %v1129 = vadd.f32 %v1106, %v1118
      %v1130 = vxor.u32 %v1125, 2147483648
      %v1131 = vxor.u32 %v1126, 2147483648
      %v1132 = vxor.u32 %v1127, 2147483648
      %v1133 = vxor.u32 %v1128, 2147483648
      %v1134 = vxor.u32 %v1129, 2147483648
      %v1135 = vmul.f32 %v1130, 1.442695
      %v1136 = vpow.pop %v1135
      %v1137 = vmul.f32 %v1131, 1.442695
      %v1138 = vpow.pop %v1137
      %v1139 = vmul.f32 %v1132, 1.442695
      %v1140 = vpow.pop %v1139
      %v1141 = vmul.f32 %v1133, 1.442695
      %v1142 = vpow.pop %v1141
      %v1143 = vmul.f32 %v1134, 1.442695
      %v1144 = vpow.pop %v1143
      %v1145 = vadd.f32 %v1136, 1.0
      %v1146 = vadd.f32 %v1138, 1.0
      %v1147 = vadd.f32 %v1140, 1.0
      %v1148 = vadd.f32 %v1142, 1.0
      %v1149 = vadd.f32 %v1144, 1.0
      %v1150 = vrcp.pop %v1145
      %v1151 = vmul.f32 %v1145, %v1150
      %v1152 = vsub.f32 1.0, %v1151
      %v1153 = vmul.f32 %v1150, %v1152
      %v1154 = vadd.f32 %v1150, %v1153
      %vm1155 = vweird.f32 %v1145
      %vm1156 = vweird.f32 %v1150
      %vm1157 = vmor %vm1155, %vm1156
      %v1158 = vsel %vm1157, %v1150, %v1154
      %v1159 = vand.u32 2147483647, %v1145
      %vm1160 = vcmp.eq.f32.partialorder %v1159, 8.507059e+37
      %v1161 = vand.u32 %v1145, 2147483648
      %v1162 = vor.u32 1.1754944e-38, %v1161
      %v1163 = vsel %vm1160, %v1162, %v1158
      %v1164 = vmul.f32 1.0, %v1163
      %v1165 = vrcp.pop %v1146
      %v1166 = vmul.f32 %v1146, %v1165
      %v1167 = vsub.f32 1.0, %v1166
      %v1168 = vmul.f32 %v1165, %v1167
      %v1169 = vadd.f32 %v1165, %v1168
      %vm1170 = vweird.f32 %v1146
      %vm1171 = vweird.f32 %v1165
      %vm1172 = vmor %vm1170, %vm1171
      %v1173 = vsel %vm1172, %v1165, %v1169
      %v1174 = vand.u32 2147483647, %v1146
      %vm1175 = vcmp.eq.f32.partialorder %v1174, 8.507059e+37
      %v1176 = vand.u32 %v1146, 2147483648
      %v1177 = vor.u32 1.1754944e-38, %v1176
      %v1178 = vsel %vm1175, %v1177, %v1173
      %v1179 = vmul.f32 1.0, %v1178
      %v1180 = vrcp.pop %v1147
      %v1181 = vmul.f32 %v1147, %v1180
      %v1182 = vsub.f32 1.0, %v1181
      %v1183 = vmul.f32 %v1180, %v1182
      %v1184 = vadd.f32 %v1180, %v1183
      %vm1185 = vweird.f32 %v1147
      %vm1186 = vweird.f32 %v1180
      %vm1187 = vmor %vm1185, %vm1186
      %v1188 = vsel %vm1187, %v1180, %v1184
      %v1189 = vand.u32 2147483647, %v1147
      %vm1190 = vcmp.eq.f32.partialorder %v1189, 8.507059e+37
      %v1191 = vand.u32 %v1147, 2147483648
      %v1192 = vor.u32 1.1754944e-38, %v1191
      %v1193 = vsel %vm1190, %v1192, %v1188
      %v1194 = vmul.f32 1.0, %v1193
      %v1195 = vrcp.pop %v1148
      %v1196 = vmul.f32 %v1148, %v1195
      %v1197 = vsub.f32 1.0, %v1196
      %v1198 = vmul.f32 %v1195, %v1197
      %v1199 = vadd.f32 %v1195, %v1198
      %vm1200 = vweird.f32 %v1148
      %vm1201 = vweird.f32 %v1195
      %vm1202 = vmor %vm1200, %vm1201
      %v1203 = vsel %vm1202, %v1195, %v1199
      %v1204 = vand.u32 2147483647, %v1148
      %vm1205 = vcmp.eq.f32.partialorder %v1204, 8.507059e+37
      %v1206 = vand.u32 %v1148, 2147483648
      %v1207 = vor.u32 1.1754944e-38, %v1206
      %v1208 = vsel %vm1205, %v1207, %v1203
      %v1209 = vmul.f32 1.0, %v1208
      %v1210 = vrcp.pop %v1149
      %v1211 = vmul.f32 %v1149, %v1210
      %v1212 = vsub.f32 1.0, %v1211
      %v1213 = vmul.f32 %v1210, %v1212
      %v1214 = vadd.f32 %v1210, %v1213
      %vm1215 = vweird.f32 %v1149
      %vm1216 = vweird.f32 %v1210
      %vm1217 = vmor %vm1215, %vm1216
      %v1218 = vsel %vm1217, %v1210, %v1214
      %v1219 = vand.u32 2147483647, %v1149
      %vm1220 = vcmp.eq.f32.partialorder %v1219, 8.507059e+37
      %v1221 = vand.u32 %v1149, 2147483648
      %v1222 = vor.u32 1.1754944e-38, %v1221
      %v1223 = vsel %vm1220, %v1222, %v1218
      %v1224 = vmul.f32 1.0, %v1223
      %v1225 = vmul.f32 %v1120, %v1164
      %v1226 = vmul.f32 %v1121, %v1179
      %v1227 = vmul.f32 %v1122, %v1194
      %v1228 = vmul.f32 %v1123, %v1209
      %v1229 = vmul.f32 %v1124, %v1224
      %v1230 = vld [vmem:[%s6] sm:$0xff]
      %v1231 = vld [vmem:[%s6 + $0x8] sm:$0xff]
      %s1232 = scalar_lea.vmem %s6, 16
      %v1233 = vld [vmem:[%s1232] sm:$0xff]
      %v1234 = vld [vmem:[%s1232 + $0x8] sm:$0xff]
      %v1236 = vsel %vm865, %v1233, 0
      %v1239 = vsel %vm865, %v1234, 0
      %1241 = vmatpush.msra.mxu0 0.0
      %1242 = vmatpush.msra.mxu0 0.0
      %1243 = vmatpush.msra.mxu0 0.0
      %1244 = vmatpush.msra.mxu0 0.0
      %1245 = vmatpush.msra.mxu0 0.0
      %1246 = vmatpush.msra.mxu0 0.0
      %1247 = vmatpush.msra.mxu0 0.0
      %1248 = vmatpush.msra.mxu0 0.0
      %1249 = vmatpush.msra.mxu0 0.0
      %1250 = vmatpush.msra.mxu0 0.0
      %1251 = vmatpush.msra.mxu0 0.0
      %1252 = vmatpush.msra.mxu0 0.0
      %1253 = vmatpush.msra.mxu0 0.0
      %1254 = vmatpush.msra.mxu0 0.0
      %1255 = vmatpush.msra.mxu0 0.0
      %1256 = vmatpush.msra.mxu0 %v852
      %1257 = vmatmul.f32.gmra.mxu0 %v1236
      %v1258 = vpop.f32.mrf.mxu0
      %v1259 = vadd.f32 0.0, %v1258
      %1260 = vmatmul.f32.gmra.mxu0 %v1239
      %v1261 = vpop.f32.mrf.mxu0
      %v1262 = vadd.f32 0.0, %v1261
      %1263 = vdwg.mxu0
      %1264 = vmatpush.msra.mxu0 0.0
      %1265 = vmatpush.msra.mxu0 0.0
      %1266 = vmatpush.msra.mxu0 0.0
      %1267 = vmatpush.msra.mxu0 0.0
      %1268 = vmatpush.msra.mxu0 0.0
      %1269 = vmatpush.msra.mxu0 0.0
      %1270 = vmatpush.msra.mxu0 0.0
      %1271 = vmatpush.msra.mxu0 0.0
      %1272 = vmatpush.msra.mxu0 0.0
      %1273 = vmatpush.msra.mxu0 0.0
      %1274 = vmatpush.msra.mxu0 0.0
      %1275 = vmatpush.msra.mxu0 0.0
      %1276 = vmatpush.msra.mxu0 0.0
      %1277 = vmatpush.msra.mxu0 0.0
      %1278 = vmatpush.msra.mxu0 0.0
      %1279 = vmatpush.msra.mxu0 %v853
      %1280 = vmatmul.f32.gmra.mxu0 %v1236
      %v1281 = vpop.f32.mrf.mxu0
      %v1282 = vadd.f32 0.0, %v1281
      %1283 = vmatmul.f32.gmra.mxu0 %v1239
      %v1284 = vpop.f32.mrf.mxu0
      %v1285 = vadd.f32 0.0, %v1284
      %1286 = vdwg.mxu0
      %1287 = vmatpush.msra.mxu0 0.0
      %1288 = vmatpush.msra.mxu0 0.0
      %1289 = vmatpush.msra.mxu0 0.0
      %1290 = vmatpush.msra.mxu0 0.0
      %1291 = vmatpush.msra.mxu0 0.0
      %1292 = vmatpush.msra.mxu0 0.0
      %1293 = vmatpush.msra.mxu0 0.0
      %1294 = vmatpush.msra.mxu0 0.0
      %1295 = vmatpush.msra.mxu0 0.0
      %1296 = vmatpush.msra.mxu0 0.0
      %1297 = vmatpush.msra.mxu0 0.0
      %1298 = vmatpush.msra.mxu0 0.0
      %1299 = vmatpush.msra.mxu0 0.0
      %1300 = vmatpush.msra.mxu0 0.0
      %1301 = vmatpush.msra.mxu0 0.0
      %1302 = vmatpush.msra.mxu0 %v854
      %1303 = vmatmul.f32.gmra.mxu0 %v1236
      %v1304 = vpop.f32.mrf.mxu0
      %v1305 = vadd.f32 0.0, %v1304
      %1306 = vmatmul.f32.gmra.mxu0 %v1239
      %v1307 = vpop.f32.mrf.mxu0
      %v1308 = vadd.f32 0.0, %v1307
      %1309 = vdwg.mxu0
      %1310 = vmatpush.msra.mxu0 0.0
      %1311 = vmatpush.msra.mxu0 0.0
      %1312 = vmatpush.msra.mxu0 0.0
      %1313 = vmatpush.msra.mxu0 0.0
      %1314 = vmatpush.msra.mxu0 0.0
      %1315 = vmatpush.msra.mxu0 0.0
      %1316 = vmatpush.msra.mxu0 0.0
      %1317 = vmatpush.msra.mxu0 0.0
      %1318 = vmatpush.msra.mxu0 0.0
      %1319 = vmatpush.msra.mxu0 0.0
      %1320 = vmatpush.msra.mxu0 0.0
      %1321 = vmatpush.msra.mxu0 0.0
      %1322 = vmatpush.msra.mxu0 0.0
      %1323 = vmatpush.msra.mxu0 0.0
      %1324 = vmatpush.msra.mxu0 0.0
      %1325 = vmatpush.msra.mxu0 %v855
      %1326 = vmatmul.f32.gmra.mxu0 %v1236
      %v1327 = vpop.f32.mrf.mxu0
      %v1328 = vadd.f32 0.0, %v1327
      %1329 = vmatmul.f32.gmra.mxu0 %v1239
      %v1330 = vpop.f32.mrf.mxu0
      %v1331 = vadd.f32 0.0, %v1330
      %1332 = vdwg.mxu0
      %1333 = vmatpush.msra.mxu0 0.0
      %1334 = vmatpush.msra.mxu0 0.0
      %1335 = vmatpush.msra.mxu0 0.0
      %1336 = vmatpush.msra.mxu0 0.0
      %1337 = vmatpush.msra.mxu0 0.0
      %1338 = vmatpush.msra.mxu0 0.0
      %1339 = vmatpush.msra.mxu0 0.0
      %1340 = vmatpush.msra.mxu0 0.0
      %1341 = vmatpush.msra.mxu0 0.0
      %1342 = vmatpush.msra.mxu0 0.0
      %1343 = vmatpush.msra.mxu0 0.0
      %1344 = vmatpush.msra.mxu0 0.0
      %1345 = vmatpush.msra.mxu0 0.0
      %1346 = vmatpush.msra.mxu0 0.0
      %1347 = vmatpush.msra.mxu0 0.0
      %1348 = vmatpush.msra.mxu0 %v856
      %1349 = vmatmul.f32.gmra.mxu0 %v1236
      %v1350 = vpop.f32.mrf.mxu0
      %v1351 = vadd.f32 0.0, %v1350
      %1352 = vmatmul.f32.gmra.mxu0 %v1239
      %v1353 = vpop.f32.mrf.mxu0
      %v1354 = vadd.f32 0.0, %v1353
      %1355 = vdwg.mxu0
      %1356 = vmatpush.msra.mxu0 0.0
      %1357 = vmatpush.msra.mxu0 0.0
      %1358 = vmatpush.msra.mxu0 0.0
      %1359 = vmatpush.msra.mxu0 0.0
      %1360 = vmatpush.msra.mxu0 0.0
      %1361 = vmatpush.msra.mxu0 0.0
      %1362 = vmatpush.msra.mxu0 0.0
      %1363 = vmatpush.msra.mxu0 0.0
      %1364 = vmatpush.msra.mxu0 0.0
      %1365 = vmatpush.msra.mxu0 0.0
      %1366 = vmatpush.msra.mxu0 0.0
      %1367 = vmatpush.msra.mxu0 0.0
      %1368 = vmatpush.msra.mxu0 0.0
      %1369 = vmatpush.msra.mxu0 0.0
      %1370 = vmatpush.msra.mxu0 0.0
      %1371 = vmatpush.msra.mxu0 %v857
      %1372 = vmatmul.f32.gmra.mxu0 %v1236
      %v1373 = vpop.f32.mrf.mxu0
      %v1374 = vadd.f32 0.0, %v1373
      %1375 = vmatmul.f32.gmra.mxu0 %v1239
      %v1376 = vpop.f32.mrf.mxu0
      %v1377 = vadd.f32 0.0, %v1376
      %1378 = vdwg.mxu0
      %v1380 = vsel %vm865, %v1230, 0
      %v1383 = vsel %vm865, %v1231, 0
      %1385 = vmatpush.msra.mxu0 0.0
      %1386 = vmatpush.msra.mxu0 0.0
      %1387 = vmatpush.msra.mxu0 0.0
      %1388 = vmatpush.msra.mxu0 0.0
      %1389 = vmatpush.msra.mxu0 0.0
      %1390 = vmatpush.msra.mxu0 0.0
      %1391 = vmatpush.msra.mxu0 0.0
      %1392 = vmatpush.msra.mxu0 0.0
      %1393 = vmatpush.msra.mxu0 0.0
      %1394 = vmatpush.msra.mxu0 0.0
      %1395 = vmatpush.msra.mxu0 0.0
      %1396 = vmatpush.msra.mxu0 0.0
      %1397 = vmatpush.msra.mxu0 0.0
      %1398 = vmatpush.msra.mxu0 0.0
      %1399 = vmatpush.msra.mxu0 0.0
      %1400 = vmatpush.msra.mxu0 %v851
      %1401 = vmatmul.f32.gmra.mxu0 %v1380
      %v1402 = vpop.f32.mrf.mxu0
      %v1403 = vadd.f32 %v1259, %v1402
      %1404 = vmatmul.f32.gmra.mxu0 %v1383
      %v1405 = vpop.f32.mrf.mxu0
      %v1406 = vadd.f32 %v1262, %v1405
      %1407 = vdwg.mxu0
      %1408 = vmatpush.msra.mxu0 0.0
      %1409 = vmatpush.msra.mxu0 0.0
      %1410 = vmatpush.msra.mxu0 0.0
      %1411 = vmatpush.msra.mxu0 0.0
      %1412 = vmatpush.msra.mxu0 0.0
      %1413 = vmatpush.msra.mxu0 0.0
      %1414 = vmatpush.msra.mxu0 0.0
      %1415 = vmatpush.msra.mxu0 0.0
      %1416 = vmatpush.msra.mxu0 0.0
      %1417 = vmatpush.msra.mxu0 0.0
      %1418 = vmatpush.msra.mxu0 0.0
      %1419 = vmatpush.msra.mxu0 0.0
      %1420 = vmatpush.msra.mxu0 0.0
      %1421 = vmatpush.msra.mxu0 0.0
      %1422 = vmatpush.msra.mxu0 0.0
      %1423 = vmatpush.msra.mxu0 %v852
      %1424 = vmatmul.f32.gmra.mxu0 %v1380
      %v1425 = vpop.f32.mrf.mxu0
      %v1426 = vadd.f32 %v1282, %v1425
      %1427 = vmatmul.f32.gmra.mxu0 %v1383
      %v1428 = vpop.f32.mrf.mxu0
      %v1429 = vadd.f32 %v1285, %v1428
      %1430 = vdwg.mxu0
      %1431 = vmatpush.msra.mxu0 0.0
      %1432 = vmatpush.msra.mxu0 0.0
      %1433 = vmatpush.msra.mxu0 0.0
      %1434 = vmatpush.msra.mxu0 0.0
      %1435 = vmatpush.msra.mxu0 0.0
      %1436 = vmatpush.msra.mxu0 0.0
      %1437 = vmatpush.msra.mxu0 0.0
      %1438 = vmatpush.msra.mxu0 0.0
      %1439 = vmatpush.msra.mxu0 0.0
      %1440 = vmatpush.msra.mxu0 0.0
      %1441 = vmatpush.msra.mxu0 0.0
      %1442 = vmatpush.msra.mxu0 0.0
      %1443 = vmatpush.msra.mxu0 0.0
      %1444 = vmatpush.msra.mxu0 0.0
      %1445 = vmatpush.msra.mxu0 0.0
      %1446 = vmatpush.msra.mxu0 %v853
      %1447 = vmatmul.f32.gmra.mxu0 %v1380
      %v1448 = vpop.f32.mrf.mxu0
      %v1449 = vadd.f32 %v1305, %v1448
      %1450 = vmatmul.f32.gmra.mxu0 %v1383
      %v1451 = vpop.f32.mrf.mxu0
      %v1452 = vadd.f32 %v1308, %v1451
      %1453 = vdwg.mxu0
      %1454 = vmatpush.msra.mxu0 0.0
      %1455 = vmatpush.msra.mxu0 0.0
      %1456 = vmatpush.msra.mxu0 0.0
      %1457 = vmatpush.msra.mxu0 0.0
      %1458 = vmatpush.msra.mxu0 0.0
      %1459 = vmatpush.msra.mxu0 0.0
      %1460 = vmatpush.msra.mxu0 0.0
      %1461 = vmatpush.msra.mxu0 0.0
      %1462 = vmatpush.msra.mxu0 0.0
      %1463 = vmatpush.msra.mxu0 0.0
      %1464 = vmatpush.msra.mxu0 0.0
      %1465 = vmatpush.msra.mxu0 0.0
      %1466 = vmatpush.msra.mxu0 0.0
      %1467 = vmatpush.msra.mxu0 0.0
      %1468 = vmatpush.msra.mxu0 0.0
      %1469 = vmatpush.msra.mxu0 %v854
      %1470 = vmatmul.f32.gmra.mxu0 %v1380
      %v1471 = vpop.f32.mrf.mxu0
      %v1472 = vadd.f32 %v1328, %v1471
      %1473 = vmatmul.f32.gmra.mxu0 %v1383
      %v1474 = vpop.f32.mrf.mxu0
      %v1475 = vadd.f32 %v1331, %v1474
      %1476 = vdwg.mxu0
      %1477 = vmatpush.msra.mxu0 0.0
      %1478 = vmatpush.msra.mxu0 0.0
      %1479 = vmatpush.msra.mxu0 0.0
      %1480 = vmatpush.msra.mxu0 0.0
      %1481 = vmatpush.msra.mxu0 0.0
      %1482 = vmatpush.msra.mxu0 0.0
      %1483 = vmatpush.msra.mxu0 0.0
      %1484 = vmatpush.msra.mxu0 0.0
      %1485 = vmatpush.msra.mxu0 0.0
      %1486 = vmatpush.msra.mxu0 0.0
      %1487 = vmatpush.msra.mxu0 0.0
      %1488 = vmatpush.msra.mxu0 0.0
      %1489 = vmatpush.msra.mxu0 0.0
      %1490 = vmatpush.msra.mxu0 0.0
      %1491 = vmatpush.msra.mxu0 0.0
      %1492 = vmatpush.msra.mxu0 %v855
      %1493 = vmatmul.f32.gmra.mxu0 %v1380
      %v1494 = vpop.f32.mrf.mxu0
      %v1495 = vadd.f32 %v1351, %v1494
      %1496 = vmatmul.f32.gmra.mxu0 %v1383
      %v1497 = vpop.f32.mrf.mxu0
      %v1498 = vadd.f32 %v1354, %v1497
      %1499 = vdwg.mxu0
      %1500 = vmatpush.msra.mxu0 0.0
      %1501 = vmatpush.msra.mxu0 0.0
      %1502 = vmatpush.msra.mxu0 0.0
      %1503 = vmatpush.msra.mxu0 0.0
      %1504 = vmatpush.msra.mxu0 0.0
      %1505 = vmatpush.msra.mxu0 0.0
      %1506 = vmatpush.msra.mxu0 0.0
      %1507 = vmatpush.msra.mxu0 0.0
      %1508 = vmatpush.msra.mxu0 0.0
      %1509 = vmatpush.msra.mxu0 0.0
      %1510 = vmatpush.msra.mxu0 0.0
      %1511 = vmatpush.msra.mxu0 0.0
      %1512 = vmatpush.msra.mxu0 0.0
      %1513 = vmatpush.msra.mxu0 0.0
      %1514 = vmatpush.msra.mxu0 0.0
      %1515 = vmatpush.msra.mxu0 %v856
      %1516 = vmatmul.f32.gmra.mxu0 %v1380
      %v1517 = vpop.f32.mrf.mxu0
      %v1518 = vadd.f32 %v1374, %v1517
      %1519 = vmatmul.f32.gmra.mxu0 %v1383
      %v1520 = vpop.f32.mrf.mxu0
      %v1521 = vadd.f32 %v1377, %v1520
      %1522 = vdwg.mxu0
      %v1523 = vld [vmem:[%s7] sm:$0xff]
      %v1524 = vld [vmem:[%s7 + $0x8] sm:$0xff]
      %1526 = vset.pattern.permute.xlu0 0
      %1527 = vperm.xlu0 %1526, %v1523
      %v1528 = vpop.permute.xlu0 %1527
      %1531 = vset.pattern.permute.xlu0 0
      %1532 = vperm.xlu0 %1531, %v1524
      %v1533 = vpop.permute.xlu0 %1532
      %v1535 = vadd.f32 %v1403, %v1528
      %v1536 = vadd.f32 %v1426, %v1528
      %v1537 = vadd.f32 %v1449, %v1528
      %v1538 = vadd.f32 %v1472, %v1528
      %v1539 = vadd.f32 %v1495, %v1528
      %v1540 = vadd.f32 %v1518, %v1528
      %v1541 = vadd.f32 %v1406, %v1533
      %v1542 = vadd.f32 %v1429, %v1533
      %v1543 = vadd.f32 %v1452, %v1533
      %v1544 = vadd.f32 %v1475, %v1533
      %v1545 = vadd.f32 %v1498, %v1533
      %v1546 = vadd.f32 %v1521, %v1533
      %v1547 = vxor.u32 %v1541, 2147483648
      %v1548 = vxor.u32 %v1542, 2147483648
      %v1549 = vxor.u32 %v1543, 2147483648
      %v1550 = vxor.u32 %v1544, 2147483648
      %v1551 = vxor.u32 %v1545, 2147483648
      %v1552 = vxor.u32 %v1546, 2147483648
      %v1553 = vmul.f32 %v1547, 1.442695
      %v1554 = vpow.pop %v1553
      %v1555 = vmul.f32 %v1548, 1.442695
      %v1556 = vpow.pop %v1555
      %v1557 = vmul.f32 %v1549, 1.442695
      %v1558 = vpow.pop %v1557
      %v1559 = vmul.f32 %v1550, 1.442695
      %v1560 = vpow.pop %v1559
      %v1561 = vmul.f32 %v1551, 1.442695
      %v1562 = vpow.pop %v1561
      %v1563 = vmul.f32 %v1552, 1.442695
      %v1564 = vpow.pop %v1563
      %v1565 = vadd.f32 %v1554, 1.0
      %v1566 = vadd.f32 %v1556, 1.0
      %v1567 = vadd.f32 %v1558, 1.0
      %v1568 = vadd.f32 %v1560, 1.0
      %v1569 = vadd.f32 %v1562, 1.0
      %v1570 = vadd.f32 %v1564, 1.0
      %v1571 = vrcp.pop %v1565
      %v1572 = vmul.f32 %v1565, %v1571
      %v1573 = vsub.f32 1.0, %v1572
      %v1574 = vmul.f32 %v1571, %v1573
      %v1575 = vadd.f32 %v1571, %v1574
      %vm1576 = vweird.f32 %v1565
      %vm1577 = vweird.f32 %v1571
      %vm1578 = vmor %vm1576, %vm1577
      %v1579 = vsel %vm1578, %v1571, %v1575
      %v1580 = vand.u32 2147483647, %v1565
      %vm1581 = vcmp.eq.f32.partialorder %v1580, 8.507059e+37
      %v1582 = vand.u32 %v1565, 2147483648
      %v1583 = vor.u32 1.1754944e-38, %v1582
      %v1584 = vsel %vm1581, %v1583, %v1579
      %v1585 = vmul.f32 1.0, %v1584
      %v1586 = vrcp.pop %v1566
      %v1587 = vmul.f32 %v1566, %v1586
      %v1588 = vsub.f32 1.0, %v1587
      %v1589 = vmul.f32 %v1586, %v1588
      %v1590 = vadd.f32 %v1586, %v1589
      %vm1591 = vweird.f32 %v1566
      %vm1592 = vweird.f32 %v1586
      %vm1593 = vmor %vm1591, %vm1592
      %v1594 = vsel %vm1593, %v1586, %v1590
      %v1595 = vand.u32 2147483647, %v1566
      %vm1596 = vcmp.eq.f32.partialorder %v1595, 8.507059e+37
      %v1597 = vand.u32 %v1566, 2147483648
      %v1598 = vor.u32 1.1754944e-38, %v1597
      %v1599 = vsel %vm1596, %v1598, %v1594
      %v1600 = vmul.f32 1.0, %v1599
      %v1601 = vrcp.pop %v1567
      %v1602 = vmul.f32 %v1567, %v1601
      %v1603 = vsub.f32 1.0, %v1602
      %v1604 = vmul.f32 %v1601, %v1603
      %v1605 = vadd.f32 %v1601, %v1604
      %vm1606 = vweird.f32 %v1567
      %vm1607 = vweird.f32 %v1601
      %vm1608 = vmor %vm1606, %vm1607
      %v1609 = vsel %vm1608, %v1601, %v1605
      %v1610 = vand.u32 2147483647, %v1567
      %vm1611 = vcmp.eq.f32.partialorder %v1610, 8.507059e+37
      %v1612 = vand.u32 %v1567, 2147483648
      %v1613 = vor.u32 1.1754944e-38, %v1612
      %v1614 = vsel %vm1611, %v1613, %v1609
      %v1615 = vmul.f32 1.0, %v1614
      %v1616 = vrcp.pop %v1568
      %v1617 = vmul.f32 %v1568, %v1616
      %v1618 = vsub.f32 1.0, %v1617
      %v1619 = vmul.f32 %v1616, %v1618
      %v1620 = vadd.f32 %v1616, %v1619
      %vm1621 = vweird.f32 %v1568
      %vm1622 = vweird.f32 %v1616
      %vm1623 = vmor %vm1621, %vm1622
      %v1624 = vsel %vm1623, %v1616, %v1620
      %v1625 = vand.u32 2147483647, %v1568
      %vm1626 = vcmp.eq.f32.partialorder %v1625, 8.507059e+37
      %v1627 = vand.u32 %v1568, 2147483648
      %v1628 = vor.u32 1.1754944e-38, %v1627
      %v1629 = vsel %vm1626, %v1628, %v1624
      %v1630 = vmul.f32 1.0, %v1629
      %v1631 = vrcp.pop %v1569
      %v1632 = vmul.f32 %v1569, %v1631
      %v1633 = vsub.f32 1.0, %v1632
      %v1634 = vmul.f32 %v1631, %v1633
      %v1635 = vadd.f32 %v1631, %v1634
      %vm1636 = vweird.f32 %v1569
      %vm1637 = vweird.f32 %v1631
      %vm1638 = vmor %vm1636, %vm1637
      %v1639 = vsel %vm1638, %v1631, %v1635
      %v1640 = vand.u32 2147483647, %v1569
      %vm1641 = vcmp.eq.f32.partialorder %v1640, 8.507059e+37
      %v1642 = vand.u32 %v1569, 2147483648
      %v1643 = vor.u32 1.1754944e-38, %v1642
      %v1644 = vsel %vm1641, %v1643, %v1639
      %v1645 = vmul.f32 1.0, %v1644
      %v1646 = vrcp.pop %v1570
      %v1647 = vmul.f32 %v1570, %v1646
      %v1648 = vsub.f32 1.0, %v1647
      %v1649 = vmul.f32 %v1646, %v1648
      %v1650 = vadd.f32 %v1646, %v1649
      %vm1651 = vweird.f32 %v1570
      %vm1652 = vweird.f32 %v1646
      %vm1653 = vmor %vm1651, %vm1652
      %v1654 = vsel %vm1653, %v1646, %v1650
      %v1655 = vand.u32 2147483647, %v1570
      %vm1656 = vcmp.eq.f32.partialorder %v1655, 8.507059e+37
      %v1657 = vand.u32 %v1570, 2147483648
      %v1658 = vor.u32 1.1754944e-38, %v1657
      %v1659 = vsel %vm1656, %v1658, %v1654
      %v1660 = vmul.f32 1.0, %v1659
      %v1661 = vmul.f32 %v1535, %v1585
      %v1662 = vmul.f32 %v1536, %v1600
      %v1663 = vmul.f32 %v1537, %v1615
      %v1664 = vmul.f32 %v1538, %v1630
      %v1665 = vmul.f32 %v1539, %v1645
      %v1666 = vmul.f32 %v1540, %v1660
      %v1667 = vld [vmem:[%s8] sm:$0xff]
      %v1669 = vsel %vm865, %v1667, 0
      %1671 = vmatpush.msra.mxu0 0.0
      %1672 = vmatpush.msra.mxu0 0.0
      %1673 = vmatpush.msra.mxu0 0.0
      %1674 = vmatpush.msra.mxu0 0.0
      %1675 = vmatpush.msra.mxu0 0.0
      %1676 = vmatpush.msra.mxu0 0.0
      %1677 = vmatpush.msra.mxu0 0.0
      %1678 = vmatpush.msra.mxu0 0.0
      %1679 = vmatpush.msra.mxu0 0.0
      %1680 = vmatpush.msra.mxu0 0.0
      %1681 = vmatpush.msra.mxu0 0.0
      %1682 = vmatpush.msra.mxu0 0.0
      %1683 = vmatpush.msra.mxu0 0.0
      %1684 = vmatpush.msra.mxu0 0.0
      %1685 = vmatpush.msra.mxu0 0.0
      %1686 = vmatpush.msra.mxu0 %v859
      %1687 = vmatmul.f32.gmra.mxu0 %v1669
      %v1688 = vpop.f32.mrf.mxu0
      %v1689 = vadd.f32 0.0, %v1688
      %1690 = vdwg.mxu0
      %1691 = vmatpush.msra.mxu0 0.0
      %1692 = vmatpush.msra.mxu0 0.0
      %1693 = vmatpush.msra.mxu0 0.0
      %1694 = vmatpush.msra.mxu0 0.0
      %1695 = vmatpush.msra.mxu0 0.0
      %1696 = vmatpush.msra.mxu0 0.0
      %1697 = vmatpush.msra.mxu0 0.0
      %1698 = vmatpush.msra.mxu0 0.0
      %1699 = vmatpush.msra.mxu0 0.0
      %1700 = vmatpush.msra.mxu0 0.0
      %1701 = vmatpush.msra.mxu0 0.0
      %1702 = vmatpush.msra.mxu0 0.0
      %1703 = vmatpush.msra.mxu0 0.0
      %1704 = vmatpush.msra.mxu0 0.0
      %1705 = vmatpush.msra.mxu0 0.0
      %1706 = vmatpush.msra.mxu0 %v1225
      %1707 = vmatmul.f32.gmra.mxu0 %v1669
      %v1708 = vpop.f32.mrf.mxu0
      %v1709 = vadd.f32 0.0, %v1708
      %1710 = vdwg.mxu0
      %1711 = vmatpush.msra.mxu0 0.0
      %1712 = vmatpush.msra.mxu0 0.0
      %1713 = vmatpush.msra.mxu0 0.0
      %1714 = vmatpush.msra.mxu0 0.0
      %1715 = vmatpush.msra.mxu0 0.0
      %1716 = vmatpush.msra.mxu0 0.0
      %1717 = vmatpush.msra.mxu0 0.0
      %1718 = vmatpush.msra.mxu0 0.0
      %1719 = vmatpush.msra.mxu0 0.0
      %1720 = vmatpush.msra.mxu0 0.0
      %1721 = vmatpush.msra.mxu0 0.0
      %1722 = vmatpush.msra.mxu0 0.0
      %1723 = vmatpush.msra.mxu0 0.0
      %1724 = vmatpush.msra.mxu0 0.0
      %1725 = vmatpush.msra.mxu0 0.0
      %1726 = vmatpush.msra.mxu0 %v1226
      %1727 = vmatmul.f32.gmra.mxu0 %v1669
      %v1728 = vpop.f32.mrf.mxu0
      %v1729 = vadd.f32 0.0, %v1728
      %1730 = vdwg.mxu0
      %1731 = vmatpush.msra.mxu0 0.0
      %1732 = vmatpush.msra.mxu0 0.0
      %1733 = vmatpush.msra.mxu0 0.0
      %1734 = vmatpush.msra.mxu0 0.0
      %1735 = vmatpush.msra.mxu0 0.0
      %1736 = vmatpush.msra.mxu0 0.0
      %1737 = vmatpush.msra.mxu0 0.0
      %1738 = vmatpush.msra.mxu0 0.0
      %1739 = vmatpush.msra.mxu0 0.0
      %1740 = vmatpush.msra.mxu0 0.0
      %1741 = vmatpush.msra.mxu0 0.0
      %1742 = vmatpush.msra.mxu0 0.0
      %1743 = vmatpush.msra.mxu0 0.0
      %1744 = vmatpush.msra.mxu0 0.0
      %1745 = vmatpush.msra.mxu0 0.0
      %1746 = vmatpush.msra.mxu0 %v1227
      %1747 = vmatmul.f32.gmra.mxu0 %v1669
      %v1748 = vpop.f32.mrf.mxu0
      %v1749 = vadd.f32 0.0, %v1748
      %1750 = vdwg.mxu0
      %1751 = vmatpush.msra.mxu0 0.0
      %1752 = vmatpush.msra.mxu0 0.0
      %1753 = vmatpush.msra.mxu0 0.0
      %1754 = vmatpush.msra.mxu0 0.0
      %1755 = vmatpush.msra.mxu0 0.0
      %1756 = vmatpush.msra.mxu0 0.0
      %1757 = vmatpush.msra.mxu0 0.0
      %1758 = vmatpush.msra.mxu0 0.0
      %1759 = vmatpush.msra.mxu0 0.0
      %1760 = vmatpush.msra.mxu0 0.0
      %1761 = vmatpush.msra.mxu0 0.0
      %1762 = vmatpush.msra.mxu0 0.0
      %1763 = vmatpush.msra.mxu0 0.0
      %1764 = vmatpush.msra.mxu0 0.0
      %1765 = vmatpush.msra.mxu0 0.0
      %1766 = vmatpush.msra.mxu0 %v1228
      %1767 = vmatmul.f32.gmra.mxu0 %v1669
      %v1768 = vpop.f32.mrf.mxu0
      %v1769 = vadd.f32 0.0, %v1768
      %1770 = vdwg.mxu0
      %1771 = vmatpush.msra.mxu0 0.0
      %1772 = vmatpush.msra.mxu0 0.0
      %1773 = vmatpush.msra.mxu0 0.0
      %1774 = vmatpush.msra.mxu0 0.0
      %1775 = vmatpush.msra.mxu0 0.0
      %1776 = vmatpush.msra.mxu0 0.0
      %1777 = vmatpush.msra.mxu0 0.0
      %1778 = vmatpush.msra.mxu0 0.0
      %1779 = vmatpush.msra.mxu0 0.0
      %1780 = vmatpush.msra.mxu0 0.0
      %1781 = vmatpush.msra.mxu0 0.0
      %1782 = vmatpush.msra.mxu0 0.0
      %1783 = vmatpush.msra.mxu0 0.0
      %1784 = vmatpush.msra.mxu0 0.0
      %1785 = vmatpush.msra.mxu0 0.0
      %1786 = vmatpush.msra.mxu0 %v1229
      %1787 = vmatmul.f32.gmra.mxu0 %v1669
      %v1788 = vpop.f32.mrf.mxu0
      %v1789 = vadd.f32 0.0, %v1788
      %1790 = vdwg.mxu0
      %1791 = vmatpush.msra.mxu0 0.0
      %1792 = vmatpush.msra.mxu0 0.0
      %1793 = vmatpush.msra.mxu0 0.0
      %1794 = vmatpush.msra.mxu0 0.0
      %1795 = vmatpush.msra.mxu0 0.0
      %1796 = vmatpush.msra.mxu0 0.0
      %1797 = vmatpush.msra.mxu0 0.0
      %1798 = vmatpush.msra.mxu0 0.0
      %1799 = vmatpush.msra.mxu0 0.0
      %1800 = vmatpush.msra.mxu0 0.0
      %1801 = vmatpush.msra.mxu0 0.0
      %1802 = vmatpush.msra.mxu0 0.0
      %1803 = vmatpush.msra.mxu0 0.0
      %1804 = vmatpush.msra.mxu0 0.0
      %1805 = vmatpush.msra.mxu0 0.0
      %1806 = vmatpush.msra.mxu0 %v1661
      %1807 = vmatmul.f32.gmra.mxu0 %v1669
      %v1808 = vpop.f32.mrf.mxu0
      %v1809 = vadd.f32 0.0, %v1808
      %1810 = vdwg.mxu0
      %1811 = vmatpush.msra.mxu0 0.0
      %1812 = vmatpush.msra.mxu0 0.0
      %1813 = vmatpush.msra.mxu0 0.0
      %1814 = vmatpush.msra.mxu0 0.0
      %1815 = vmatpush.msra.mxu0 0.0
      %1816 = vmatpush.msra.mxu0 0.0
      %1817 = vmatpush.msra.mxu0 0.0
      %1818 = vmatpush.msra.mxu0 0.0
      %1819 = vmatpush.msra.mxu0 0.0
      %1820 = vmatpush.msra.mxu0 0.0
      %1821 = vmatpush.msra.mxu0 0.0
      %1822 = vmatpush.msra.mxu0 0.0
      %1823 = vmatpush.msra.mxu0 0.0
      %1824 = vmatpush.msra.mxu0 0.0
      %1825 = vmatpush.msra.mxu0 0.0
      %1826 = vmatpush.msra.mxu0 %v1662
      %1827 = vmatmul.f32.gmra.mxu0 %v1669
      %v1828 = vpop.f32.mrf.mxu0
      %v1829 = vadd.f32 0.0, %v1828
      %1830 = vdwg.mxu0
      %1831 = vmatpush.msra.mxu0 0.0
      %1832 = vmatpush.msra.mxu0 0.0
      %1833 = vmatpush.msra.mxu0 0.0
      %1834 = vmatpush.msra.mxu0 0.0
      %1835 = vmatpush.msra.mxu0 0.0
      %1836 = vmatpush.msra.mxu0 0.0
      %1837 = vmatpush.msra.mxu0 0.0
      %1838 = vmatpush.msra.mxu0 0.0
      %1839 = vmatpush.msra.mxu0 0.0
      %1840 = vmatpush.msra.mxu0 0.0
      %1841 = vmatpush.msra.mxu0 0.0
      %1842 = vmatpush.msra.mxu0 0.0
      %1843 = vmatpush.msra.mxu0 0.0
      %1844 = vmatpush.msra.mxu0 0.0
      %1845 = vmatpush.msra.mxu0 0.0
      %1846 = vmatpush.msra.mxu0 %v1663
      %1847 = vmatmul.f32.gmra.mxu0 %v1669
      %v1848 = vpop.f32.mrf.mxu0
      %v1849 = vadd.f32 0.0, %v1848
      %1850 = vdwg.mxu0
      %1851 = vmatpush.msra.mxu0 0.0
      %1852 = vmatpush.msra.mxu0 0.0
      %1853 = vmatpush.msra.mxu0 0.0
      %1854 = vmatpush.msra.mxu0 0.0
      %1855 = vmatpush.msra.mxu0 0.0
      %1856 = vmatpush.msra.mxu0 0.0
      %1857 = vmatpush.msra.mxu0 0.0
      %1858 = vmatpush.msra.mxu0 0.0
      %1859 = vmatpush.msra.mxu0 0.0
      %1860 = vmatpush.msra.mxu0 0.0
      %1861 = vmatpush.msra.mxu0 0.0
      %1862 = vmatpush.msra.mxu0 0.0
      %1863 = vmatpush.msra.mxu0 0.0
      %1864 = vmatpush.msra.mxu0 0.0
      %1865 = vmatpush.msra.mxu0 0.0
      %1866 = vmatpush.msra.mxu0 %v1664
      %1867 = vmatmul.f32.gmra.mxu0 %v1669
      %v1868 = vpop.f32.mrf.mxu0
      %v1869 = vadd.f32 0.0, %v1868
      %1870 = vdwg.mxu0
      %1871 = vmatpush.msra.mxu0 0.0
      %1872 = vmatpush.msra.mxu0 0.0
      %1873 = vmatpush.msra.mxu0 0.0
      %1874 = vmatpush.msra.mxu0 0.0
      %1875 = vmatpush.msra.mxu0 0.0
      %1876 = vmatpush.msra.mxu0 0.0
      %1877 = vmatpush.msra.mxu0 0.0
      %1878 = vmatpush.msra.mxu0 0.0
      %1879 = vmatpush.msra.mxu0 0.0
      %1880 = vmatpush.msra.mxu0 0.0
      %1881 = vmatpush.msra.mxu0 0.0
      %1882 = vmatpush.msra.mxu0 0.0
      %1883 = vmatpush.msra.mxu0 0.0
      %1884 = vmatpush.msra.mxu0 0.0
      %1885 = vmatpush.msra.mxu0 0.0
      %1886 = vmatpush.msra.mxu0 %v1665
      %1887 = vmatmul.f32.gmra.mxu0 %v1669
      %v1888 = vpop.f32.mrf.mxu0
      %v1889 = vadd.f32 0.0, %v1888
      %1890 = vdwg.mxu0
      %1891 = vmatpush.msra.mxu0 0.0
      %1892 = vmatpush.msra.mxu0 0.0
      %1893 = vmatpush.msra.mxu0 0.0
      %1894 = vmatpush.msra.mxu0 0.0
      %1895 = vmatpush.msra.mxu0 0.0
      %1896 = vmatpush.msra.mxu0 0.0
      %1897 = vmatpush.msra.mxu0 0.0
      %1898 = vmatpush.msra.mxu0 0.0
      %1899 = vmatpush.msra.mxu0 0.0
      %1900 = vmatpush.msra.mxu0 0.0
      %1901 = vmatpush.msra.mxu0 0.0
      %1902 = vmatpush.msra.mxu0 0.0
      %1903 = vmatpush.msra.mxu0 0.0
      %1904 = vmatpush.msra.mxu0 0.0
      %1905 = vmatpush.msra.mxu0 0.0
      %1906 = vmatpush.msra.mxu0 %v1666
      %1907 = vmatmul.f32.gmra.mxu0 %v1669
      %v1908 = vpop.f32.mrf.mxu0
      %v1909 = vadd.f32 0.0, %v1908
      %1910 = vdwg.mxu0
      %v1911 = vld [vmem:[%s1] sm:$0xff]
      %v1912 = vld [vmem:[%s1 + $0x8] sm:$0xff]
      %v1913 = vld [vmem:[%s1 + $0x10] sm:$0xff]
      %v1914 = vld [vmem:[%s1 + $0x18] sm:$0xff]
      %v1915 = vld [vmem:[%s1 + $0x20] sm:$0xff]
      %v1916 = vld [vmem:[%s1 + $0x28] sm:$0xff]
      %v1917 = vld [vmem:[%s1 + $0x30] sm:$0xff]
      %v1918 = vld [vmem:[%s1 + $0x38] sm:$0xff]
      %v1919 = vld [vmem:[%s1 + $0x40] sm:$0xff]
      %v1920 = vld [vmem:[%s1 + $0x48] sm:$0xff]
      %v1921 = vld [vmem:[%s1 + $0x50] sm:$0xff]
      %v1922 = vld [vmem:[%s1 + $0x58] sm:$0xff]
      %v1923 = vld [vmem:[%s1 + $0x60] sm:$0xff]
      %v1924 = vld [vmem:[%s1 + $0x68] sm:$0xff]
      %v1925 = vld [vmem:[%s1 + $0x70] sm:$0xff]
      %v1926 = vld [vmem:[%s1 + $0x78] sm:$0xff]
      %1927 = vmatpush.msra.mxu0 %v1926
      %1928 = vmatpush.msra.mxu0 %v1925
      %1929 = vmatpush.msra.mxu0 %v1924
      %1930 = vmatpush.msra.mxu0 %v1923
      %1931 = vmatpush.msra.mxu0 %v1922
      %1932 = vmatpush.msra.mxu0 %v1921
      %1933 = vmatpush.msra.mxu0 %v1920
      %1934 = vmatpush.msra.mxu0 %v1919
      %1935 = vmatpush.msra.mxu0 %v1918
      %1936 = vmatpush.msra.mxu0 %v1917
      %1937 = vmatpush.msra.mxu0 %v1916
      %1938 = vmatpush.msra.mxu0 %v1915
      %1939 = vmatpush.msra.mxu0 %v1914
      %1940 = vmatpush.msra.mxu0 %v1913
      %1941 = vmatpush.msra.mxu0 %v1912
      %1942 = vmatpush.msra.mxu0 %v1911
      %1943 = vmatmul.f32.gmra.mxu0 %v1689
      %v1944 = vpop.f32.mrf.mxu0
      %v1945 = vadd.f32 0.0, %v1944
      %1946 = vdwg.mxu0
      %1947 = vmatpush.msra.mxu0 %v1926
      %1948 = vmatpush.msra.mxu0 %v1925
      %1949 = vmatpush.msra.mxu0 %v1924
      %1950 = vmatpush.msra.mxu0 %v1923
      %1951 = vmatpush.msra.mxu0 %v1922
      %1952 = vmatpush.msra.mxu0 %v1921
      %1953 = vmatpush.msra.mxu0 %v1920
      %1954 = vmatpush.msra.mxu0 %v1919
      %1955 = vmatpush.msra.mxu0 %v1918
      %1956 = vmatpush.msra.mxu0 %v1917
      %1957 = vmatpush.msra.mxu0 %v1916
      %1958 = vmatpush.msra.mxu0 %v1915
      %1959 = vmatpush.msra.mxu0 %v1914
      %1960 = vmatpush.msra.mxu0 %v1913
      %1961 = vmatpush.msra.mxu0 %v1912
      %1962 = vmatpush.msra.mxu0 %v1911
      %1963 = vmatmul.f32.gmra.mxu0 %v1709
      %v1964 = vpop.f32.mrf.mxu0
      %v1965 = vadd.f32 0.0, %v1964
      %1966 = vdwg.mxu0
      %1967 = vmatpush.msra.mxu0 %v1926
      %1968 = vmatpush.msra.mxu0 %v1925
      %1969 = vmatpush.msra.mxu0 %v1924
      %1970 = vmatpush.msra.mxu0 %v1923
      %1971 = vmatpush.msra.mxu0 %v1922
      %1972 = vmatpush.msra.mxu0 %v1921
      %1973 = vmatpush.msra.mxu0 %v1920
      %1974 = vmatpush.msra.mxu0 %v1919
      %1975 = vmatpush.msra.mxu0 %v1918
      %1976 = vmatpush.msra.mxu0 %v1917
      %1977 = vmatpush.msra.mxu0 %v1916
      %1978 = vmatpush.msra.mxu0 %v1915
      %1979 = vmatpush.msra.mxu0 %v1914
      %1980 = vmatpush.msra.mxu0 %v1913
      %1981 = vmatpush.msra.mxu0 %v1912
      %1982 = vmatpush.msra.mxu0 %v1911
      %1983 = vmatmul.f32.gmra.mxu0 %v1729
      %v1984 = vpop.f32.mrf.mxu0
      %v1985 = vadd.f32 0.0, %v1984
      %1986 = vdwg.mxu0
      %1987 = vmatpush.msra.mxu0 %v1926
      %1988 = vmatpush.msra.mxu0 %v1925
      %1989 = vmatpush.msra.mxu0 %v1924
      %1990 = vmatpush.msra.mxu0 %v1923
      %1991 = vmatpush.msra.mxu0 %v1922
      %1992 = vmatpush.msra.mxu0 %v1921
      %1993 = vmatpush.msra.mxu0 %v1920
      %1994 = vmatpush.msra.mxu0 %v1919
      %1995 = vmatpush.msra.mxu0 %v1918
      %1996 = vmatpush.msra.mxu0 %v1917
      %1997 = vmatpush.msra.mxu0 %v1916
      %1998 = vmatpush.msra.mxu0 %v1915
      %1999 = vmatpush.msra.mxu0 %v1914
      %2000 = vmatpush.msra.mxu0 %v1913
      %2001 = vmatpush.msra.mxu0 %v1912
      %2002 = vmatpush.msra.mxu0 %v1911
      %2003 = vmatmul.f32.gmra.mxu0 %v1749
      %v2004 = vpop.f32.mrf.mxu0
      %v2005 = vadd.f32 0.0, %v2004
      %2006 = vdwg.mxu0
      %2007 = vmatpush.msra.mxu0 %v1926
      %2008 = vmatpush.msra.mxu0 %v1925
      %2009 = vmatpush.msra.mxu0 %v1924
      %2010 = vmatpush.msra.mxu0 %v1923
      %2011 = vmatpush.msra.mxu0 %v1922
      %2012 = vmatpush.msra.mxu0 %v1921
      %2013 = vmatpush.msra.mxu0 %v1920
      %2014 = vmatpush.msra.mxu0 %v1919
      %2015 = vmatpush.msra.mxu0 %v1918
      %2016 = vmatpush.msra.mxu0 %v1917
      %2017 = vmatpush.msra.mxu0 %v1916
      %2018 = vmatpush.msra.mxu0 %v1915
      %2019 = vmatpush.msra.mxu0 %v1914
      %2020 = vmatpush.msra.mxu0 %v1913
      %2021 = vmatpush.msra.mxu0 %v1912
      %2022 = vmatpush.msra.mxu0 %v1911
      %2023 = vmatmul.f32.gmra.mxu0 %v1769
      %v2024 = vpop.f32.mrf.mxu0
      %v2025 = vadd.f32 0.0, %v2024
      %2026 = vdwg.mxu0
      %2027 = vmatpush.msra.mxu0 %v1926
      %2028 = vmatpush.msra.mxu0 %v1925
      %2029 = vmatpush.msra.mxu0 %v1924
      %2030 = vmatpush.msra.mxu0 %v1923
      %2031 = vmatpush.msra.mxu0 %v1922
      %2032 = vmatpush.msra.mxu0 %v1921
      %2033 = vmatpush.msra.mxu0 %v1920
      %2034 = vmatpush.msra.mxu0 %v1919
      %2035 = vmatpush.msra.mxu0 %v1918
      %2036 = vmatpush.msra.mxu0 %v1917
      %2037 = vmatpush.msra.mxu0 %v1916
      %2038 = vmatpush.msra.mxu0 %v1915
      %2039 = vmatpush.msra.mxu0 %v1914
      %2040 = vmatpush.msra.mxu0 %v1913
      %2041 = vmatpush.msra.mxu0 %v1912
      %2042 = vmatpush.msra.mxu0 %v1911
      %2043 = vmatmul.f32.gmra.mxu0 %v1789
      %v2044 = vpop.f32.mrf.mxu0
      %v2045 = vadd.f32 0.0, %v2044
      %2046 = vdwg.mxu0
      %2047 = vmatpush.msra.mxu0 %v1926
      %2048 = vmatpush.msra.mxu0 %v1925
      %2049 = vmatpush.msra.mxu0 %v1924
      %2050 = vmatpush.msra.mxu0 %v1923
      %2051 = vmatpush.msra.mxu0 %v1922
      %2052 = vmatpush.msra.mxu0 %v1921
      %2053 = vmatpush.msra.mxu0 %v1920
      %2054 = vmatpush.msra.mxu0 %v1919
      %2055 = vmatpush.msra.mxu0 %v1918
      %2056 = vmatpush.msra.mxu0 %v1917
      %2057 = vmatpush.msra.mxu0 %v1916
      %2058 = vmatpush.msra.mxu0 %v1915
      %2059 = vmatpush.msra.mxu0 %v1914
      %2060 = vmatpush.msra.mxu0 %v1913
      %2061 = vmatpush.msra.mxu0 %v1912
      %2062 = vmatpush.msra.mxu0 %v1911
      %2063 = vmatmul.f32.gmra.mxu0 %v1809
      %v2064 = vpop.f32.mrf.mxu0
      %v2065 = vadd.f32 0.0, %v2064
      %2066 = vdwg.mxu0
      %2067 = vmatpush.msra.mxu0 %v1926
      %2068 = vmatpush.msra.mxu0 %v1925
      %2069 = vmatpush.msra.mxu0 %v1924
      %2070 = vmatpush.msra.mxu0 %v1923
      %2071 = vmatpush.msra.mxu0 %v1922
      %2072 = vmatpush.msra.mxu0 %v1921
      %2073 = vmatpush.msra.mxu0 %v1920
      %2074 = vmatpush.msra.mxu0 %v1919
      %2075 = vmatpush.msra.mxu0 %v1918
      %2076 = vmatpush.msra.mxu0 %v1917
      %2077 = vmatpush.msra.mxu0 %v1916
      %2078 = vmatpush.msra.mxu0 %v1915
      %2079 = vmatpush.msra.mxu0 %v1914
      %2080 = vmatpush.msra.mxu0 %v1913
      %2081 = vmatpush.msra.mxu0 %v1912
      %2082 = vmatpush.msra.mxu0 %v1911
      %2083 = vmatmul.f32.gmra.mxu0 %v1829
      %v2084 = vpop.f32.mrf.mxu0
      %v2085 = vadd.f32 0.0, %v2084
      %2086 = vdwg.mxu0
      %2087 = vmatpush.msra.mxu0 %v1926
      %2088 = vmatpush.msra.mxu0 %v1925
      %2089 = vmatpush.msra.mxu0 %v1924
      %2090 = vmatpush.msra.mxu0 %v1923
      %2091 = vmatpush.msra.mxu0 %v1922
      %2092 = vmatpush.msra.mxu0 %v1921
      %2093 = vmatpush.msra.mxu0 %v1920
      %2094 = vmatpush.msra.mxu0 %v1919
      %2095 = vmatpush.msra.mxu0 %v1918
      %2096 = vmatpush.msra.mxu0 %v1917
      %2097 = vmatpush.msra.mxu0 %v1916
      %2098 = vmatpush.msra.mxu0 %v1915
      %2099 = vmatpush.msra.mxu0 %v1914
      %2100 = vmatpush.msra.mxu0 %v1913
      %2101 = vmatpush.msra.mxu0 %v1912
      %2102 = vmatpush.msra.mxu0 %v1911
      %2103 = vmatmul.f32.gmra.mxu0 %v1849
      %v2104 = vpop.f32.mrf.mxu0
      %v2105 = vadd.f32 0.0, %v2104
      %2106 = vdwg.mxu0
      %2107 = vmatpush.msra.mxu0 %v1926
      %2108 = vmatpush.msra.mxu0 %v1925
      %2109 = vmatpush.msra.mxu0 %v1924
      %2110 = vmatpush.msra.mxu0 %v1923
      %2111 = vmatpush.msra.mxu0 %v1922
      %2112 = vmatpush.msra.mxu0 %v1921
      %2113 = vmatpush.msra.mxu0 %v1920
      %2114 = vmatpush.msra.mxu0 %v1919
      %2115 = vmatpush.msra.mxu0 %v1918
      %2116 = vmatpush.msra.mxu0 %v1917
      %2117 = vmatpush.msra.mxu0 %v1916
      %2118 = vmatpush.msra.mxu0 %v1915
      %2119 = vmatpush.msra.mxu0 %v1914
      %2120 = vmatpush.msra.mxu0 %v1913
      %2121 = vmatpush.msra.mxu0 %v1912
      %2122 = vmatpush.msra.mxu0 %v1911
      %2123 = vmatmul.f32.gmra.mxu0 %v1869
      %v2124 = vpop.f32.mrf.mxu0
      %v2125 = vadd.f32 0.0, %v2124
      %2126 = vdwg.mxu0
      %2127 = vmatpush.msra.mxu0 %v1926
      %2128 = vmatpush.msra.mxu0 %v1925
      %2129 = vmatpush.msra.mxu0 %v1924
      %2130 = vmatpush.msra.mxu0 %v1923
      %2131 = vmatpush.msra.mxu0 %v1922
      %2132 = vmatpush.msra.mxu0 %v1921
      %2133 = vmatpush.msra.mxu0 %v1920
      %2134 = vmatpush.msra.mxu0 %v1919
      %2135 = vmatpush.msra.mxu0 %v1918
      %2136 = vmatpush.msra.mxu0 %v1917
      %2137 = vmatpush.msra.mxu0 %v1916
      %2138 = vmatpush.msra.mxu0 %v1915
      %2139 = vmatpush.msra.mxu0 %v1914
      %2140 = vmatpush.msra.mxu0 %v1913
      %2141 = vmatpush.msra.mxu0 %v1912
      %2142 = vmatpush.msra.mxu0 %v1911
      %2143 = vmatmul.f32.gmra.mxu0 %v1889
      %v2144 = vpop.f32.mrf.mxu0
      %v2145 = vadd.f32 0.0, %v2144
      %2146 = vdwg.mxu0
      %2147 = vmatpush.msra.mxu0 %v1926
      %2148 = vmatpush.msra.mxu0 %v1925
      %2149 = vmatpush.msra.mxu0 %v1924
      %2150 = vmatpush.msra.mxu0 %v1923
      %2151 = vmatpush.msra.mxu0 %v1922
      %2152 = vmatpush.msra.mxu0 %v1921
      %2153 = vmatpush.msra.mxu0 %v1920
      %2154 = vmatpush.msra.mxu0 %v1919
      %2155 = vmatpush.msra.mxu0 %v1918
      %2156 = vmatpush.msra.mxu0 %v1917
      %2157 = vmatpush.msra.mxu0 %v1916
      %2158 = vmatpush.msra.mxu0 %v1915
      %2159 = vmatpush.msra.mxu0 %v1914
      %2160 = vmatpush.msra.mxu0 %v1913
      %2161 = vmatpush.msra.mxu0 %v1912
      %2162 = vmatpush.msra.mxu0 %v1911
      %2163 = vmatmul.f32.gmra.mxu0 %v1909
      %v2164 = vpop.f32.mrf.mxu0
      %v2165 = vadd.f32 0.0, %v2164
      %2166 = vdwg.mxu0
      %v2167 = vld [vmem:[%s9] sm:$0xff]
      %2169 = vset.pattern.permute.xlu0 0
      %2170 = vperm.xlu0 %2169, %v2167
      %v2171 = vpop.permute.xlu0 %2170
      %v2173 = vadd.f32 %v1945, %v2171
      %v2174 = vadd.f32 %v1965, %v2171
      %v2175 = vadd.f32 %v1985, %v2171
      %v2176 = vadd.f32 %v2005, %v2171
      %v2177 = vadd.f32 %v2025, %v2171
      %v2178 = vadd.f32 %v2045, %v2171
      %v2179 = vadd.f32 %v2065, %v2171
      %v2180 = vadd.f32 %v2085, %v2171
      %v2181 = vadd.f32 %v2105, %v2171
      %v2182 = vadd.f32 %v2125, %v2171
      %v2183 = vadd.f32 %v2145, %v2171
      %v2184 = vadd.f32 %v2165, %v2171
      %v2185 = vadd.f32 %v2173, %v859
      %v2186 = vadd.f32 %v2174, %v1225
      %v2187 = vadd.f32 %v2175, %v1226
      %v2188 = vadd.f32 %v2176, %v1227
      %v2189 = vadd.f32 %v2177, %v1228
      %v2190 = vadd.f32 %v2178, %v1229
      %v2191 = vadd.f32 %v2179, %v1661
      %v2192 = vadd.f32 %v2180, %v1662
      %v2193 = vadd.f32 %v2181, %v1663
      %v2194 = vadd.f32 %v2182, %v1664
      %v2195 = vadd.f32 %v2183, %v1665
      %v2196 = vadd.f32 %v2184, %v1666
      %v2197 = vmax.f32 %v2185, 0.0
      %v2198 = vmax.f32 %v2186, 0.0
      %v2199 = vmax.f32 %v2187, 0.0
      %v2200 = vmax.f32 %v2188, 0.0
      %v2201 = vmax.f32 %v2189, 0.0
      %v2202 = vmax.f32 %v2190, 0.0
      %v2203 = vmax.f32 %v2191, 0.0
      %v2204 = vmax.f32 %v2192, 0.0
      %v2205 = vmax.f32 %v2193, 0.0
      %v2206 = vmax.f32 %v2194, 0.0
      %v2207 = vmax.f32 %v2195, 0.0
      %v2208 = vmax.f32 %v2196, 0.0
      %v2209 = vld [vmem:[%s3] sm:$0xff]
      %v2210 = vmul.f32 %v2209, %v2197
      %v2211 = vld [vmem:[%s10] sm:$0xff]
      %v2212 = vld [vmem:[%s10 + $0x8] sm:$0xff]
      %s2213 = scalar_lea.vmem %s10, 16
      %v2214 = vld [vmem:[%s2213] sm:$0xff]
      %v2215 = vld [vmem:[%s2213 + $0x8] sm:$0xff]
      %v2217 = vsel %vm865, %v2214, 0
      %v2220 = vsel %vm865, %v2215, 0
      %2222 = vmatpush.msra.mxu0 0.0
      %2223 = vmatpush.msra.mxu0 0.0
      %2224 = vmatpush.msra.mxu0 0.0
      %2225 = vmatpush.msra.mxu0 0.0
      %2226 = vmatpush.msra.mxu0 0.0
      %2227 = vmatpush.msra.mxu0 0.0
      %2228 = vmatpush.msra.mxu0 0.0
      %2229 = vmatpush.msra.mxu0 0.0
      %2230 = vmatpush.msra.mxu0 0.0
      %2231 = vmatpush.msra.mxu0 0.0
      %2232 = vmatpush.msra.mxu0 0.0
      %2233 = vmatpush.msra.mxu0 0.0
      %2234 = vmatpush.msra.mxu0 0.0
      %2235 = vmatpush.msra.mxu0 0.0
      %2236 = vmatpush.msra.mxu0 0.0
      %2237 = vmatpush.msra.mxu0 %v2199
      %2238 = vmatmul.f32.gmra.mxu0 %v2217
      %v2239 = vpop.f32.mrf.mxu0
      %v2240 = vadd.f32 0.0, %v2239
      %2241 = vmatmul.f32.gmra.mxu0 %v2220
      %v2242 = vpop.f32.mrf.mxu0
      %v2243 = vadd.f32 0.0, %v2242
      %2244 = vdwg.mxu0
      %2245 = vmatpush.msra.mxu0 0.0
      %2246 = vmatpush.msra.mxu0 0.0
      %2247 = vmatpush.msra.mxu0 0.0
      %2248 = vmatpush.msra.mxu0 0.0
      %2249 = vmatpush.msra.mxu0 0.0
      %2250 = vmatpush.msra.mxu0 0.0
      %2251 = vmatpush.msra.mxu0 0.0
      %2252 = vmatpush.msra.mxu0 0.0
      %2253 = vmatpush.msra.mxu0 0.0
      %2254 = vmatpush.msra.mxu0 0.0
      %2255 = vmatpush.msra.mxu0 0.0
      %2256 = vmatpush.msra.mxu0 0.0
      %2257 = vmatpush.msra.mxu0 0.0
      %2258 = vmatpush.msra.mxu0 0.0
      %2259 = vmatpush.msra.mxu0 0.0
      %2260 = vmatpush.msra.mxu0 %v2200
      %2261 = vmatmul.f32.gmra.mxu0 %v2217
      %v2262 = vpop.f32.mrf.mxu0
      %v2263 = vadd.f32 0.0, %v2262
      %2264 = vmatmul.f32.gmra.mxu0 %v2220
      %v2265 = vpop.f32.mrf.mxu0
      %v2266 = vadd.f32 0.0, %v2265
      %2267 = vdwg.mxu0
      %2268 = vmatpush.msra.mxu0 0.0
      %2269 = vmatpush.msra.mxu0 0.0
      %2270 = vmatpush.msra.mxu0 0.0
      %2271 = vmatpush.msra.mxu0 0.0
      %2272 = vmatpush.msra.mxu0 0.0
      %2273 = vmatpush.msra.mxu0 0.0
      %2274 = vmatpush.msra.mxu0 0.0
      %2275 = vmatpush.msra.mxu0 0.0
      %2276 = vmatpush.msra.mxu0 0.0
      %2277 = vmatpush.msra.mxu0 0.0
      %2278 = vmatpush.msra.mxu0 0.0
      %2279 = vmatpush.msra.mxu0 0.0
      %2280 = vmatpush.msra.mxu0 0.0
      %2281 = vmatpush.msra.mxu0 0.0
      %2282 = vmatpush.msra.mxu0 0.0
      %2283 = vmatpush.msra.mxu0 %v2201
      %2284 = vmatmul.f32.gmra.mxu0 %v2217
      %v2285 = vpop.f32.mrf.mxu0
      %v2286 = vadd.f32 0.0, %v2285
      %2287 = vmatmul.f32.gmra.mxu0 %v2220
      %v2288 = vpop.f32.mrf.mxu0
      %v2289 = vadd.f32 0.0, %v2288
      %2290 = vdwg.mxu0
      %2291 = vmatpush.msra.mxu0 0.0
      %2292 = vmatpush.msra.mxu0 0.0
      %2293 = vmatpush.msra.mxu0 0.0
      %2294 = vmatpush.msra.mxu0 0.0
      %2295 = vmatpush.msra.mxu0 0.0
      %2296 = vmatpush.msra.mxu0 0.0
      %2297 = vmatpush.msra.mxu0 0.0
      %2298 = vmatpush.msra.mxu0 0.0
      %2299 = vmatpush.msra.mxu0 0.0
      %2300 = vmatpush.msra.mxu0 0.0
      %2301 = vmatpush.msra.mxu0 0.0
      %2302 = vmatpush.msra.mxu0 0.0
      %2303 = vmatpush.msra.mxu0 0.0
      %2304 = vmatpush.msra.mxu0 0.0
      %2305 = vmatpush.msra.mxu0 0.0
      %2306 = vmatpush.msra.mxu0 %v2202
      %2307 = vmatmul.f32.gmra.mxu0 %v2217
      %v2308 = vpop.f32.mrf.mxu0
      %v2309 = vadd.f32 0.0, %v2308
      %2310 = vmatmul.f32.gmra.mxu0 %v2220
      %v2311 = vpop.f32.mrf.mxu0
      %v2312 = vadd.f32 0.0, %v2311
      %2313 = vdwg.mxu0
      %v2315 = vsel %vm865, %v2211, 0
      %v2318 = vsel %vm865, %v2212, 0
      %2320 = vmatpush.msra.mxu0 0.0
      %2321 = vmatpush.msra.mxu0 0.0
      %2322 = vmatpush.msra.mxu0 0.0
      %2323 = vmatpush.msra.mxu0 0.0
      %2324 = vmatpush.msra.mxu0 0.0
      %2325 = vmatpush.msra.mxu0 0.0
      %2326 = vmatpush.msra.mxu0 0.0
      %2327 = vmatpush.msra.mxu0 0.0
      %2328 = vmatpush.msra.mxu0 0.0
      %2329 = vmatpush.msra.mxu0 0.0
      %2330 = vmatpush.msra.mxu0 0.0
      %2331 = vmatpush.msra.mxu0 0.0
      %2332 = vmatpush.msra.mxu0 0.0
      %2333 = vmatpush.msra.mxu0 0.0
      %2334 = vmatpush.msra.mxu0 0.0
      %2335 = vmatpush.msra.mxu0 %v2198
      %2336 = vmatmul.f32.gmra.mxu0 %v2315
      %v2337 = vpop.f32.mrf.mxu0
      %v2338 = vadd.f32 %v2240, %v2337
      %2339 = vmatmul.f32.gmra.mxu0 %v2318
      %v2340 = vpop.f32.mrf.mxu0
      %v2341 = vadd.f32 %v2243, %v2340
      %2342 = vdwg.mxu0
      %2343 = vmatpush.msra.mxu0 0.0
      %2344 = vmatpush.msra.mxu0 0.0
      %2345 = vmatpush.msra.mxu0 0.0
      %2346 = vmatpush.msra.mxu0 0.0
      %2347 = vmatpush.msra.mxu0 0.0
      %2348 = vmatpush.msra.mxu0 0.0
      %2349 = vmatpush.msra.mxu0 0.0
      %2350 = vmatpush.msra.mxu0 0.0
      %2351 = vmatpush.msra.mxu0 0.0
      %2352 = vmatpush.msra.mxu0 0.0
      %2353 = vmatpush.msra.mxu0 0.0
      %2354 = vmatpush.msra.mxu0 0.0
      %2355 = vmatpush.msra.mxu0 0.0
      %2356 = vmatpush.msra.mxu0 0.0
      %2357 = vmatpush.msra.mxu0 0.0
      %2358 = vmatpush.msra.mxu0 %v2199
      %2359 = vmatmul.f32.gmra.mxu0 %v2315
      %v2360 = vpop.f32.mrf.mxu0
      %v2361 = vadd.f32 %v2263, %v2360
      %2362 = vmatmul.f32.gmra.mxu0 %v2318
      %v2363 = vpop.f32.mrf.mxu0
      %v2364 = vadd.f32 %v2266, %v2363
      %2365 = vdwg.mxu0
      %2366 = vmatpush.msra.mxu0 0.0
      %2367 = vmatpush.msra.mxu0 0.0
      %2368 = vmatpush.msra.mxu0 0.0
      %2369 = vmatpush.msra.mxu0 0.0
      %2370 = vmatpush.msra.mxu0 0.0
      %2371 = vmatpush.msra.mxu0 0.0
      %2372 = vmatpush.msra.mxu0 0.0
      %2373 = vmatpush.msra.mxu0 0.0
      %2374 = vmatpush.msra.mxu0 0.0
      %2375 = vmatpush.msra.mxu0 0.0
      %2376 = vmatpush.msra.mxu0 0.0
      %2377 = vmatpush.msra.mxu0 0.0
      %2378 = vmatpush.msra.mxu0 0.0
      %2379 = vmatpush.msra.mxu0 0.0
      %2380 = vmatpush.msra.mxu0 0.0
      %2381 = vmatpush.msra.mxu0 %v2200
      %2382 = vmatmul.f32.gmra.mxu0 %v2315
      %v2383 = vpop.f32.mrf.mxu0
      %v2384 = vadd.f32 %v2286, %v2383
      %2385 = vmatmul.f32.gmra.mxu0 %v2318
      %v2386 = vpop.f32.mrf.mxu0
      %v2387 = vadd.f32 %v2289, %v2386
      %2388 = vdwg.mxu0
      %2389 = vmatpush.msra.mxu0 0.0
      %2390 = vmatpush.msra.mxu0 0.0
      %2391 = vmatpush.msra.mxu0 0.0
      %2392 = vmatpush.msra.mxu0 0.0
      %2393 = vmatpush.msra.mxu0 0.0
      %2394 = vmatpush.msra.mxu0 0.0
      %2395 = vmatpush.msra.mxu0 0.0
      %2396 = vmatpush.msra.mxu0 0.0
      %2397 = vmatpush.msra.mxu0 0.0
      %2398 = vmatpush.msra.mxu0 0.0
      %2399 = vmatpush.msra.mxu0 0.0
      %2400 = vmatpush.msra.mxu0 0.0
      %2401 = vmatpush.msra.mxu0 0.0
      %2402 = vmatpush.msra.mxu0 0.0
      %2403 = vmatpush.msra.mxu0 0.0
      %2404 = vmatpush.msra.mxu0 %v2201
      %2405 = vmatmul.f32.gmra.mxu0 %v2315
      %v2406 = vpop.f32.mrf.mxu0
      %v2407 = vadd.f32 %v2309, %v2406
      %2408 = vmatmul.f32.gmra.mxu0 %v2318
      %v2409 = vpop.f32.mrf.mxu0
      %v2410 = vadd.f32 %v2312, %v2409
      %2411 = vdwg.mxu0
      %v2412 = vld [vmem:[%s11] sm:$0xff]
      %v2413 = vld [vmem:[%s11 + $0x8] sm:$0xff]
      %2415 = vset.pattern.permute.xlu0 0
      %2416 = vperm.xlu0 %2415, %v2412
      %v2417 = vpop.permute.xlu0 %2416
      %2420 = vset.pattern.permute.xlu0 0
      %2421 = vperm.xlu0 %2420, %v2413
      %v2422 = vpop.permute.xlu0 %2421
      %v2424 = vadd.f32 %v2338, %v2417
      %v2425 = vadd.f32 %v2361, %v2417
      %v2426 = vadd.f32 %v2384, %v2417
      %v2427 = vadd.f32 %v2407, %v2417
      %v2428 = vadd.f32 %v2341, %v2422
      %v2429 = vadd.f32 %v2364, %v2422
      %v2430 = vadd.f32 %v2387, %v2422
      %v2431 = vadd.f32 %v2410, %v2422
      %v2432 = vxor.u32 %v2428, 2147483648
      %v2433 = vxor.u32 %v2429, 2147483648
      %v2434 = vxor.u32 %v2430, 2147483648
      %v2435 = vxor.u32 %v2431, 2147483648
      %v2436 = vmul.f32 %v2432, 1.442695
      %v2437 = vpow.pop %v2436
      %v2438 = vmul.f32 %v2433, 1.442695
      %v2439 = vpow.pop %v2438
      %v2440 = vmul.f32 %v2434, 1.442695
      %v2441 = vpow.pop %v2440
      %v2442 = vmul.f32 %v2435, 1.442695
      %v2443 = vpow.pop %v2442
      %v2444 = vadd.f32 %v2437, 1.0
      %v2445 = vadd.f32 %v2439, 1.0
      %v2446 = vadd.f32 %v2441, 1.0
      %v2447 = vadd.f32 %v2443, 1.0
      %v2448 = vrcp.pop %v2444
      %v2449 = vmul.f32 %v2444, %v2448
      %v2450 = vsub.f32 1.0, %v2449
      %v2451 = vmul.f32 %v2448, %v2450
      %v2452 = vadd.f32 %v2448, %v2451
      %vm2453 = vweird.f32 %v2444
      %vm2454 = vweird.f32 %v2448
      %vm2455 = vmor %vm2453, %vm2454
      %v2456 = vsel %vm2455, %v2448, %v2452
      %v2457 = vand.u32 2147483647, %v2444
      %vm2458 = vcmp.eq.f32.partialorder %v2457, 8.507059e+37
      %v2459 = vand.u32 %v2444, 2147483648
      %v2460 = vor.u32 1.1754944e-38, %v2459
      %v2461 = vsel %vm2458, %v2460, %v2456
      %v2462 = vmul.f32 1.0, %v2461
      %v2463 = vrcp.pop %v2445
      %v2464 = vmul.f32 %v2445, %v2463
      %v2465 = vsub.f32 1.0, %v2464
      %v2466 = vmul.f32 %v2463, %v2465
      %v2467 = vadd.f32 %v2463, %v2466
      %vm2468 = vweird.f32 %v2445
      %vm2469 = vweird.f32 %v2463
      %vm2470 = vmor %vm2468, %vm2469
      %v2471 = vsel %vm2470, %v2463, %v2467
      %v2472 = vand.u32 2147483647, %v2445
      %vm2473 = vcmp.eq.f32.partialorder %v2472, 8.507059e+37
      %v2474 = vand.u32 %v2445, 2147483648
      %v2475 = vor.u32 1.1754944e-38, %v2474
      %v2476 = vsel %vm2473, %v2475, %v2471
      %v2477 = vmul.f32 1.0, %v2476
      %v2478 = vrcp.pop %v2446
      %v2479 = vmul.f32 %v2446, %v2478
      %v2480 = vsub.f32 1.0, %v2479
      %v2481 = vmul.f32 %v2478, %v2480
      %v2482 = vadd.f32 %v2478, %v2481
      %vm2483 = vweird.f32 %v2446
      %vm2484 = vweird.f32 %v2478
      %vm2485 = vmor %vm2483, %vm2484
      %v2486 = vsel %vm2485, %v2478, %v2482
      %v2487 = vand.u32 2147483647, %v2446
      %vm2488 = vcmp.eq.f32.partialorder %v2487, 8.507059e+37
      %v2489 = vand.u32 %v2446, 2147483648
      %v2490 = vor.u32 1.1754944e-38, %v2489
      %v2491 = vsel %vm2488, %v2490, %v2486
      %v2492 = vmul.f32 1.0, %v2491
      %v2493 = vrcp.pop %v2447
      %v2494 = vmul.f32 %v2447, %v2493
      %v2495 = vsub.f32 1.0, %v2494
      %v2496 = vmul.f32 %v2493, %v2495
      %v2497 = vadd.f32 %v2493, %v2496
      %vm2498 = vweird.f32 %v2447
      %vm2499 = vweird.f32 %v2493
      %vm2500 = vmor %vm2498, %vm2499
      %v2501 = vsel %vm2500, %v2493, %v2497
      %v2502 = vand.u32 2147483647, %v2447
      %vm2503 = vcmp.eq.f32.partialorder %v2502, 8.507059e+37
      %v2504 = vand.u32 %v2447, 2147483648
      %v2505 = vor.u32 1.1754944e-38, %v2504
      %v2506 = vsel %vm2503, %v2505, %v2501
      %v2507 = vmul.f32 1.0, %v2506
      %v2508 = vmul.f32 %v2424, %v2462
      %v2509 = vmul.f32 %v2425, %v2477
      %v2510 = vmul.f32 %v2426, %v2492
      %v2511 = vmul.f32 %v2427, %v2507
      %v2512 = vld [vmem:[%s12] sm:$0xff]
      %v2513 = vld [vmem:[%s12 + $0x8] sm:$0xff]
      %s2514 = scalar_lea.vmem %s12, 16
      %v2515 = vld [vmem:[%s2514] sm:$0xff]
      %v2516 = vld [vmem:[%s2514 + $0x8] sm:$0xff]
      %v2518 = vsel %vm865, %v2515, 0
      %v2521 = vsel %vm865, %v2516, 0
      %2523 = vmatpush.msra.mxu0 0.0
      %2524 = vmatpush.msra.mxu0 0.0
      %2525 = vmatpush.msra.mxu0 0.0
      %2526 = vmatpush.msra.mxu0 0.0
      %2527 = vmatpush.msra.mxu0 0.0
      %2528 = vmatpush.msra.mxu0 0.0
      %2529 = vmatpush.msra.mxu0 0.0
      %2530 = vmatpush.msra.mxu0 0.0
      %2531 = vmatpush.msra.mxu0 0.0
      %2532 = vmatpush.msra.mxu0 0.0
      %2533 = vmatpush.msra.mxu0 0.0
      %2534 = vmatpush.msra.mxu0 0.0
      %2535 = vmatpush.msra.mxu0 0.0
      %2536 = vmatpush.msra.mxu0 0.0
      %2537 = vmatpush.msra.mxu0 0.0
      %2538 = vmatpush.msra.mxu0 %v2204
      %2539 = vmatmul.f32.gmra.mxu0 %v2518
      %v2540 = vpop.f32.mrf.mxu0
      %v2541 = vadd.f32 0.0, %v2540
      %2542 = vmatmul.f32.gmra.mxu0 %v2521
      %v2543 = vpop.f32.mrf.mxu0
      %v2544 = vadd.f32 0.0, %v2543
      %2545 = vdwg.mxu0
      %2546 = vmatpush.msra.mxu0 0.0
      %2547 = vmatpush.msra.mxu0 0.0
      %2548 = vmatpush.msra.mxu0 0.0
      %2549 = vmatpush.msra.mxu0 0.0
      %2550 = vmatpush.msra.mxu0 0.0
      %2551 = vmatpush.msra.mxu0 0.0
      %2552 = vmatpush.msra.mxu0 0.0
      %2553 = vmatpush.msra.mxu0 0.0
      %2554 = vmatpush.msra.mxu0 0.0
      %2555 = vmatpush.msra.mxu0 0.0
      %2556 = vmatpush.msra.mxu0 0.0
      %2557 = vmatpush.msra.mxu0 0.0
      %2558 = vmatpush.msra.mxu0 0.0
      %2559 = vmatpush.msra.mxu0 0.0
      %2560 = vmatpush.msra.mxu0 0.0
      %2561 = vmatpush.msra.mxu0 %v2205
      %2562 = vmatmul.f32.gmra.mxu0 %v2518
      %v2563 = vpop.f32.mrf.mxu0
      %v2564 = vadd.f32 0.0, %v2563
      %2565 = vmatmul.f32.gmra.mxu0 %v2521
      %v2566 = vpop.f32.mrf.mxu0
      %v2567 = vadd.f32 0.0, %v2566
      %2568 = vdwg.mxu0
      %2569 = vmatpush.msra.mxu0 0.0
      %2570 = vmatpush.msra.mxu0 0.0
      %2571 = vmatpush.msra.mxu0 0.0
      %2572 = vmatpush.msra.mxu0 0.0
      %2573 = vmatpush.msra.mxu0 0.0
      %2574 = vmatpush.msra.mxu0 0.0
      %2575 = vmatpush.msra.mxu0 0.0
      %2576 = vmatpush.msra.mxu0 0.0
      %2577 = vmatpush.msra.mxu0 0.0
      %2578 = vmatpush.msra.mxu0 0.0
      %2579 = vmatpush.msra.mxu0 0.0
      %2580 = vmatpush.msra.mxu0 0.0
      %2581 = vmatpush.msra.mxu0 0.0
      %2582 = vmatpush.msra.mxu0 0.0
      %2583 = vmatpush.msra.mxu0 0.0
      %2584 = vmatpush.msra.mxu0 %v2206
      %2585 = vmatmul.f32.gmra.mxu0 %v2518
      %v2586 = vpop.f32.mrf.mxu0
      %v2587 = vadd.f32 0.0, %v2586
      %2588 = vmatmul.f32.gmra.mxu0 %v2521
      %v2589 = vpop.f32.mrf.mxu0
      %v2590 = vadd.f32 0.0, %v2589
      %2591 = vdwg.mxu0
      %2592 = vmatpush.msra.mxu0 0.0
      %2593 = vmatpush.msra.mxu0 0.0
      %2594 = vmatpush.msra.mxu0 0.0
      %2595 = vmatpush.msra.mxu0 0.0
      %2596 = vmatpush.msra.mxu0 0.0
      %2597 = vmatpush.msra.mxu0 0.0
      %2598 = vmatpush.msra.mxu0 0.0
      %2599 = vmatpush.msra.mxu0 0.0
      %2600 = vmatpush.msra.mxu0 0.0
      %2601 = vmatpush.msra.mxu0 0.0
      %2602 = vmatpush.msra.mxu0 0.0
      %2603 = vmatpush.msra.mxu0 0.0
      %2604 = vmatpush.msra.mxu0 0.0
      %2605 = vmatpush.msra.mxu0 0.0
      %2606 = vmatpush.msra.mxu0 0.0
      %2607 = vmatpush.msra.mxu0 %v2207
      %2608 = vmatmul.f32.gmra.mxu0 %v2518
      %v2609 = vpop.f32.mrf.mxu0
      %v2610 = vadd.f32 0.0, %v2609
      %2611 = vmatmul.f32.gmra.mxu0 %v2521
      %v2612 = vpop.f32.mrf.mxu0
      %v2613 = vadd.f32 0.0, %v2612
      %2614 = vdwg.mxu0
      %2615 = vmatpush.msra.mxu0 0.0
      %2616 = vmatpush.msra.mxu0 0.0
      %2617 = vmatpush.msra.mxu0 0.0
      %2618 = vmatpush.msra.mxu0 0.0
      %2619 = vmatpush.msra.mxu0 0.0
      %2620 = vmatpush.msra.mxu0 0.0
      %2621 = vmatpush.msra.mxu0 0.0
      %2622 = vmatpush.msra.mxu0 0.0
      %2623 = vmatpush.msra.mxu0 0.0
      %2624 = vmatpush.msra.mxu0 0.0
      %2625 = vmatpush.msra.mxu0 0.0
      %2626 = vmatpush.msra.mxu0 0.0
      %2627 = vmatpush.msra.mxu0 0.0
      %2628 = vmatpush.msra.mxu0 0.0
      %2629 = vmatpush.msra.mxu0 0.0
      %2630 = vmatpush.msra.mxu0 %v2208
      %2631 = vmatmul.f32.gmra.mxu0 %v2518
      %v2632 = vpop.f32.mrf.mxu0
      %v2633 = vadd.f32 0.0, %v2632
      %2634 = vmatmul.f32.gmra.mxu0 %v2521
      %v2635 = vpop.f32.mrf.mxu0
      %v2636 = vadd.f32 0.0, %v2635
      %2637 = vdwg.mxu0
      %v2639 = vsel %vm865, %v2512, 0
      %v2642 = vsel %vm865, %v2513, 0
      %2644 = vmatpush.msra.mxu0 0.0
      %2645 = vmatpush.msra.mxu0 0.0
      %2646 = vmatpush.msra.mxu0 0.0
      %2647 = vmatpush.msra.mxu0 0.0
      %2648 = vmatpush.msra.mxu0 0.0
      %2649 = vmatpush.msra.mxu0 0.0
      %2650 = vmatpush.msra.mxu0 0.0
      %2651 = vmatpush.msra.mxu0 0.0
      %2652 = vmatpush.msra.mxu0 0.0
      %2653 = vmatpush.msra.mxu0 0.0
      %2654 = vmatpush.msra.mxu0 0.0
      %2655 = vmatpush.msra.mxu0 0.0
      %2656 = vmatpush.msra.mxu0 0.0
      %2657 = vmatpush.msra.mxu0 0.0
      %2658 = vmatpush.msra.mxu0 0.0
      %2659 = vmatpush.msra.mxu0 %v2203
      %2660 = vmatmul.f32.gmra.mxu0 %v2639
      %v2661 = vpop.f32.mrf.mxu0
      %v2662 = vadd.f32 %v2541, %v2661
      %2663 = vmatmul.f32.gmra.mxu0 %v2642
      %v2664 = vpop.f32.mrf.mxu0
      %v2665 = vadd.f32 %v2544, %v2664
      %2666 = vdwg.mxu0
      %2667 = vmatpush.msra.mxu0 0.0
      %2668 = vmatpush.msra.mxu0 0.0
      %2669 = vmatpush.msra.mxu0 0.0
      %2670 = vmatpush.msra.mxu0 0.0
      %2671 = vmatpush.msra.mxu0 0.0
      %2672 = vmatpush.msra.mxu0 0.0
      %2673 = vmatpush.msra.mxu0 0.0
      %2674 = vmatpush.msra.mxu0 0.0
      %2675 = vmatpush.msra.mxu0 0.0
      %2676 = vmatpush.msra.mxu0 0.0
      %2677 = vmatpush.msra.mxu0 0.0
      %2678 = vmatpush.msra.mxu0 0.0
      %2679 = vmatpush.msra.mxu0 0.0
      %2680 = vmatpush.msra.mxu0 0.0
      %2681 = vmatpush.msra.mxu0 0.0
      %2682 = vmatpush.msra.mxu0 %v2204
      %2683 = vmatmul.f32.gmra.mxu0 %v2639
      %v2684 = vpop.f32.mrf.mxu0
      %v2685 = vadd.f32 %v2564, %v2684
      %2686 = vmatmul.f32.gmra.mxu0 %v2642
      %v2687 = vpop.f32.mrf.mxu0
      %v2688 = vadd.f32 %v2567, %v2687
      %2689 = vdwg.mxu0
      %2690 = vmatpush.msra.mxu0 0.0
      %2691 = vmatpush.msra.mxu0 0.0
      %2692 = vmatpush.msra.mxu0 0.0
      %2693 = vmatpush.msra.mxu0 0.0
      %2694 = vmatpush.msra.mxu0 0.0
      %2695 = vmatpush.msra.mxu0 0.0
      %2696 = vmatpush.msra.mxu0 0.0
      %2697 = vmatpush.msra.mxu0 0.0
      %2698 = vmatpush.msra.mxu0 0.0
      %2699 = vmatpush.msra.mxu0 0.0
      %2700 = vmatpush.msra.mxu0 0.0
      %2701 = vmatpush.msra.mxu0 0.0
      %2702 = vmatpush.msra.mxu0 0.0
      %2703 = vmatpush.msra.mxu0 0.0
      %2704 = vmatpush.msra.mxu0 0.0
      %2705 = vmatpush.msra.mxu0 %v2205
      %2706 = vmatmul.f32.gmra.mxu0 %v2639
      %v2707 = vpop.f32.mrf.mxu0
      %v2708 = vadd.f32 %v2587, %v2707
      %2709 = vmatmul.f32.gmra.mxu0 %v2642
      %v2710 = vpop.f32.mrf.mxu0
      %v2711 = vadd.f32 %v2590, %v2710
      %2712 = vdwg.mxu0
      %2713 = vmatpush.msra.mxu0 0.0
      %2714 = vmatpush.msra.mxu0 0.0
      %2715 = vmatpush.msra.mxu0 0.0
      %2716 = vmatpush.msra.mxu0 0.0
      %2717 = vmatpush.msra.mxu0 0.0
      %2718 = vmatpush.msra.mxu0 0.0
      %2719 = vmatpush.msra.mxu0 0.0
      %2720 = vmatpush.msra.mxu0 0.0
      %2721 = vmatpush.msra.mxu0 0.0
      %2722 = vmatpush.msra.mxu0 0.0
      %2723 = vmatpush.msra.mxu0 0.0
      %2724 = vmatpush.msra.mxu0 0.0
      %2725 = vmatpush.msra.mxu0 0.0
      %2726 = vmatpush.msra.mxu0 0.0
      %2727 = vmatpush.msra.mxu0 0.0
      %2728 = vmatpush.msra.mxu0 %v2206
      %2729 = vmatmul.f32.gmra.mxu0 %v2639
      %v2730 = vpop.f32.mrf.mxu0
      %v2731 = vadd.f32 %v2610, %v2730
      %2732 = vmatmul.f32.gmra.mxu0 %v2642
      %v2733 = vpop.f32.mrf.mxu0
      %v2734 = vadd.f32 %v2613, %v2733
      %2735 = vdwg.mxu0
      %2736 = vmatpush.msra.mxu0 0.0
      %2737 = vmatpush.msra.mxu0 0.0
      %2738 = vmatpush.msra.mxu0 0.0
      %2739 = vmatpush.msra.mxu0 0.0
      %2740 = vmatpush.msra.mxu0 0.0
      %2741 = vmatpush.msra.mxu0 0.0
      %2742 = vmatpush.msra.mxu0 0.0
      %2743 = vmatpush.msra.mxu0 0.0
      %2744 = vmatpush.msra.mxu0 0.0
      %2745 = vmatpush.msra.mxu0 0.0
      %2746 = vmatpush.msra.mxu0 0.0
      %2747 = vmatpush.msra.mxu0 0.0
      %2748 = vmatpush.msra.mxu0 0.0
      %2749 = vmatpush.msra.mxu0 0.0
      %2750 = vmatpush.msra.mxu0 0.0
      %2751 = vmatpush.msra.mxu0 %v2207
      %2752 = vmatmul.f32.gmra.mxu0 %v2639
      %v2753 = vpop.f32.mrf.mxu0
      %v2754 = vadd.f32 %v2633, %v2753
      %2755 = vmatmul.f32.gmra.mxu0 %v2642
      %v2756 = vpop.f32.mrf.mxu0
      %v2757 = vadd.f32 %v2636, %v2756
      %2758 = vdwg.mxu0
      %v2759 = vld [vmem:[%s13] sm:$0xff]
      %v2760 = vld [vmem:[%s13 + $0x8] sm:$0xff]
      %2762 = vset.pattern.permute.xlu0 0
      %2763 = vperm.xlu0 %2762, %v2759
      %v2764 = vpop.permute.xlu0 %2763
      %2767 = vset.pattern.permute.xlu0 0
      %2768 = vperm.xlu0 %2767, %v2760
      %v2769 = vpop.permute.xlu0 %2768
      %v2771 = vadd.f32 %v2662, %v2764
      %v2772 = vadd.f32 %v2685, %v2764
      %v2773 = vadd.f32 %v2708, %v2764
      %v2774 = vadd.f32 %v2731, %v2764
      %v2775 = vadd.f32 %v2754, %v2764
      %v2776 = vadd.f32 %v2665, %v2769
      %v2777 = vadd.f32 %v2688, %v2769
      %v2778 = vadd.f32 %v2711, %v2769
      %v2779 = vadd.f32 %v2734, %v2769
      %v2780 = vadd.f32 %v2757, %v2769
      %v2781 = vxor.u32 %v2776, 2147483648
      %v2782 = vxor.u32 %v2777, 2147483648
      %v2783 = vxor.u32 %v2778, 2147483648
      %v2784 = vxor.u32 %v2779, 2147483648
      %v2785 = vxor.u32 %v2780, 2147483648
      %v2786 = vmul.f32 %v2781, 1.442695
      %v2787 = vpow.pop %v2786
      %v2788 = vmul.f32 %v2782, 1.442695
      %v2789 = vpow.pop %v2788
      %v2790 = vmul.f32 %v2783, 1.442695
      %v2791 = vpow.pop %v2790
      %v2792 = vmul.f32 %v2784, 1.442695
      %v2793 = vpow.pop %v2792
      %v2794 = vmul.f32 %v2785, 1.442695
      %v2795 = vpow.pop %v2794
      %v2796 = vadd.f32 %v2787, 1.0
      %v2797 = vadd.f32 %v2789, 1.0
      %v2798 = vadd.f32 %v2791, 1.0
      %v2799 = vadd.f32 %v2793, 1.0
      %v2800 = vadd.f32 %v2795, 1.0
      %v2801 = vrcp.pop %v2796
      %v2802 = vmul.f32 %v2796, %v2801
      %v2803 = vsub.f32 1.0, %v2802
      %v2804 = vmul.f32 %v2801, %v2803
      %v2805 = vadd.f32 %v2801, %v2804
      %vm2806 = vweird.f32 %v2796
      %vm2807 = vweird.f32 %v2801
      %vm2808 = vmor %vm2806, %vm2807
      %v2809 = vsel %vm2808, %v2801, %v2805
      %v2810 = vand.u32 2147483647, %v2796
      %vm2811 = vcmp.eq.f32.partialorder %v2810, 8.507059e+37
      %v2812 = vand.u32 %v2796, 2147483648
      %v2813 = vor.u32 1.1754944e-38, %v2812
      %v2814 = vsel %vm2811, %v2813, %v2809
      %v2815 = vmul.f32 1.0, %v2814
      %v2816 = vrcp.pop %v2797
      %v2817 = vmul.f32 %v2797, %v2816
      %v2818 = vsub.f32 1.0, %v2817
      %v2819 = vmul.f32 %v2816, %v2818
      %v2820 = vadd.f32 %v2816, %v2819
      %vm2821 = vweird.f32 %v2797
      %vm2822 = vweird.f32 %v2816
      %vm2823 = vmor %vm2821, %vm2822
      %v2824 = vsel %vm2823, %v2816, %v2820
      %v2825 = vand.u32 2147483647, %v2797
      %vm2826 = vcmp.eq.f32.partialorder %v2825, 8.507059e+37
      %v2827 = vand.u32 %v2797, 2147483648
      %v2828 = vor.u32 1.1754944e-38, %v2827
      %v2829 = vsel %vm2826, %v2828, %v2824
      %v2830 = vmul.f32 1.0, %v2829
      %v2831 = vrcp.pop %v2798
      %v2832 = vmul.f32 %v2798, %v2831
      %v2833 = vsub.f32 1.0, %v2832
      %v2834 = vmul.f32 %v2831, %v2833
      %v2835 = vadd.f32 %v2831, %v2834
      %vm2836 = vweird.f32 %v2798
      %vm2837 = vweird.f32 %v2831
      %vm2838 = vmor %vm2836, %vm2837
      %v2839 = vsel %vm2838, %v2831, %v2835
      %v2840 = vand.u32 2147483647, %v2798
      %vm2841 = vcmp.eq.f32.partialorder %v2840, 8.507059e+37
      %v2842 = vand.u32 %v2798, 2147483648
      %v2843 = vor.u32 1.1754944e-38, %v2842
      %v2844 = vsel %vm2841, %v2843, %v2839
      %v2845 = vmul.f32 1.0, %v2844
      %v2846 = vrcp.pop %v2799
      %v2847 = vmul.f32 %v2799, %v2846
      %v2848 = vsub.f32 1.0, %v2847
      %v2849 = vmul.f32 %v2846, %v2848
      %v2850 = vadd.f32 %v2846, %v2849
      %vm2851 = vweird.f32 %v2799
      %vm2852 = vweird.f32 %v2846
      %vm2853 = vmor %vm2851, %vm2852
      %v2854 = vsel %vm2853, %v2846, %v2850
      %v2855 = vand.u32 2147483647, %v2799
      %vm2856 = vcmp.eq.f32.partialorder %v2855, 8.507059e+37
      %v2857 = vand.u32 %v2799, 2147483648
      %v2858 = vor.u32 1.1754944e-38, %v2857
      %v2859 = vsel %vm2856, %v2858, %v2854
      %v2860 = vmul.f32 1.0, %v2859
      %v2861 = vrcp.pop %v2800
      %v2862 = vmul.f32 %v2800, %v2861
      %v2863 = vsub.f32 1.0, %v2862
      %v2864 = vmul.f32 %v2861, %v2863
      %v2865 = vadd.f32 %v2861, %v2864
      %vm2866 = vweird.f32 %v2800
      %vm2867 = vweird.f32 %v2861
      %vm2868 = vmor %vm2866, %vm2867
      %v2869 = vsel %vm2868, %v2861, %v2865
      %v2870 = vand.u32 2147483647, %v2800
      %vm2871 = vcmp.eq.f32.partialorder %v2870, 8.507059e+37
      %v2872 = vand.u32 %v2800, 2147483648
      %v2873 = vor.u32 1.1754944e-38, %v2872
      %v2874 = vsel %vm2871, %v2873, %v2869
      %v2875 = vmul.f32 1.0, %v2874
      %v2876 = vmul.f32 %v2771, %v2815
      %v2877 = vmul.f32 %v2772, %v2830
      %v2878 = vmul.f32 %v2773, %v2845
      %v2879 = vmul.f32 %v2774, %v2860
      %v2880 = vmul.f32 %v2775, %v2875
      %v2881 = vld [vmem:[%s14] sm:$0xff]
      %v2882 = vmul.f32 %v2881, %v2210
      %v2883 = vld [vmem:[%s16] sm:$0xff]
      %v2884 = vld [vmem:[%s16 + $0x8] sm:$0xff]
      %s2885 = scalar_lea.vmem %s16, 16
      %v2886 = vld [vmem:[%s2885] sm:$0xff]
      %v2887 = vld [vmem:[%s2885 + $0x8] sm:$0xff]
      %v2889 = vsel %vm865, %v2886, 0
      %v2892 = vsel %vm865, %v2887, 0
      %2894 = vmatpush.msra.mxu0 0.0
      %2895 = vmatpush.msra.mxu0 0.0
      %2896 = vmatpush.msra.mxu0 0.0
      %2897 = vmatpush.msra.mxu0 0.0
      %2898 = vmatpush.msra.mxu0 0.0
      %2899 = vmatpush.msra.mxu0 0.0
      %2900 = vmatpush.msra.mxu0 0.0
      %2901 = vmatpush.msra.mxu0 0.0
      %2902 = vmatpush.msra.mxu0 0.0
      %2903 = vmatpush.msra.mxu0 0.0
      %2904 = vmatpush.msra.mxu0 0.0
      %2905 = vmatpush.msra.mxu0 0.0
      %2906 = vmatpush.msra.mxu0 0.0
      %2907 = vmatpush.msra.mxu0 0.0
      %2908 = vmatpush.msra.mxu0 0.0
      %2909 = vmatpush.msra.mxu0 %v2509
      %2910 = vmatmul.f32.gmra.mxu0 %v2889
      %v2911 = vpop.f32.mrf.mxu0
      %v2912 = vadd.f32 0.0, %v2911
      %2913 = vmatmul.f32.gmra.mxu0 %v2892
      %v2914 = vpop.f32.mrf.mxu0
      %v2915 = vadd.f32 0.0, %v2914
      %2916 = vdwg.mxu0
      %2917 = vmatpush.msra.mxu0 0.0
      %2918 = vmatpush.msra.mxu0 0.0
      %2919 = vmatpush.msra.mxu0 0.0
      %2920 = vmatpush.msra.mxu0 0.0
      %2921 = vmatpush.msra.mxu0 0.0
      %2922 = vmatpush.msra.mxu0 0.0
      %2923 = vmatpush.msra.mxu0 0.0
      %2924 = vmatpush.msra.mxu0 0.0
      %2925 = vmatpush.msra.mxu0 0.0
      %2926 = vmatpush.msra.mxu0 0.0
      %2927 = vmatpush.msra.mxu0 0.0
      %2928 = vmatpush.msra.mxu0 0.0
      %2929 = vmatpush.msra.mxu0 0.0
      %2930 = vmatpush.msra.mxu0 0.0
      %2931 = vmatpush.msra.mxu0 0.0
      %2932 = vmatpush.msra.mxu0 %v2510
      %2933 = vmatmul.f32.gmra.mxu0 %v2889
      %v2934 = vpop.f32.mrf.mxu0
      %v2935 = vadd.f32 0.0, %v2934
      %2936 = vmatmul.f32.gmra.mxu0 %v2892
      %v2937 = vpop.f32.mrf.mxu0
      %v2938 = vadd.f32 0.0, %v2937
      %2939 = vdwg.mxu0
      %2940 = vmatpush.msra.mxu0 0.0
      %2941 = vmatpush.msra.mxu0 0.0
      %2942 = vmatpush.msra.mxu0 0.0
      %2943 = vmatpush.msra.mxu0 0.0
      %2944 = vmatpush.msra.mxu0 0.0
      %2945 = vmatpush.msra.mxu0 0.0
      %2946 = vmatpush.msra.mxu0 0.0
      %2947 = vmatpush.msra.mxu0 0.0
      %2948 = vmatpush.msra.mxu0 0.0
      %2949 = vmatpush.msra.mxu0 0.0
      %2950 = vmatpush.msra.mxu0 0.0
      %2951 = vmatpush.msra.mxu0 0.0
      %2952 = vmatpush.msra.mxu0 0.0
      %2953 = vmatpush.msra.mxu0 0.0
      %2954 = vmatpush.msra.mxu0 0.0
      %2955 = vmatpush.msra.mxu0 %v2511
      %2956 = vmatmul.f32.gmra.mxu0 %v2889
      %v2957 = vpop.f32.mrf.mxu0
      %v2958 = vadd.f32 0.0, %v2957
      %2959 = vmatmul.f32.gmra.mxu0 %v2892
      %v2960 = vpop.f32.mrf.mxu0
      %v2961 = vadd.f32 0.0, %v2960
      %2962 = vdwg.mxu0
      %v2964 = vsel %vm865, %v2883, 0
      %v2967 = vsel %vm865, %v2884, 0
      %2969 = vmatpush.msra.mxu0 0.0
      %2970 = vmatpush.msra.mxu0 0.0
      %2971 = vmatpush.msra.mxu0 0.0
      %2972 = vmatpush.msra.mxu0 0.0
      %2973 = vmatpush.msra.mxu0 0.0
      %2974 = vmatpush.msra.mxu0 0.0
      %2975 = vmatpush.msra.mxu0 0.0
      %2976 = vmatpush.msra.mxu0 0.0
      %2977 = vmatpush.msra.mxu0 0.0
      %2978 = vmatpush.msra.mxu0 0.0
      %2979 = vmatpush.msra.mxu0 0.0
      %2980 = vmatpush.msra.mxu0 0.0
      %2981 = vmatpush.msra.mxu0 0.0
      %2982 = vmatpush.msra.mxu0 0.0
      %2983 = vmatpush.msra.mxu0 0.0
      %2984 = vmatpush.msra.mxu0 %v2508
      %2985 = vmatmul.f32.gmra.mxu0 %v2964
      %v2986 = vpop.f32.mrf.mxu0
      %v2987 = vadd.f32 %v2912, %v2986
      %2988 = vmatmul.f32.gmra.mxu0 %v2967
      %v2989 = vpop.f32.mrf.mxu0
      %v2990 = vadd.f32 %v2915, %v2989
      %2991 = vdwg.mxu0
      %2992 = vmatpush.msra.mxu0 0.0
      %2993 = vmatpush.msra.mxu0 0.0
      %2994 = vmatpush.msra.mxu0 0.0
      %2995 = vmatpush.msra.mxu0 0.0
      %2996 = vmatpush.msra.mxu0 0.0
      %2997 = vmatpush.msra.mxu0 0.0
      %2998 = vmatpush.msra.mxu0 0.0
      %2999 = vmatpush.msra.mxu0 0.0
      %3000 = vmatpush.msra.mxu0 0.0
      %3001 = vmatpush.msra.mxu0 0.0
      %3002 = vmatpush.msra.mxu0 0.0
      %3003 = vmatpush.msra.mxu0 0.0
      %3004 = vmatpush.msra.mxu0 0.0
      %3005 = vmatpush.msra.mxu0 0.0
      %3006 = vmatpush.msra.mxu0 0.0
      %3007 = vmatpush.msra.mxu0 %v2509
      %3008 = vmatmul.f32.gmra.mxu0 %v2964
      %v3009 = vpop.f32.mrf.mxu0
      %v3010 = vadd.f32 %v2935, %v3009
      %3011 = vmatmul.f32.gmra.mxu0 %v2967
      %v3012 = vpop.f32.mrf.mxu0
      %v3013 = vadd.f32 %v2938, %v3012
      %3014 = vdwg.mxu0
      %3015 = vmatpush.msra.mxu0 0.0
      %3016 = vmatpush.msra.mxu0 0.0
      %3017 = vmatpush.msra.mxu0 0.0
      %3018 = vmatpush.msra.mxu0 0.0
      %3019 = vmatpush.msra.mxu0 0.0
      %3020 = vmatpush.msra.mxu0 0.0
      %3021 = vmatpush.msra.mxu0 0.0
      %3022 = vmatpush.msra.mxu0 0.0
      %3023 = vmatpush.msra.mxu0 0.0
      %3024 = vmatpush.msra.mxu0 0.0
      %3025 = vmatpush.msra.mxu0 0.0
      %3026 = vmatpush.msra.mxu0 0.0
      %3027 = vmatpush.msra.mxu0 0.0
      %3028 = vmatpush.msra.mxu0 0.0
      %3029 = vmatpush.msra.mxu0 0.0
      %3030 = vmatpush.msra.mxu0 %v2510
      %3031 = vmatmul.f32.gmra.mxu0 %v2964
      %v3032 = vpop.f32.mrf.mxu0
      %v3033 = vadd.f32 %v2958, %v3032
      %3034 = vmatmul.f32.gmra.mxu0 %v2967
      %v3035 = vpop.f32.mrf.mxu0
      %v3036 = vadd.f32 %v2961, %v3035
      %3037 = vdwg.mxu0
      %v3038 = vld [vmem:[%s17] sm:$0xff]
      %v3039 = vld [vmem:[%s17 + $0x8] sm:$0xff]
      %3041 = vset.pattern.permute.xlu0 0
      %3042 = vperm.xlu0 %3041, %v3038
      %v3043 = vpop.permute.xlu0 %3042
      %3046 = vset.pattern.permute.xlu0 0
      %3047 = vperm.xlu0 %3046, %v3039
      %v3048 = vpop.permute.xlu0 %3047
      %v3050 = vadd.f32 %v2987, %v3043
      %v3051 = vadd.f32 %v3010, %v3043
      %v3052 = vadd.f32 %v3033, %v3043
      %v3053 = vadd.f32 %v2990, %v3048
      %v3054 = vadd.f32 %v3013, %v3048
      %v3055 = vadd.f32 %v3036, %v3048
      %v3056 = vxor.u32 %v3053, 2147483648
      %v3057 = vxor.u32 %v3054, 2147483648
      %v3058 = vxor.u32 %v3055, 2147483648
      %v3059 = vmul.f32 %v3056, 1.442695
      %v3060 = vpow.pop %v3059
      %v3061 = vmul.f32 %v3057, 1.442695
      %v3062 = vpow.pop %v3061
      %v3063 = vmul.f32 %v3058, 1.442695
      %v3064 = vpow.pop %v3063
      %v3065 = vadd.f32 %v3060, 1.0
      %v3066 = vadd.f32 %v3062, 1.0
      %v3067 = vadd.f32 %v3064, 1.0
      %v3068 = vrcp.pop %v3065
      %v3069 = vmul.f32 %v3065, %v3068
      %v3070 = vsub.f32 1.0, %v3069
      %v3071 = vmul.f32 %v3068, %v3070
      %v3072 = vadd.f32 %v3068, %v3071
      %vm3073 = vweird.f32 %v3065
      %vm3074 = vweird.f32 %v3068
      %vm3075 = vmor %vm3073, %vm3074
      %v3076 = vsel %vm3075, %v3068, %v3072
      %v3077 = vand.u32 2147483647, %v3065
      %vm3078 = vcmp.eq.f32.partialorder %v3077, 8.507059e+37
      %v3079 = vand.u32 %v3065, 2147483648
      %v3080 = vor.u32 1.1754944e-38, %v3079
      %v3081 = vsel %vm3078, %v3080, %v3076
      %v3082 = vmul.f32 1.0, %v3081
      %v3083 = vrcp.pop %v3066
      %v3084 = vmul.f32 %v3066, %v3083
      %v3085 = vsub.f32 1.0, %v3084
      %v3086 = vmul.f32 %v3083, %v3085
      %v3087 = vadd.f32 %v3083, %v3086
      %vm3088 = vweird.f32 %v3066
      %vm3089 = vweird.f32 %v3083
      %vm3090 = vmor %vm3088, %vm3089
      %v3091 = vsel %vm3090, %v3083, %v3087
      %v3092 = vand.u32 2147483647, %v3066
      %vm3093 = vcmp.eq.f32.partialorder %v3092, 8.507059e+37
      %v3094 = vand.u32 %v3066, 2147483648
      %v3095 = vor.u32 1.1754944e-38, %v3094
      %v3096 = vsel %vm3093, %v3095, %v3091
      %v3097 = vmul.f32 1.0, %v3096
      %v3098 = vrcp.pop %v3067
      %v3099 = vmul.f32 %v3067, %v3098
      %v3100 = vsub.f32 1.0, %v3099
      %v3101 = vmul.f32 %v3098, %v3100
      %v3102 = vadd.f32 %v3098, %v3101
      %vm3103 = vweird.f32 %v3067
      %vm3104 = vweird.f32 %v3098
      %vm3105 = vmor %vm3103, %vm3104
      %v3106 = vsel %vm3105, %v3098, %v3102
      %v3107 = vand.u32 2147483647, %v3067
      %vm3108 = vcmp.eq.f32.partialorder %v3107, 8.507059e+37
      %v3109 = vand.u32 %v3067, 2147483648
      %v3110 = vor.u32 1.1754944e-38, %v3109
      %v3111 = vsel %vm3108, %v3110, %v3106
      %v3112 = vmul.f32 1.0, %v3111
      %v3113 = vmul.f32 %v3050, %v3082
      %v3114 = vmul.f32 %v3051, %v3097
      %v3115 = vmul.f32 %v3052, %v3112
      %v3116 = vld [vmem:[%s18] sm:$0xff]
      %v3117 = vld [vmem:[%s18 + $0x8] sm:$0xff]
      %s3118 = scalar_lea.vmem %s18, 16
      %v3119 = vld [vmem:[%s3118] sm:$0xff]
      %v3120 = vld [vmem:[%s3118 + $0x8] sm:$0xff]
      %v3122 = vsel %vm865, %v3119, 0
      %v3125 = vsel %vm865, %v3120, 0
      %3127 = vmatpush.msra.mxu0 0.0
      %3128 = vmatpush.msra.mxu0 0.0
      %3129 = vmatpush.msra.mxu0 0.0
      %3130 = vmatpush.msra.mxu0 0.0
      %3131 = vmatpush.msra.mxu0 0.0
      %3132 = vmatpush.msra.mxu0 0.0
      %3133 = vmatpush.msra.mxu0 0.0
      %3134 = vmatpush.msra.mxu0 0.0
      %3135 = vmatpush.msra.mxu0 0.0
      %3136 = vmatpush.msra.mxu0 0.0
      %3137 = vmatpush.msra.mxu0 0.0
      %3138 = vmatpush.msra.mxu0 0.0
      %3139 = vmatpush.msra.mxu0 0.0
      %3140 = vmatpush.msra.mxu0 0.0
      %3141 = vmatpush.msra.mxu0 0.0
      %3142 = vmatpush.msra.mxu0 %v2877
      %3143 = vmatmul.f32.gmra.mxu0 %v3122
      %v3144 = vpop.f32.mrf.mxu0
      %v3145 = vadd.f32 0.0, %v3144
      %3146 = vmatmul.f32.gmra.mxu0 %v3125
      %v3147 = vpop.f32.mrf.mxu0
      %v3148 = vadd.f32 0.0, %v3147
      %3149 = vdwg.mxu0
      %3150 = vmatpush.msra.mxu0 0.0
      %3151 = vmatpush.msra.mxu0 0.0
      %3152 = vmatpush.msra.mxu0 0.0
      %3153 = vmatpush.msra.mxu0 0.0
      %3154 = vmatpush.msra.mxu0 0.0
      %3155 = vmatpush.msra.mxu0 0.0
      %3156 = vmatpush.msra.mxu0 0.0
      %3157 = vmatpush.msra.mxu0 0.0
      %3158 = vmatpush.msra.mxu0 0.0
      %3159 = vmatpush.msra.mxu0 0.0
      %3160 = vmatpush.msra.mxu0 0.0
      %3161 = vmatpush.msra.mxu0 0.0
      %3162 = vmatpush.msra.mxu0 0.0
      %3163 = vmatpush.msra.mxu0 0.0
      %3164 = vmatpush.msra.mxu0 0.0
      %3165 = vmatpush.msra.mxu0 %v2878
      %3166 = vmatmul.f32.gmra.mxu0 %v3122
      %v3167 = vpop.f32.mrf.mxu0
      %v3168 = vadd.f32 0.0, %v3167
      %3169 = vmatmul.f32.gmra.mxu0 %v3125
      %v3170 = vpop.f32.mrf.mxu0
      %v3171 = vadd.f32 0.0, %v3170
      %3172 = vdwg.mxu0
      %3173 = vmatpush.msra.mxu0 0.0
      %3174 = vmatpush.msra.mxu0 0.0
      %3175 = vmatpush.msra.mxu0 0.0
      %3176 = vmatpush.msra.mxu0 0.0
      %3177 = vmatpush.msra.mxu0 0.0
      %3178 = vmatpush.msra.mxu0 0.0
      %3179 = vmatpush.msra.mxu0 0.0
      %3180 = vmatpush.msra.mxu0 0.0
      %3181 = vmatpush.msra.mxu0 0.0
      %3182 = vmatpush.msra.mxu0 0.0
      %3183 = vmatpush.msra.mxu0 0.0
      %3184 = vmatpush.msra.mxu0 0.0
      %3185 = vmatpush.msra.mxu0 0.0
      %3186 = vmatpush.msra.mxu0 0.0
      %3187 = vmatpush.msra.mxu0 0.0
      %3188 = vmatpush.msra.mxu0 %v2879
      %3189 = vmatmul.f32.gmra.mxu0 %v3122
      %v3190 = vpop.f32.mrf.mxu0
      %v3191 = vadd.f32 0.0, %v3190
      %3192 = vmatmul.f32.gmra.mxu0 %v3125
      %v3193 = vpop.f32.mrf.mxu0
      %v3194 = vadd.f32 0.0, %v3193
      %3195 = vdwg.mxu0
      %3196 = vmatpush.msra.mxu0 0.0
      %3197 = vmatpush.msra.mxu0 0.0
      %3198 = vmatpush.msra.mxu0 0.0
      %3199 = vmatpush.msra.mxu0 0.0
      %3200 = vmatpush.msra.mxu0 0.0
      %3201 = vmatpush.msra.mxu0 0.0
      %3202 = vmatpush.msra.mxu0 0.0
      %3203 = vmatpush.msra.mxu0 0.0
      %3204 = vmatpush.msra.mxu0 0.0
      %3205 = vmatpush.msra.mxu0 0.0
      %3206 = vmatpush.msra.mxu0 0.0
      %3207 = vmatpush.msra.mxu0 0.0
      %3208 = vmatpush.msra.mxu0 0.0
      %3209 = vmatpush.msra.mxu0 0.0
      %3210 = vmatpush.msra.mxu0 0.0
      %3211 = vmatpush.msra.mxu0 %v2880
      %3212 = vmatmul.f32.gmra.mxu0 %v3122
      %v3213 = vpop.f32.mrf.mxu0
      %v3214 = vadd.f32 0.0, %v3213
      %3215 = vmatmul.f32.gmra.mxu0 %v3125
      %v3216 = vpop.f32.mrf.mxu0
      %v3217 = vadd.f32 0.0, %v3216
      %3218 = vdwg.mxu0
      %v3220 = vsel %vm865, %v3116, 0
      %v3223 = vsel %vm865, %v3117, 0
      %3225 = vmatpush.msra.mxu0 0.0
      %3226 = vmatpush.msra.mxu0 0.0
      %3227 = vmatpush.msra.mxu0 0.0
      %3228 = vmatpush.msra.mxu0 0.0
      %3229 = vmatpush.msra.mxu0 0.0
      %3230 = vmatpush.msra.mxu0 0.0
      %3231 = vmatpush.msra.mxu0 0.0
      %3232 = vmatpush.msra.mxu0 0.0
      %3233 = vmatpush.msra.mxu0 0.0
      %3234 = vmatpush.msra.mxu0 0.0
      %3235 = vmatpush.msra.mxu0 0.0
      %3236 = vmatpush.msra.mxu0 0.0
      %3237 = vmatpush.msra.mxu0 0.0
      %3238 = vmatpush.msra.mxu0 0.0
      %3239 = vmatpush.msra.mxu0 0.0
      %3240 = vmatpush.msra.mxu0 %v2876
      %3241 = vmatmul.f32.gmra.mxu0 %v3220
      %v3242 = vpop.f32.mrf.mxu0
      %v3243 = vadd.f32 %v3145, %v3242
      %3244 = vmatmul.f32.gmra.mxu0 %v3223
      %v3245 = vpop.f32.mrf.mxu0
      %v3246 = vadd.f32 %v3148, %v3245
      %3247 = vdwg.mxu0
      %3248 = vmatpush.msra.mxu0 0.0
      %3249 = vmatpush.msra.mxu0 0.0
      %3250 = vmatpush.msra.mxu0 0.0
      %3251 = vmatpush.msra.mxu0 0.0
      %3252 = vmatpush.msra.mxu0 0.0
      %3253 = vmatpush.msra.mxu0 0.0
      %3254 = vmatpush.msra.mxu0 0.0
      %3255 = vmatpush.msra.mxu0 0.0
      %3256 = vmatpush.msra.mxu0 0.0
      %3257 = vmatpush.msra.mxu0 0.0
      %3258 = vmatpush.msra.mxu0 0.0
      %3259 = vmatpush.msra.mxu0 0.0
      %3260 = vmatpush.msra.mxu0 0.0
      %3261 = vmatpush.msra.mxu0 0.0
      %3262 = vmatpush.msra.mxu0 0.0
      %3263 = vmatpush.msra.mxu0 %v2877
      %3264 = vmatmul.f32.gmra.mxu0 %v3220
      %v3265 = vpop.f32.mrf.mxu0
      %v3266 = vadd.f32 %v3168, %v3265
      %3267 = vmatmul.f32.gmra.mxu0 %v3223
      %v3268 = vpop.f32.mrf.mxu0
      %v3269 = vadd.f32 %v3171, %v3268
      %3270 = vdwg.mxu0
      %3271 = vmatpush.msra.mxu0 0.0
      %3272 = vmatpush.msra.mxu0 0.0
      %3273 = vmatpush.msra.mxu0 0.0
      %3274 = vmatpush.msra.mxu0 0.0
      %3275 = vmatpush.msra.mxu0 0.0
      %3276 = vmatpush.msra.mxu0 0.0
      %3277 = vmatpush.msra.mxu0 0.0
      %3278 = vmatpush.msra.mxu0 0.0
      %3279 = vmatpush.msra.mxu0 0.0
      %3280 = vmatpush.msra.mxu0 0.0
      %3281 = vmatpush.msra.mxu0 0.0
      %3282 = vmatpush.msra.mxu0 0.0
      %3283 = vmatpush.msra.mxu0 0.0
      %3284 = vmatpush.msra.mxu0 0.0
      %3285 = vmatpush.msra.mxu0 0.0
      %3286 = vmatpush.msra.mxu0 %v2878
      %3287 = vmatmul.f32.gmra.mxu0 %v3220
      %v3288 = vpop.f32.mrf.mxu0
      %v3289 = vadd.f32 %v3191, %v3288
      %3290 = vmatmul.f32.gmra.mxu0 %v3223
      %v3291 = vpop.f32.mrf.mxu0
      %v3292 = vadd.f32 %v3194, %v3291
      %3293 = vdwg.mxu0
      %3294 = vmatpush.msra.mxu0 0.0
      %3295 = vmatpush.msra.mxu0 0.0
      %3296 = vmatpush.msra.mxu0 0.0
      %3297 = vmatpush.msra.mxu0 0.0
      %3298 = vmatpush.msra.mxu0 0.0
      %3299 = vmatpush.msra.mxu0 0.0
      %3300 = vmatpush.msra.mxu0 0.0
      %3301 = vmatpush.msra.mxu0 0.0
      %3302 = vmatpush.msra.mxu0 0.0
      %3303 = vmatpush.msra.mxu0 0.0
      %3304 = vmatpush.msra.mxu0 0.0
      %3305 = vmatpush.msra.mxu0 0.0
      %3306 = vmatpush.msra.mxu0 0.0
      %3307 = vmatpush.msra.mxu0 0.0
      %3308 = vmatpush.msra.mxu0 0.0
      %3309 = vmatpush.msra.mxu0 %v2879
      %3310 = vmatmul.f32.gmra.mxu0 %v3220
      %v3311 = vpop.f32.mrf.mxu0
      %v3312 = vadd.f32 %v3214, %v3311
      %3313 = vmatmul.f32.gmra.mxu0 %v3223
      %v3314 = vpop.f32.mrf.mxu0
      %v3315 = vadd.f32 %v3217, %v3314
      %3316 = vdwg.mxu0
      %v3317 = vld [vmem:[%s19] sm:$0xff]
      %v3318 = vld [vmem:[%s19 + $0x8] sm:$0xff]
      %3320 = vset.pattern.permute.xlu0 0
      %3321 = vperm.xlu0 %3320, %v3317
      %v3322 = vpop.permute.xlu0 %3321
      %3325 = vset.pattern.permute.xlu0 0
      %3326 = vperm.xlu0 %3325, %v3318
      %v3327 = vpop.permute.xlu0 %3326
      %v3329 = vadd.f32 %v3243, %v3322
      %v3330 = vadd.f32 %v3266, %v3322
      %v3331 = vadd.f32 %v3289, %v3322
      %v3332 = vadd.f32 %v3312, %v3322
      %v3333 = vadd.f32 %v3246, %v3327
      %v3334 = vadd.f32 %v3269, %v3327
      %v3335 = vadd.f32 %v3292, %v3327
      %v3336 = vadd.f32 %v3315, %v3327
      %v3337 = vxor.u32 %v3333, 2147483648
      %v3338 = vxor.u32 %v3334, 2147483648
      %v3339 = vxor.u32 %v3335, 2147483648
      %v3340 = vxor.u32 %v3336, 2147483648
      %v3341 = vmul.f32 %v3337, 1.442695
      %v3342 = vpow.pop %v3341
      %v3343 = vmul.f32 %v3338, 1.442695
      %v3344 = vpow.pop %v3343
      %v3345 = vmul.f32 %v3339, 1.442695
      %v3346 = vpow.pop %v3345
      %v3347 = vmul.f32 %v3340, 1.442695
      %v3348 = vpow.pop %v3347
      %v3349 = vadd.f32 %v3342, 1.0
      %v3350 = vadd.f32 %v3344, 1.0
      %v3351 = vadd.f32 %v3346, 1.0
      %v3352 = vadd.f32 %v3348, 1.0
      %v3353 = vrcp.pop %v3349
      %v3354 = vmul.f32 %v3349, %v3353
      %v3355 = vsub.f32 1.0, %v3354
      %v3356 = vmul.f32 %v3353, %v3355
      %v3357 = vadd.f32 %v3353, %v3356
      %vm3358 = vweird.f32 %v3349
      %vm3359 = vweird.f32 %v3353
      %vm3360 = vmor %vm3358, %vm3359
      %v3361 = vsel %vm3360, %v3353, %v3357
      %v3362 = vand.u32 2147483647, %v3349
      %vm3363 = vcmp.eq.f32.partialorder %v3362, 8.507059e+37
      %v3364 = vand.u32 %v3349, 2147483648
      %v3365 = vor.u32 1.1754944e-38, %v3364
      %v3366 = vsel %vm3363, %v3365, %v3361
      %v3367 = vmul.f32 1.0, %v3366
      %v3368 = vrcp.pop %v3350
      %v3369 = vmul.f32 %v3350, %v3368
      %v3370 = vsub.f32 1.0, %v3369
      %v3371 = vmul.f32 %v3368, %v3370
      %v3372 = vadd.f32 %v3368, %v3371
      %vm3373 = vweird.f32 %v3350
      %vm3374 = vweird.f32 %v3368
      %vm3375 = vmor %vm3373, %vm3374
      %v3376 = vsel %vm3375, %v3368, %v3372
      %v3377 = vand.u32 2147483647, %v3350
      %vm3378 = vcmp.eq.f32.partialorder %v3377, 8.507059e+37
      %v3379 = vand.u32 %v3350, 2147483648
      %v3380 = vor.u32 1.1754944e-38, %v3379
      %v3381 = vsel %vm3378, %v3380, %v3376
      %v3382 = vmul.f32 1.0, %v3381
      %v3383 = vrcp.pop %v3351
      %v3384 = vmul.f32 %v3351, %v3383
      %v3385 = vsub.f32 1.0, %v3384
      %v3386 = vmul.f32 %v3383, %v3385
      %v3387 = vadd.f32 %v3383, %v3386
      %vm3388 = vweird.f32 %v3351
      %vm3389 = vweird.f32 %v3383
      %vm3390 = vmor %vm3388, %vm3389
      %v3391 = vsel %vm3390, %v3383, %v3387
      %v3392 = vand.u32 2147483647, %v3351
      %vm3393 = vcmp.eq.f32.partialorder %v3392, 8.507059e+37
      %v3394 = vand.u32 %v3351, 2147483648
      %v3395 = vor.u32 1.1754944e-38, %v3394
      %v3396 = vsel %vm3393, %v3395, %v3391
      %v3397 = vmul.f32 1.0, %v3396
      %v3398 = vrcp.pop %v3352
      %v3399 = vmul.f32 %v3352, %v3398
      %v3400 = vsub.f32 1.0, %v3399
      %v3401 = vmul.f32 %v3398, %v3400
      %v3402 = vadd.f32 %v3398, %v3401
      %vm3403 = vweird.f32 %v3352
      %vm3404 = vweird.f32 %v3398
      %vm3405 = vmor %vm3403, %vm3404
      %v3406 = vsel %vm3405, %v3398, %v3402
      %v3407 = vand.u32 2147483647, %v3352
      %vm3408 = vcmp.eq.f32.partialorder %v3407, 8.507059e+37
      %v3409 = vand.u32 %v3352, 2147483648
      %v3410 = vor.u32 1.1754944e-38, %v3409
      %v3411 = vsel %vm3408, %v3410, %v3406
      %v3412 = vmul.f32 1.0, %v3411
      %v3413 = vmul.f32 %v3329, %v3367
      %v3414 = vmul.f32 %v3330, %v3382
      %v3415 = vmul.f32 %v3331, %v3397
      %v3416 = vmul.f32 %v3332, %v3412
      %v3417 = vld [vmem:[%s20] sm:$0xff]
      %v3419 = vsel %vm865, %v3417, 0
      %3421 = vmatpush.msra.mxu0 0.0
      %3422 = vmatpush.msra.mxu0 0.0
      %3423 = vmatpush.msra.mxu0 0.0
      %3424 = vmatpush.msra.mxu0 0.0
      %3425 = vmatpush.msra.mxu0 0.0
      %3426 = vmatpush.msra.mxu0 0.0
      %3427 = vmatpush.msra.mxu0 0.0
      %3428 = vmatpush.msra.mxu0 0.0
      %3429 = vmatpush.msra.mxu0 0.0
      %3430 = vmatpush.msra.mxu0 0.0
      %3431 = vmatpush.msra.mxu0 0.0
      %3432 = vmatpush.msra.mxu0 0.0
      %3433 = vmatpush.msra.mxu0 0.0
      %3434 = vmatpush.msra.mxu0 0.0
      %3435 = vmatpush.msra.mxu0 0.0
      %3436 = vmatpush.msra.mxu0 %v2882
      %3437 = vmatmul.f32.gmra.mxu0 %v3419
      %v3438 = vpop.f32.mrf.mxu0
      %v3439 = vadd.f32 0.0, %v3438
      %3440 = vdwg.mxu0
      %3441 = vmatpush.msra.mxu0 0.0
      %3442 = vmatpush.msra.mxu0 0.0
      %3443 = vmatpush.msra.mxu0 0.0
      %3444 = vmatpush.msra.mxu0 0.0
      %3445 = vmatpush.msra.mxu0 0.0
      %3446 = vmatpush.msra.mxu0 0.0
      %3447 = vmatpush.msra.mxu0 0.0
      %3448 = vmatpush.msra.mxu0 0.0
      %3449 = vmatpush.msra.mxu0 0.0
      %3450 = vmatpush.msra.mxu0 0.0
      %3451 = vmatpush.msra.mxu0 0.0
      %3452 = vmatpush.msra.mxu0 0.0
      %3453 = vmatpush.msra.mxu0 0.0
      %3454 = vmatpush.msra.mxu0 0.0
      %3455 = vmatpush.msra.mxu0 0.0
      %3456 = vmatpush.msra.mxu0 %v3113
      %3457 = vmatmul.f32.gmra.mxu0 %v3419
      %v3458 = vpop.f32.mrf.mxu0
      %v3459 = vadd.f32 0.0, %v3458
      %3460 = vdwg.mxu0
      %3461 = vmatpush.msra.mxu0 0.0
      %3462 = vmatpush.msra.mxu0 0.0
      %3463 = vmatpush.msra.mxu0 0.0
      %3464 = vmatpush.msra.mxu0 0.0
      %3465 = vmatpush.msra.mxu0 0.0
      %3466 = vmatpush.msra.mxu0 0.0
      %3467 = vmatpush.msra.mxu0 0.0
      %3468 = vmatpush.msra.mxu0 0.0
      %3469 = vmatpush.msra.mxu0 0.0
      %3470 = vmatpush.msra.mxu0 0.0
      %3471 = vmatpush.msra.mxu0 0.0
      %3472 = vmatpush.msra.mxu0 0.0
      %3473 = vmatpush.msra.mxu0 0.0
      %3474 = vmatpush.msra.mxu0 0.0
      %3475 = vmatpush.msra.mxu0 0.0
      %3476 = vmatpush.msra.mxu0 %v3114
      %3477 = vmatmul.f32.gmra.mxu0 %v3419
      %v3478 = vpop.f32.mrf.mxu0
      %v3479 = vadd.f32 0.0, %v3478
      %3480 = vdwg.mxu0
      %3481 = vmatpush.msra.mxu0 0.0
      %3482 = vmatpush.msra.mxu0 0.0
      %3483 = vmatpush.msra.mxu0 0.0
      %3484 = vmatpush.msra.mxu0 0.0
      %3485 = vmatpush.msra.mxu0 0.0
      %3486 = vmatpush.msra.mxu0 0.0
      %3487 = vmatpush.msra.mxu0 0.0
      %3488 = vmatpush.msra.mxu0 0.0
      %3489 = vmatpush.msra.mxu0 0.0
      %3490 = vmatpush.msra.mxu0 0.0
      %3491 = vmatpush.msra.mxu0 0.0
      %3492 = vmatpush.msra.mxu0 0.0
      %3493 = vmatpush.msra.mxu0 0.0
      %3494 = vmatpush.msra.mxu0 0.0
      %3495 = vmatpush.msra.mxu0 0.0
      %3496 = vmatpush.msra.mxu0 %v3115
      %3497 = vmatmul.f32.gmra.mxu0 %v3419
      %v3498 = vpop.f32.mrf.mxu0
      %v3499 = vadd.f32 0.0, %v3498
      %3500 = vdwg.mxu0
      %3501 = vmatpush.msra.mxu0 0.0
      %3502 = vmatpush.msra.mxu0 0.0
      %3503 = vmatpush.msra.mxu0 0.0
      %3504 = vmatpush.msra.mxu0 0.0
      %3505 = vmatpush.msra.mxu0 0.0
      %3506 = vmatpush.msra.mxu0 0.0
      %3507 = vmatpush.msra.mxu0 0.0
      %3508 = vmatpush.msra.mxu0 0.0
      %3509 = vmatpush.msra.mxu0 0.0
      %3510 = vmatpush.msra.mxu0 0.0
      %3511 = vmatpush.msra.mxu0 0.0
      %3512 = vmatpush.msra.mxu0 0.0
      %3513 = vmatpush.msra.mxu0 0.0
      %3514 = vmatpush.msra.mxu0 0.0
      %3515 = vmatpush.msra.mxu0 0.0
      %3516 = vmatpush.msra.mxu0 %v3413
      %3517 = vmatmul.f32.gmra.mxu0 %v3419
      %v3518 = vpop.f32.mrf.mxu0
      %v3519 = vadd.f32 0.0, %v3518
      %3520 = vdwg.mxu0
      %3521 = vmatpush.msra.mxu0 0.0
      %3522 = vmatpush.msra.mxu0 0.0
      %3523 = vmatpush.msra.mxu0 0.0
      %3524 = vmatpush.msra.mxu0 0.0
      %3525 = vmatpush.msra.mxu0 0.0
      %3526 = vmatpush.msra.mxu0 0.0
      %3527 = vmatpush.msra.mxu0 0.0
      %3528 = vmatpush.msra.mxu0 0.0
      %3529 = vmatpush.msra.mxu0 0.0
      %3530 = vmatpush.msra.mxu0 0.0
      %3531 = vmatpush.msra.mxu0 0.0
      %3532 = vmatpush.msra.mxu0 0.0
      %3533 = vmatpush.msra.mxu0 0.0
      %3534 = vmatpush.msra.mxu0 0.0
      %3535 = vmatpush.msra.mxu0 0.0
      %3536 = vmatpush.msra.mxu0 %v3414
      %3537 = vmatmul.f32.gmra.mxu0 %v3419
      %v3538 = vpop.f32.mrf.mxu0
      %v3539 = vadd.f32 0.0, %v3538
      %3540 = vdwg.mxu0
      %3541 = vmatpush.msra.mxu0 0.0
      %3542 = vmatpush.msra.mxu0 0.0
      %3543 = vmatpush.msra.mxu0 0.0
      %3544 = vmatpush.msra.mxu0 0.0
      %3545 = vmatpush.msra.mxu0 0.0
      %3546 = vmatpush.msra.mxu0 0.0
      %3547 = vmatpush.msra.mxu0 0.0
      %3548 = vmatpush.msra.mxu0 0.0
      %3549 = vmatpush.msra.mxu0 0.0
      %3550 = vmatpush.msra.mxu0 0.0
      %3551 = vmatpush.msra.mxu0 0.0
      %3552 = vmatpush.msra.mxu0 0.0
      %3553 = vmatpush.msra.mxu0 0.0
      %3554 = vmatpush.msra.mxu0 0.0
      %3555 = vmatpush.msra.mxu0 0.0
      %3556 = vmatpush.msra.mxu0 %v3415
      %3557 = vmatmul.f32.gmra.mxu0 %v3419
      %v3558 = vpop.f32.mrf.mxu0
      %v3559 = vadd.f32 0.0, %v3558
      %3560 = vdwg.mxu0
      %3561 = vmatpush.msra.mxu0 0.0
      %3562 = vmatpush.msra.mxu0 0.0
      %3563 = vmatpush.msra.mxu0 0.0
      %3564 = vmatpush.msra.mxu0 0.0
      %3565 = vmatpush.msra.mxu0 0.0
      %3566 = vmatpush.msra.mxu0 0.0
      %3567 = vmatpush.msra.mxu0 0.0
      %3568 = vmatpush.msra.mxu0 0.0
      %3569 = vmatpush.msra.mxu0 0.0
      %3570 = vmatpush.msra.mxu0 0.0
      %3571 = vmatpush.msra.mxu0 0.0
      %3572 = vmatpush.msra.mxu0 0.0
      %3573 = vmatpush.msra.mxu0 0.0
      %3574 = vmatpush.msra.mxu0 0.0
      %3575 = vmatpush.msra.mxu0 0.0
      %3576 = vmatpush.msra.mxu0 %v3416
      %3577 = vmatmul.f32.gmra.mxu0 %v3419
      %v3578 = vpop.f32.mrf.mxu0
      %v3579 = vadd.f32 0.0, %v3578
      %3580 = vdwg.mxu0
      %3581 = vmatpush.msra.mxu0 %v1926
      %3582 = vmatpush.msra.mxu0 %v1925
      %3583 = vmatpush.msra.mxu0 %v1924
      %3584 = vmatpush.msra.mxu0 %v1923
      %3585 = vmatpush.msra.mxu0 %v1922
      %3586 = vmatpush.msra.mxu0 %v1921
      %3587 = vmatpush.msra.mxu0 %v1920
      %3588 = vmatpush.msra.mxu0 %v1919
      %3589 = vmatpush.msra.mxu0 %v1918
      %3590 = vmatpush.msra.mxu0 %v1917
      %3591 = vmatpush.msra.mxu0 %v1916
      %3592 = vmatpush.msra.mxu0 %v1915
      %3593 = vmatpush.msra.mxu0 %v1914
      %3594 = vmatpush.msra.mxu0 %v1913
      %3595 = vmatpush.msra.mxu0 %v1912
      %3596 = vmatpush.msra.mxu0 %v1911
      %3597 = vmatmul.f32.gmra.mxu0 %v3439
      %v3598 = vpop.f32.mrf.mxu0
      %v3599 = vadd.f32 0.0, %v3598
      %3600 = vdwg.mxu0
      %3601 = vmatpush.msra.mxu0 %v1926
      %3602 = vmatpush.msra.mxu0 %v1925
      %3603 = vmatpush.msra.mxu0 %v1924
      %3604 = vmatpush.msra.mxu0 %v1923
      %3605 = vmatpush.msra.mxu0 %v1922
      %3606 = vmatpush.msra.mxu0 %v1921
      %3607 = vmatpush.msra.mxu0 %v1920
      %3608 = vmatpush.msra.mxu0 %v1919
      %3609 = vmatpush.msra.mxu0 %v1918
      %3610 = vmatpush.msra.mxu0 %v1917
      %3611 = vmatpush.msra.mxu0 %v1916
      %3612 = vmatpush.msra.mxu0 %v1915
      %3613 = vmatpush.msra.mxu0 %v1914
      %3614 = vmatpush.msra.mxu0 %v1913
      %3615 = vmatpush.msra.mxu0 %v1912
      %3616 = vmatpush.msra.mxu0 %v1911
      %3617 = vmatmul.f32.gmra.mxu0 %v3459
      %v3618 = vpop.f32.mrf.mxu0
      %v3619 = vadd.f32 0.0, %v3618
      %3620 = vdwg.mxu0
      %3621 = vmatpush.msra.mxu0 %v1926
      %3622 = vmatpush.msra.mxu0 %v1925
      %3623 = vmatpush.msra.mxu0 %v1924
      %3624 = vmatpush.msra.mxu0 %v1923
      %3625 = vmatpush.msra.mxu0 %v1922
      %3626 = vmatpush.msra.mxu0 %v1921
      %3627 = vmatpush.msra.mxu0 %v1920
      %3628 = vmatpush.msra.mxu0 %v1919
      %3629 = vmatpush.msra.mxu0 %v1918
      %3630 = vmatpush.msra.mxu0 %v1917
      %3631 = vmatpush.msra.mxu0 %v1916
      %3632 = vmatpush.msra.mxu0 %v1915
      %3633 = vmatpush.msra.mxu0 %v1914
      %3634 = vmatpush.msra.mxu0 %v1913
      %3635 = vmatpush.msra.mxu0 %v1912
      %3636 = vmatpush.msra.mxu0 %v1911
      %3637 = vmatmul.f32.gmra.mxu0 %v3479
      %v3638 = vpop.f32.mrf.mxu0
      %v3639 = vadd.f32 0.0, %v3638
      %3640 = vdwg.mxu0
      %3641 = vmatpush.msra.mxu0 %v1926
      %3642 = vmatpush.msra.mxu0 %v1925
      %3643 = vmatpush.msra.mxu0 %v1924
      %3644 = vmatpush.msra.mxu0 %v1923
      %3645 = vmatpush.msra.mxu0 %v1922
      %3646 = vmatpush.msra.mxu0 %v1921
      %3647 = vmatpush.msra.mxu0 %v1920
      %3648 = vmatpush.msra.mxu0 %v1919
      %3649 = vmatpush.msra.mxu0 %v1918
      %3650 = vmatpush.msra.mxu0 %v1917
      %3651 = vmatpush.msra.mxu0 %v1916
      %3652 = vmatpush.msra.mxu0 %v1915
      %3653 = vmatpush.msra.mxu0 %v1914
      %3654 = vmatpush.msra.mxu0 %v1913
      %3655 = vmatpush.msra.mxu0 %v1912
      %3656 = vmatpush.msra.mxu0 %v1911
      %3657 = vmatmul.f32.gmra.mxu0 %v3499
      %v3658 = vpop.f32.mrf.mxu0
      %v3659 = vadd.f32 0.0, %v3658
      %3660 = vdwg.mxu0
      %3661 = vmatpush.msra.mxu0 %v1926
      %3662 = vmatpush.msra.mxu0 %v1925
      %3663 = vmatpush.msra.mxu0 %v1924
      %3664 = vmatpush.msra.mxu0 %v1923
      %3665 = vmatpush.msra.mxu0 %v1922
      %3666 = vmatpush.msra.mxu0 %v1921
      %3667 = vmatpush.msra.mxu0 %v1920
      %3668 = vmatpush.msra.mxu0 %v1919
      %3669 = vmatpush.msra.mxu0 %v1918
      %3670 = vmatpush.msra.mxu0 %v1917
      %3671 = vmatpush.msra.mxu0 %v1916
      %3672 = vmatpush.msra.mxu0 %v1915
      %3673 = vmatpush.msra.mxu0 %v1914
      %3674 = vmatpush.msra.mxu0 %v1913
      %3675 = vmatpush.msra.mxu0 %v1912
      %3676 = vmatpush.msra.mxu0 %v1911
      %3677 = vmatmul.f32.gmra.mxu0 %v3519
      %v3678 = vpop.f32.mrf.mxu0
      %v3679 = vadd.f32 0.0, %v3678
      %3680 = vdwg.mxu0
      %3681 = vmatpush.msra.mxu0 %v1926
      %3682 = vmatpush.msra.mxu0 %v1925
      %3683 = vmatpush.msra.mxu0 %v1924
      %3684 = vmatpush.msra.mxu0 %v1923
      %3685 = vmatpush.msra.mxu0 %v1922
      %3686 = vmatpush.msra.mxu0 %v1921
      %3687 = vmatpush.msra.mxu0 %v1920
      %3688 = vmatpush.msra.mxu0 %v1919
      %3689 = vmatpush.msra.mxu0 %v1918
      %3690 = vmatpush.msra.mxu0 %v1917
      %3691 = vmatpush.msra.mxu0 %v1916
      %3692 = vmatpush.msra.mxu0 %v1915
      %3693 = vmatpush.msra.mxu0 %v1914
      %3694 = vmatpush.msra.mxu0 %v1913
      %3695 = vmatpush.msra.mxu0 %v1912
      %3696 = vmatpush.msra.mxu0 %v1911
      %3697 = vmatmul.f32.gmra.mxu0 %v3539
      %v3698 = vpop.f32.mrf.mxu0
      %v3699 = vadd.f32 0.0, %v3698
      %3700 = vdwg.mxu0
      %3701 = vmatpush.msra.mxu0 %v1926
      %3702 = vmatpush.msra.mxu0 %v1925
      %3703 = vmatpush.msra.mxu0 %v1924
      %3704 = vmatpush.msra.mxu0 %v1923
      %3705 = vmatpush.msra.mxu0 %v1922
      %3706 = vmatpush.msra.mxu0 %v1921
      %3707 = vmatpush.msra.mxu0 %v1920
      %3708 = vmatpush.msra.mxu0 %v1919
      %3709 = vmatpush.msra.mxu0 %v1918
      %3710 = vmatpush.msra.mxu0 %v1917
      %3711 = vmatpush.msra.mxu0 %v1916
      %3712 = vmatpush.msra.mxu0 %v1915
      %3713 = vmatpush.msra.mxu0 %v1914
      %3714 = vmatpush.msra.mxu0 %v1913
      %3715 = vmatpush.msra.mxu0 %v1912
      %3716 = vmatpush.msra.mxu0 %v1911
      %3717 = vmatmul.f32.gmra.mxu0 %v3559
      %v3718 = vpop.f32.mrf.mxu0
      %v3719 = vadd.f32 0.0, %v3718
      %3720 = vdwg.mxu0
      %3721 = vmatpush.msra.mxu0 %v1926
      %3722 = vmatpush.msra.mxu0 %v1925
      %3723 = vmatpush.msra.mxu0 %v1924
      %3724 = vmatpush.msra.mxu0 %v1923
      %3725 = vmatpush.msra.mxu0 %v1922
      %3726 = vmatpush.msra.mxu0 %v1921
      %3727 = vmatpush.msra.mxu0 %v1920
      %3728 = vmatpush.msra.mxu0 %v1919
      %3729 = vmatpush.msra.mxu0 %v1918
      %3730 = vmatpush.msra.mxu0 %v1917
      %3731 = vmatpush.msra.mxu0 %v1916
      %3732 = vmatpush.msra.mxu0 %v1915
      %3733 = vmatpush.msra.mxu0 %v1914
      %3734 = vmatpush.msra.mxu0 %v1913
      %3735 = vmatpush.msra.mxu0 %v1912
      %3736 = vmatpush.msra.mxu0 %v1911
      %3737 = vmatmul.f32.gmra.mxu0 %v3579
      %v3738 = vpop.f32.mrf.mxu0
      %v3739 = vadd.f32 0.0, %v3738
      %3740 = vdwg.mxu0
      %v3741 = vld [vmem:[%s21] sm:$0xff]
      %3743 = vset.pattern.permute.xlu0 0
      %3744 = vperm.xlu0 %3743, %v3741
      %v3745 = vpop.permute.xlu0 %3744
      %v3747 = vadd.f32 %v3599, %v3745
      %v3748 = vadd.f32 %v3619, %v3745
      %v3749 = vadd.f32 %v3639, %v3745
      %v3750 = vadd.f32 %v3659, %v3745
      %v3751 = vadd.f32 %v3679, %v3745
      %v3752 = vadd.f32 %v3699, %v3745
      %v3753 = vadd.f32 %v3719, %v3745
      %v3754 = vadd.f32 %v3739, %v3745
      %v3755 = vadd.f32 %v3747, %v2882
      %v3756 = vadd.f32 %v3748, %v3113
      %v3757 = vadd.f32 %v3749, %v3114
      %v3758 = vadd.f32 %v3750, %v3115
      %v3759 = vadd.f32 %v3751, %v3413
      %v3760 = vadd.f32 %v3752, %v3414
      %v3761 = vadd.f32 %v3753, %v3415
      %v3762 = vadd.f32 %v3754, %v3416
      %v3763 = vmax.f32 %v3755, 0.0
      %v3764 = vmax.f32 %v3756, 0.0
      %v3765 = vmax.f32 %v3757, 0.0
      %v3766 = vmax.f32 %v3758, 0.0
      %v3767 = vmax.f32 %v3759, 0.0
      %v3768 = vmax.f32 %v3760, 0.0
      %v3769 = vmax.f32 %v3761, 0.0
      %v3770 = vmax.f32 %v3762, 0.0
      %v3771 = vld [vmem:[%s15] sm:$0xff]
      %v3772 = vmul.f32 %v3771, %v3763
      %v3773 = vld [vmem:[%s22] sm:$0xff]
      %v3774 = vld [vmem:[%s22 + $0x8] sm:$0xff]
      %s3775 = scalar_lea.vmem %s22, 16
      %v3776 = vld [vmem:[%s3775] sm:$0xff]
      %v3777 = vld [vmem:[%s3775 + $0x8] sm:$0xff]
      %v3779 = vsel %vm865, %v3776, 0
      %v3782 = vsel %vm865, %v3777, 0
      %3784 = vmatpush.msra.mxu0 0.0
      %3785 = vmatpush.msra.mxu0 0.0
      %3786 = vmatpush.msra.mxu0 0.0
      %3787 = vmatpush.msra.mxu0 0.0
      %3788 = vmatpush.msra.mxu0 0.0
      %3789 = vmatpush.msra.mxu0 0.0
      %3790 = vmatpush.msra.mxu0 0.0
      %3791 = vmatpush.msra.mxu0 0.0
      %3792 = vmatpush.msra.mxu0 0.0
      %3793 = vmatpush.msra.mxu0 0.0
      %3794 = vmatpush.msra.mxu0 0.0
      %3795 = vmatpush.msra.mxu0 0.0
      %3796 = vmatpush.msra.mxu0 0.0
      %3797 = vmatpush.msra.mxu0 0.0
      %3798 = vmatpush.msra.mxu0 0.0
      %3799 = vmatpush.msra.mxu0 %v3765
      %3800 = vmatmul.f32.gmra.mxu0 %v3779
      %v3801 = vpop.f32.mrf.mxu0
      %v3802 = vadd.f32 0.0, %v3801
      %3803 = vmatmul.f32.gmra.mxu0 %v3782
      %v3804 = vpop.f32.mrf.mxu0
      %v3805 = vadd.f32 0.0, %v3804
      %3806 = vdwg.mxu0
      %3807 = vmatpush.msra.mxu0 0.0
      %3808 = vmatpush.msra.mxu0 0.0
      %3809 = vmatpush.msra.mxu0 0.0
      %3810 = vmatpush.msra.mxu0 0.0
      %3811 = vmatpush.msra.mxu0 0.0
      %3812 = vmatpush.msra.mxu0 0.0
      %3813 = vmatpush.msra.mxu0 0.0
      %3814 = vmatpush.msra.mxu0 0.0
      %3815 = vmatpush.msra.mxu0 0.0
      %3816 = vmatpush.msra.mxu0 0.0
      %3817 = vmatpush.msra.mxu0 0.0
      %3818 = vmatpush.msra.mxu0 0.0
      %3819 = vmatpush.msra.mxu0 0.0
      %3820 = vmatpush.msra.mxu0 0.0
      %3821 = vmatpush.msra.mxu0 0.0
      %3822 = vmatpush.msra.mxu0 %v3766
      %3823 = vmatmul.f32.gmra.mxu0 %v3779
      %v3824 = vpop.f32.mrf.mxu0
      %v3825 = vadd.f32 0.0, %v3824
      %3826 = vmatmul.f32.gmra.mxu0 %v3782
      %v3827 = vpop.f32.mrf.mxu0
      %v3828 = vadd.f32 0.0, %v3827
      %3829 = vdwg.mxu0
      %v3831 = vsel %vm865, %v3773, 0
      %v3834 = vsel %vm865, %v3774, 0
      %3836 = vmatpush.msra.mxu0 0.0
      %3837 = vmatpush.msra.mxu0 0.0
      %3838 = vmatpush.msra.mxu0 0.0
      %3839 = vmatpush.msra.mxu0 0.0
      %3840 = vmatpush.msra.mxu0 0.0
      %3841 = vmatpush.msra.mxu0 0.0
      %3842 = vmatpush.msra.mxu0 0.0
      %3843 = vmatpush.msra.mxu0 0.0
      %3844 = vmatpush.msra.mxu0 0.0
      %3845 = vmatpush.msra.mxu0 0.0
      %3846 = vmatpush.msra.mxu0 0.0
      %3847 = vmatpush.msra.mxu0 0.0
      %3848 = vmatpush.msra.mxu0 0.0
      %3849 = vmatpush.msra.mxu0 0.0
      %3850 = vmatpush.msra.mxu0 0.0
      %3851 = vmatpush.msra.mxu0 %v3764
      %3852 = vmatmul.f32.gmra.mxu0 %v3831
      %v3853 = vpop.f32.mrf.mxu0
      %v3854 = vadd.f32 %v3802, %v3853
      %3855 = vmatmul.f32.gmra.mxu0 %v3834
      %v3856 = vpop.f32.mrf.mxu0
      %v3857 = vadd.f32 %v3805, %v3856
      %3858 = vdwg.mxu0
      %3859 = vmatpush.msra.mxu0 0.0
      %3860 = vmatpush.msra.mxu0 0.0
      %3861 = vmatpush.msra.mxu0 0.0
      %3862 = vmatpush.msra.mxu0 0.0
      %3863 = vmatpush.msra.mxu0 0.0
      %3864 = vmatpush.msra.mxu0 0.0
      %3865 = vmatpush.msra.mxu0 0.0
      %3866 = vmatpush.msra.mxu0 0.0
      %3867 = vmatpush.msra.mxu0 0.0
      %3868 = vmatpush.msra.mxu0 0.0
      %3869 = vmatpush.msra.mxu0 0.0
      %3870 = vmatpush.msra.mxu0 0.0
      %3871 = vmatpush.msra.mxu0 0.0
      %3872 = vmatpush.msra.mxu0 0.0
      %3873 = vmatpush.msra.mxu0 0.0
      %3874 = vmatpush.msra.mxu0 %v3765
      %3875 = vmatmul.f32.gmra.mxu0 %v3831
      %v3876 = vpop.f32.mrf.mxu0
      %v3877 = vadd.f32 %v3825, %v3876
      %3878 = vmatmul.f32.gmra.mxu0 %v3834
      %v3879 = vpop.f32.mrf.mxu0
      %v3880 = vadd.f32 %v3828, %v3879
      %3881 = vdwg.mxu0
      %v3882 = vld [vmem:[%s23] sm:$0xff]
      %v3883 = vld [vmem:[%s23 + $0x8] sm:$0xff]
      %3885 = vset.pattern.permute.xlu0 0
      %3886 = vperm.xlu0 %3885, %v3882
      %v3887 = vpop.permute.xlu0 %3886
      %3890 = vset.pattern.permute.xlu0 0
      %3891 = vperm.xlu0 %3890, %v3883
      %v3892 = vpop.permute.xlu0 %3891
      %v3894 = vadd.f32 %v3854, %v3887
      %v3895 = vadd.f32 %v3877, %v3887
      %v3896 = vadd.f32 %v3857, %v3892
      %v3897 = vadd.f32 %v3880, %v3892
      %v3898 = vxor.u32 %v3896, 2147483648
      %v3899 = vxor.u32 %v3897, 2147483648
      %v3900 = vmul.f32 %v3898, 1.442695
      %v3901 = vpow.pop %v3900
      %v3902 = vmul.f32 %v3899, 1.442695
      %v3903 = vpow.pop %v3902
      %v3904 = vadd.f32 %v3901, 1.0
      %v3905 = vadd.f32 %v3903, 1.0
      %v3906 = vrcp.pop %v3904
      %v3907 = vmul.f32 %v3904, %v3906
      %v3908 = vsub.f32 1.0, %v3907
      %v3909 = vmul.f32 %v3906, %v3908
      %v3910 = vadd.f32 %v3906, %v3909
      %vm3911 = vweird.f32 %v3904
      %vm3912 = vweird.f32 %v3906
      %vm3913 = vmor %vm3911, %vm3912
      %v3914 = vsel %vm3913, %v3906, %v3910
      %v3915 = vand.u32 2147483647, %v3904
      %vm3916 = vcmp.eq.f32.partialorder %v3915, 8.507059e+37
      %v3917 = vand.u32 %v3904, 2147483648
      %v3918 = vor.u32 1.1754944e-38, %v3917
      %v3919 = vsel %vm3916, %v3918, %v3914
      %v3920 = vmul.f32 1.0, %v3919
      %v3921 = vrcp.pop %v3905
      %v3922 = vmul.f32 %v3905, %v3921
      %v3923 = vsub.f32 1.0, %v3922
      %v3924 = vmul.f32 %v3921, %v3923
      %v3925 = vadd.f32 %v3921, %v3924
      %vm3926 = vweird.f32 %v3905
      %vm3927 = vweird.f32 %v3921
      %vm3928 = vmor %vm3926, %vm3927
      %v3929 = vsel %vm3928, %v3921, %v3925
      %v3930 = vand.u32 2147483647, %v3905
      %vm3931 = vcmp.eq.f32.partialorder %v3930, 8.507059e+37
      %v3932 = vand.u32 %v3905, 2147483648
      %v3933 = vor.u32 1.1754944e-38, %v3932
      %v3934 = vsel %vm3931, %v3933, %v3929
      %v3935 = vmul.f32 1.0, %v3934
      %v3936 = vmul.f32 %v3894, %v3920
      %v3937 = vmul.f32 %v3895, %v3935
      %v3938 = vld [vmem:[%s24] sm:$0xff]
      %v3939 = vld [vmem:[%s24 + $0x8] sm:$0xff]
      %s3940 = scalar_lea.vmem %s24, 16
      %v3941 = vld [vmem:[%s3940] sm:$0xff]
      %v3942 = vld [vmem:[%s3940 + $0x8] sm:$0xff]
      %v3944 = vsel %vm865, %v3941, 0
      %v3947 = vsel %vm865, %v3942, 0
      %3949 = vmatpush.msra.mxu0 0.0
      %3950 = vmatpush.msra.mxu0 0.0
      %3951 = vmatpush.msra.mxu0 0.0
      %3952 = vmatpush.msra.mxu0 0.0
      %3953 = vmatpush.msra.mxu0 0.0
      %3954 = vmatpush.msra.mxu0 0.0
      %3955 = vmatpush.msra.mxu0 0.0
      %3956 = vmatpush.msra.mxu0 0.0
      %3957 = vmatpush.msra.mxu0 0.0
      %3958 = vmatpush.msra.mxu0 0.0
      %3959 = vmatpush.msra.mxu0 0.0
      %3960 = vmatpush.msra.mxu0 0.0
      %3961 = vmatpush.msra.mxu0 0.0
      %3962 = vmatpush.msra.mxu0 0.0
      %3963 = vmatpush.msra.mxu0 0.0
      %3964 = vmatpush.msra.mxu0 %v3768
      %3965 = vmatmul.f32.gmra.mxu0 %v3944
      %v3966 = vpop.f32.mrf.mxu0
      %v3967 = vadd.f32 0.0, %v3966
      %3968 = vmatmul.f32.gmra.mxu0 %v3947
      %v3969 = vpop.f32.mrf.mxu0
      %v3970 = vadd.f32 0.0, %v3969
      %3971 = vdwg.mxu0
      %3972 = vmatpush.msra.mxu0 0.0
      %3973 = vmatpush.msra.mxu0 0.0
      %3974 = vmatpush.msra.mxu0 0.0
      %3975 = vmatpush.msra.mxu0 0.0
      %3976 = vmatpush.msra.mxu0 0.0
      %3977 = vmatpush.msra.mxu0 0.0
      %3978 = vmatpush.msra.mxu0 0.0
      %3979 = vmatpush.msra.mxu0 0.0
      %3980 = vmatpush.msra.mxu0 0.0
      %3981 = vmatpush.msra.mxu0 0.0
      %3982 = vmatpush.msra.mxu0 0.0
      %3983 = vmatpush.msra.mxu0 0.0
      %3984 = vmatpush.msra.mxu0 0.0
      %3985 = vmatpush.msra.mxu0 0.0
      %3986 = vmatpush.msra.mxu0 0.0
      %3987 = vmatpush.msra.mxu0 %v3769
      %3988 = vmatmul.f32.gmra.mxu0 %v3944
      %v3989 = vpop.f32.mrf.mxu0
      %v3990 = vadd.f32 0.0, %v3989
      %3991 = vmatmul.f32.gmra.mxu0 %v3947
      %v3992 = vpop.f32.mrf.mxu0
      %v3993 = vadd.f32 0.0, %v3992
      %3994 = vdwg.mxu0
      %3995 = vmatpush.msra.mxu0 0.0
      %3996 = vmatpush.msra.mxu0 0.0
      %3997 = vmatpush.msra.mxu0 0.0
      %3998 = vmatpush.msra.mxu0 0.0
      %3999 = vmatpush.msra.mxu0 0.0
      %4000 = vmatpush.msra.mxu0 0.0
      %4001 = vmatpush.msra.mxu0 0.0
      %4002 = vmatpush.msra.mxu0 0.0
      %4003 = vmatpush.msra.mxu0 0.0
      %4004 = vmatpush.msra.mxu0 0.0
      %4005 = vmatpush.msra.mxu0 0.0
      %4006 = vmatpush.msra.mxu0 0.0
      %4007 = vmatpush.msra.mxu0 0.0
      %4008 = vmatpush.msra.mxu0 0.0
      %4009 = vmatpush.msra.mxu0 0.0
      %4010 = vmatpush.msra.mxu0 %v3770
      %4011 = vmatmul.f32.gmra.mxu0 %v3944
      %v4012 = vpop.f32.mrf.mxu0
      %v4013 = vadd.f32 0.0, %v4012
      %4014 = vmatmul.f32.gmra.mxu0 %v3947
      %v4015 = vpop.f32.mrf.mxu0
      %v4016 = vadd.f32 0.0, %v4015
      %4017 = vdwg.mxu0
      %v4019 = vsel %vm865, %v3938, 0
      %v4022 = vsel %vm865, %v3939, 0
      %4024 = vmatpush.msra.mxu0 0.0
      %4025 = vmatpush.msra.mxu0 0.0
      %4026 = vmatpush.msra.mxu0 0.0
      %4027 = vmatpush.msra.mxu0 0.0
      %4028 = vmatpush.msra.mxu0 0.0
      %4029 = vmatpush.msra.mxu0 0.0
      %4030 = vmatpush.msra.mxu0 0.0
      %4031 = vmatpush.msra.mxu0 0.0
      %4032 = vmatpush.msra.mxu0 0.0
      %4033 = vmatpush.msra.mxu0 0.0
      %4034 = vmatpush.msra.mxu0 0.0
      %4035 = vmatpush.msra.mxu0 0.0
      %4036 = vmatpush.msra.mxu0 0.0
      %4037 = vmatpush.msra.mxu0 0.0
      %4038 = vmatpush.msra.mxu0 0.0
      %4039 = vmatpush.msra.mxu0 %v3767
      %4040 = vmatmul.f32.gmra.mxu0 %v4019
      %v4041 = vpop.f32.mrf.mxu0
      %v4042 = vadd.f32 %v3967, %v4041
      %4043 = vmatmul.f32.gmra.mxu0 %v4022
      %v4044 = vpop.f32.mrf.mxu0
      %v4045 = vadd.f32 %v3970, %v4044
      %4046 = vdwg.mxu0
      %4047 = vmatpush.msra.mxu0 0.0
      %4048 = vmatpush.msra.mxu0 0.0
      %4049 = vmatpush.msra.mxu0 0.0
      %4050 = vmatpush.msra.mxu0 0.0
      %4051 = vmatpush.msra.mxu0 0.0
      %4052 = vmatpush.msra.mxu0 0.0
      %4053 = vmatpush.msra.mxu0 0.0
      %4054 = vmatpush.msra.mxu0 0.0
      %4055 = vmatpush.msra.mxu0 0.0
      %4056 = vmatpush.msra.mxu0 0.0
      %4057 = vmatpush.msra.mxu0 0.0
      %4058 = vmatpush.msra.mxu0 0.0
      %4059 = vmatpush.msra.mxu0 0.0
      %4060 = vmatpush.msra.mxu0 0.0
      %4061 = vmatpush.msra.mxu0 0.0
      %4062 = vmatpush.msra.mxu0 %v3768
      %4063 = vmatmul.f32.gmra.mxu0 %v4019
      %v4064 = vpop.f32.mrf.mxu0
      %v4065 = vadd.f32 %v3990, %v4064
      %4066 = vmatmul.f32.gmra.mxu0 %v4022
      %v4067 = vpop.f32.mrf.mxu0
      %v4068 = vadd.f32 %v3993, %v4067
      %4069 = vdwg.mxu0
      %4070 = vmatpush.msra.mxu0 0.0
      %4071 = vmatpush.msra.mxu0 0.0
      %4072 = vmatpush.msra.mxu0 0.0
      %4073 = vmatpush.msra.mxu0 0.0
      %4074 = vmatpush.msra.mxu0 0.0
      %4075 = vmatpush.msra.mxu0 0.0
      %4076 = vmatpush.msra.mxu0 0.0
      %4077 = vmatpush.msra.mxu0 0.0
      %4078 = vmatpush.msra.mxu0 0.0
      %4079 = vmatpush.msra.mxu0 0.0
      %4080 = vmatpush.msra.mxu0 0.0
      %4081 = vmatpush.msra.mxu0 0.0
      %4082 = vmatpush.msra.mxu0 0.0
      %4083 = vmatpush.msra.mxu0 0.0
      %4084 = vmatpush.msra.mxu0 0.0
      %4085 = vmatpush.msra.mxu0 %v3769
      %4086 = vmatmul.f32.gmra.mxu0 %v4019
      %v4087 = vpop.f32.mrf.mxu0
      %v4088 = vadd.f32 %v4013, %v4087
      %4089 = vmatmul.f32.gmra.mxu0 %v4022
      %v4090 = vpop.f32.mrf.mxu0
      %v4091 = vadd.f32 %v4016, %v4090
      %4092 = vdwg.mxu0
      %v4093 = vld [vmem:[%s25] sm:$0xff]
      %v4094 = vld [vmem:[%s25 + $0x8] sm:$0xff]
      %4096 = vset.pattern.permute.xlu0 0
      %4097 = vperm.xlu0 %4096, %v4093
      %v4098 = vpop.permute.xlu0 %4097
      %4101 = vset.pattern.permute.xlu0 0
      %4102 = vperm.xlu0 %4101, %v4094
      %v4103 = vpop.permute.xlu0 %4102
      %v4105 = vadd.f32 %v4042, %v4098
      %v4106 = vadd.f32 %v4065, %v4098
      %v4107 = vadd.f32 %v4088, %v4098
      %v4108 = vadd.f32 %v4045, %v4103
      %v4109 = vadd.f32 %v4068, %v4103
      %v4110 = vadd.f32 %v4091, %v4103
      %v4111 = vxor.u32 %v4108, 2147483648
      %v4112 = vxor.u32 %v4109, 2147483648
      %v4113 = vxor.u32 %v4110, 2147483648
      %v4114 = vmul.f32 %v4111, 1.442695
      %v4115 = vpow.pop %v4114
      %v4116 = vmul.f32 %v4112, 1.442695
      %v4117 = vpow.pop %v4116
      %v4118 = vmul.f32 %v4113, 1.442695
      %v4119 = vpow.pop %v4118
      %v4120 = vadd.f32 %v4115, 1.0
      %v4121 = vadd.f32 %v4117, 1.0
      %v4122 = vadd.f32 %v4119, 1.0
      %v4123 = vrcp.pop %v4120
      %v4124 = vmul.f32 %v4120, %v4123
      %v4125 = vsub.f32 1.0, %v4124
      %v4126 = vmul.f32 %v4123, %v4125
      %v4127 = vadd.f32 %v4123, %v4126
      %vm4128 = vweird.f32 %v4120
      %vm4129 = vweird.f32 %v4123
      %vm4130 = vmor %vm4128, %vm4129
      %v4131 = vsel %vm4130, %v4123, %v4127
      %v4132 = vand.u32 2147483647, %v4120
      %vm4133 = vcmp.eq.f32.partialorder %v4132, 8.507059e+37
      %v4134 = vand.u32 %v4120, 2147483648
      %v4135 = vor.u32 1.1754944e-38, %v4134
      %v4136 = vsel %vm4133, %v4135, %v4131
      %v4137 = vmul.f32 1.0, %v4136
      %v4138 = vrcp.pop %v4121
      %v4139 = vmul.f32 %v4121, %v4138
      %v4140 = vsub.f32 1.0, %v4139
      %v4141 = vmul.f32 %v4138, %v4140
      %v4142 = vadd.f32 %v4138, %v4141
      %vm4143 = vweird.f32 %v4121
      %vm4144 = vweird.f32 %v4138
      %vm4145 = vmor %vm4143, %vm4144
      %v4146 = vsel %vm4145, %v4138, %v4142
      %v4147 = vand.u32 2147483647, %v4121
      %vm4148 = vcmp.eq.f32.partialorder %v4147, 8.507059e+37
      %v4149 = vand.u32 %v4121, 2147483648
      %v4150 = vor.u32 1.1754944e-38, %v4149
      %v4151 = vsel %vm4148, %v4150, %v4146
      %v4152 = vmul.f32 1.0, %v4151
      %v4153 = vrcp.pop %v4122
      %v4154 = vmul.f32 %v4122, %v4153
      %v4155 = vsub.f32 1.0, %v4154
      %v4156 = vmul.f32 %v4153, %v4155
      %v4157 = vadd.f32 %v4153, %v4156
      %vm4158 = vweird.f32 %v4122
      %vm4159 = vweird.f32 %v4153
      %vm4160 = vmor %vm4158, %vm4159
      %v4161 = vsel %vm4160, %v4153, %v4157
      %v4162 = vand.u32 2147483647, %v4122
      %vm4163 = vcmp.eq.f32.partialorder %v4162, 8.507059e+37
      %v4164 = vand.u32 %v4122, 2147483648
      %v4165 = vor.u32 1.1754944e-38, %v4164
      %v4166 = vsel %vm4163, %v4165, %v4161
      %v4167 = vmul.f32 1.0, %v4166
      %v4168 = vmul.f32 %v4105, %v4137
      %v4169 = vmul.f32 %v4106, %v4152
      %v4170 = vmul.f32 %v4107, %v4167
      %v4171 = vld [vmem:[%s26] sm:$0xff]
      %s4172 = scalar_lea.vmem %s26, 8
      %v4173 = vld [vmem:[%s4172] sm:$0xff]
      %v4175 = vsel %vm865, %v4173, 0
      %4177 = vmatpush.msra.mxu0 0.0
      %4178 = vmatpush.msra.mxu0 0.0
      %4179 = vmatpush.msra.mxu0 0.0
      %4180 = vmatpush.msra.mxu0 0.0
      %4181 = vmatpush.msra.mxu0 0.0
      %4182 = vmatpush.msra.mxu0 0.0
      %4183 = vmatpush.msra.mxu0 0.0
      %4184 = vmatpush.msra.mxu0 0.0
      %4185 = vmatpush.msra.mxu0 0.0
      %4186 = vmatpush.msra.mxu0 0.0
      %4187 = vmatpush.msra.mxu0 0.0
      %4188 = vmatpush.msra.mxu0 0.0
      %4189 = vmatpush.msra.mxu0 0.0
      %4190 = vmatpush.msra.mxu0 0.0
      %4191 = vmatpush.msra.mxu0 0.0
      %4192 = vmatpush.msra.mxu0 %v3936
      %4193 = vmatmul.f32.gmra.mxu0 %v4175
      %v4194 = vpop.f32.mrf.mxu0
      %v4195 = vadd.f32 0.0, %v4194
      %4196 = vdwg.mxu0
      %v4198 = vsel %vm865, %v4171, 0
      %4200 = vmatpush.msra.mxu0 0.0
      %4201 = vmatpush.msra.mxu0 0.0
      %4202 = vmatpush.msra.mxu0 0.0
      %4203 = vmatpush.msra.mxu0 0.0
      %4204 = vmatpush.msra.mxu0 0.0
      %4205 = vmatpush.msra.mxu0 0.0
      %4206 = vmatpush.msra.mxu0 0.0
      %4207 = vmatpush.msra.mxu0 0.0
      %4208 = vmatpush.msra.mxu0 0.0
      %4209 = vmatpush.msra.mxu0 0.0
      %4210 = vmatpush.msra.mxu0 0.0
      %4211 = vmatpush.msra.mxu0 0.0
      %4212 = vmatpush.msra.mxu0 0.0
      %4213 = vmatpush.msra.mxu0 0.0
      %4214 = vmatpush.msra.mxu0 0.0
      %4215 = vmatpush.msra.mxu0 %v3772
      %4216 = vmatmul.f32.gmra.mxu0 %v4198
      %v4217 = vpop.f32.mrf.mxu0
      %v4218 = vadd.f32 %v4195, %v4217
      %4219 = vdwg.mxu0
      %s4220 = scalar_lea.vmem %s26, 16
      %v4221 = vld [vmem:[%s4220] sm:$0xff]
      %v4223 = vsel %vm865, %v4221, 0
      %4225 = vmatpush.msra.mxu0 0.0
      %4226 = vmatpush.msra.mxu0 0.0
      %4227 = vmatpush.msra.mxu0 0.0
      %4228 = vmatpush.msra.mxu0 0.0
      %4229 = vmatpush.msra.mxu0 0.0
      %4230 = vmatpush.msra.mxu0 0.0
      %4231 = vmatpush.msra.mxu0 0.0
      %4232 = vmatpush.msra.mxu0 0.0
      %4233 = vmatpush.msra.mxu0 0.0
      %4234 = vmatpush.msra.mxu0 0.0
      %4235 = vmatpush.msra.mxu0 0.0
      %4236 = vmatpush.msra.mxu0 0.0
      %4237 = vmatpush.msra.mxu0 0.0
      %4238 = vmatpush.msra.mxu0 0.0
      %4239 = vmatpush.msra.mxu0 0.0
      %4240 = vmatpush.msra.mxu0 %v3937
      %4241 = vmatmul.f32.gmra.mxu0 %v4223
      %v4242 = vpop.f32.mrf.mxu0
      %v4243 = vadd.f32 0.0, %v4242
      %4244 = vdwg.mxu0
      %v4245 = vadd.f32 %v4218, %v4243
      %s4246 = scalar_lea.vmem %s26, 24
      %v4247 = vld [vmem:[%s4246] sm:$0xff]
      %v4249 = vsel %vm865, %v4247, 0
      %4251 = vmatpush.msra.mxu0 0.0
      %4252 = vmatpush.msra.mxu0 0.0
      %4253 = vmatpush.msra.mxu0 0.0
      %4254 = vmatpush.msra.mxu0 0.0
      %4255 = vmatpush.msra.mxu0 0.0
      %4256 = vmatpush.msra.mxu0 0.0
      %4257 = vmatpush.msra.mxu0 0.0
      %4258 = vmatpush.msra.mxu0 0.0
      %4259 = vmatpush.msra.mxu0 0.0
      %4260 = vmatpush.msra.mxu0 0.0
      %4261 = vmatpush.msra.mxu0 0.0
      %4262 = vmatpush.msra.mxu0 0.0
      %4263 = vmatpush.msra.mxu0 0.0
      %4264 = vmatpush.msra.mxu0 0.0
      %4265 = vmatpush.msra.mxu0 0.0
      %4266 = vmatpush.msra.mxu0 %v4168
      %4267 = vmatmul.f32.gmra.mxu0 %v4249
      %v4268 = vpop.f32.mrf.mxu0
      %v4269 = vadd.f32 0.0, %v4268
      %4270 = vdwg.mxu0
      %v4271 = vadd.f32 %v4245, %v4269
      %s4272 = scalar_lea.vmem %s26, 32
      %v4273 = vld [vmem:[%s4272] sm:$0xff]
      %v4275 = vsel %vm865, %v4273, 0
      %4277 = vmatpush.msra.mxu0 0.0
      %4278 = vmatpush.msra.mxu0 0.0
      %4279 = vmatpush.msra.mxu0 0.0
      %4280 = vmatpush.msra.mxu0 0.0
      %4281 = vmatpush.msra.mxu0 0.0
      %4282 = vmatpush.msra.mxu0 0.0
      %4283 = vmatpush.msra.mxu0 0.0
      %4284 = vmatpush.msra.mxu0 0.0
      %4285 = vmatpush.msra.mxu0 0.0
      %4286 = vmatpush.msra.mxu0 0.0
      %4287 = vmatpush.msra.mxu0 0.0
      %4288 = vmatpush.msra.mxu0 0.0
      %4289 = vmatpush.msra.mxu0 0.0
      %4290 = vmatpush.msra.mxu0 0.0
      %4291 = vmatpush.msra.mxu0 0.0
      %4292 = vmatpush.msra.mxu0 %v4169
      %4293 = vmatmul.f32.gmra.mxu0 %v4275
      %v4294 = vpop.f32.mrf.mxu0
      %v4295 = vadd.f32 0.0, %v4294
      %4296 = vdwg.mxu0
      %v4297 = vadd.f32 %v4271, %v4295
      %s4298 = scalar_lea.vmem %s26, 40
      %v4299 = vld [vmem:[%s4298] sm:$0xff]
      %v4301 = vsel %vm865, %v4299, 0
      %4303 = vmatpush.msra.mxu0 0.0
      %4304 = vmatpush.msra.mxu0 0.0
      %4305 = vmatpush.msra.mxu0 0.0
      %4306 = vmatpush.msra.mxu0 0.0
      %4307 = vmatpush.msra.mxu0 0.0
      %4308 = vmatpush.msra.mxu0 0.0
      %4309 = vmatpush.msra.mxu0 0.0
      %4310 = vmatpush.msra.mxu0 0.0
      %4311 = vmatpush.msra.mxu0 0.0
      %4312 = vmatpush.msra.mxu0 0.0
      %4313 = vmatpush.msra.mxu0 0.0
      %4314 = vmatpush.msra.mxu0 0.0
      %4315 = vmatpush.msra.mxu0 0.0
      %4316 = vmatpush.msra.mxu0 0.0
      %4317 = vmatpush.msra.mxu0 0.0
      %4318 = vmatpush.msra.mxu0 %v4170
      %4319 = vmatmul.f32.gmra.mxu0 %v4301
      %v4320 = vpop.f32.mrf.mxu0
      %v4321 = vadd.f32 0.0, %v4320
      %4322 = vdwg.mxu0
      %v4323 = vadd.f32 %v4297, %v4321
      %v4324 = vld [vmem:[%s27] sm:$0xff]
      %4326 = vset.pattern.permute.xlu0 0
      %4327 = vperm.xlu0 %4326, %v4324
      %v4328 = vpop.permute.xlu0 %4327
      %v4330 = vadd.f32 %v4323, %v4328
      %4331 = vst [vmem:[%s843] sm:$0xff] %v4330
      %p4332 = scmp.lt.s32.totalorder %s39, 1
      %s4333 = scalar_select %p4332, %s39, 1
      %s4334 = smul.addr %s4333, 8
      %s4335 = scalar_lea.vmem %s28, %s4334
      // Predicated region
      $region133: #{_lambda_.1} parent=131 // pred_check
        %p4336 = pneg %p650
      $region134: #{_lambda_.1} parent=131 // pred_check_branch
        %4338 = sbr.rel (%p4336) target = $region136
      $region135: #{_lambda_.1} parent=131 // pred_region
        _
      $region136: #{_lambda_.1} parent=131 // pred_fallthru
        _
    $region132: #{_lambda_.1} parent=5 // pred_fallthru
      _
    %p4339 = scmp.le.s32.totalorder 2, %s34
    // Predicated region
    $region137: #{_lambda_.1} parent=5 // pred_check
      %p4340 = pneg %p4339
    $region138: #{_lambda_.1} parent=5 // pred_check_branch
      %4342 = sbr.rel (%p4340) target = $region140
    $region139: #{_lambda_.1} parent=5 // pred_region
      %s4343 = ssub.s32 %s34, 2
      // Predicated region
      $region141: #{_lambda_.1} parent=139 // pred_check
        %p4344 = pneg %p656
      $region142: #{_lambda_.1} parent=139 // pred_check_branch
        %4346 = sbr.rel (%p4344) target = $region144
      $region143: #{_lambda_.1} parent=139 // pred_region
        %p4347 = scmp.lt.s32.totalorder %s40, 1
        %s4348 = scalar_select %p4347, %s40, 1
        %s4349 = smul.addr %s4348, 8
        %s4350 = scalar_lea.vmem %s28, %s4349
      $region144: #{_lambda_.1} parent=139 // pred_fallthru
        _
    $region140: #{_lambda_.1} parent=5 // pred_fallthru
      _
  $region6: #{_lambda_.1} parent=0 // loop_footer
    %s38 = sadd.s32 1, %s34
  $region7: #{_lambda_.1} parent=0 // loop_footer_branch
    %33 = sbr.rel target = $region3
  $region8: #{_lambda_.1} parent=0 // loop_exit
    _

</llo_original>
